<compile_context>
chip_gen: v5e
topology: v5e:2x2
jax: 0.10.0
libtpu: 0.0.40
codegen_flags: <defaults>
</compile_context>

<pallas_src>
import functools

import numpy as np
import jax
import jax.numpy as jnp
from jax import lax
from jax.experimental import pallas as pl
from jax.experimental.pallas import tpu as pltpu

# ----------------------------- model constants ----------------------------
NC = 2                      # classes
NA = 3                      # anchors per scale
NO = NC + 5                 # outputs per anchor
NP = 128                    # padded head output columns (na*no = 21 -> 128)
ANCHORS_PX = [
    [[10.0, 13.0], [16.0, 30.0], [33.0, 23.0]],       # scale 0 (stride 4)
    [[30.0, 61.0], [62.0, 45.0], [59.0, 119.0]],      # scale 1 (stride 8)
]
STRIDES = [4.0, 8.0]

CIN = 3
C1, C2, C3 = 16, 32, 64
H1 = W1 = 16                # conv1 output spatial (input 32x32, stride 2)
H2 = W2 = 8                 # conv2 output spatial
H3 = W3 = 4                 # conv3 output spatial
WX1, WX2, WX3 = W1 + 1, W2 + 1, W3 + 1       # "wide" row widths (halo col)
M1, M2, M3 = H1 * WX1, H2 * WX2, H3 * WX3    # 272, 72, 20 wide-rows per image
XS1_ROWS, XS2_ROWS, XS3_ROWS = 296, 88, 32   # s2d slab rows (+ zero margin)


# ------------------------------ fused kernel ------------------------------
def _yolov5_fused_kernel(
        xs1_ref, w1_ref, b1_ref, p1_ref, w2_ref, b2_ref, p2_ref, w3_ref, b3_ref,
        wh0_ref, bh0_ref, ga0_ref, an0_ref, ct0_ref,
        wh1_ref, bh1_ref, ga1_ref, an1_ref, ct1_ref,
        o0_ref, o1_ref, xs2_ref, xs3_ref):
    """One image per grid step; everything VMEM resident."""

    def conv_silu(xs_ref, w_ref, b_ref, ho, wo):
        # 3x3 / stride-2 conv on a space-to-depth slab: one dot per 2x2 tap
        # over the whole contiguous band (shifted by dh*Wxs + dw), f32 acc.
        wxs = wo + 1
        mout = ho * wxs
        taps = []
        for t, (dh, dw) in enumerate(((0, 0), (0, 1), (1, 0), (1, 1))):
            a = xs_ref[pl.ds(dh * wxs + dw, mout), :].astype(jnp.bfloat16)
            taps.append(jnp.dot(a, w_ref[t], preferred_element_type=jnp.float32))
        y = taps[0] + taps[1] + taps[2] + taps[3] + b_ref[...]   # bias hoisted
        return y * jax.nn.sigmoid(y)                             # SiLU, f32

    def repack(y, p_ref, xs_next_ref):
        # Build the next layer's space-to-depth slab with 4 constant 0/1
        # selection matmuls (one per (ph,pw) phase); zero P rows produce the
        # halo / margin zeros, so no scratch init is needed.
        yb = y.astype(jnp.bfloat16)
        xs_next_ref[...] = jnp.concatenate(
            [jnp.dot(p_ref[ph], yb, preferred_element_type=jnp.float32)
             for ph in range(4)], axis=-1)

    def detect(y, w_ref, b_ref, ga_ref, an_ref, ct_ref, o_ref, stride):
        # Fused 1x1 conv + sigmoid + YOLOv5 decode; lane-dense (rows,128) store.
        logits = jnp.dot(y.astype(jnp.bfloat16), w_ref[...],
                         preferred_element_type=jnp.float32) + b_ref[...]
        s = jax.nn.sigmoid(logits)
        ct = ct_ref[...]
        xy = s * (2.0 * stride) + ga_ref[...]     # (s*2 - 0.5 + grid)*stride
        wh = (s * s) * an_ref[...]                # (s*2)**2 * anchor
        o_ref[...] = jnp.where(ct == 0, xy, jnp.where(ct == 1, wh, s))

    y1 = conv_silu(xs1_ref, w1_ref, b1_ref, H1, W1)    # (272, 16) f32
    repack(y1, p1_ref, xs2_ref)                        # xs2: (88, 64)
    y2 = conv_silu(xs2_ref, w2_ref, b2_ref, H2, W2)    # (72, 32)
    repack(y2, p2_ref, xs3_ref)                        # xs3: (32, 128)
    y3 = conv_silu(xs3_ref, w3_ref, b3_ref, H3, W3)    # (20, 64)
    detect(y2, wh0_ref, bh0_ref, ga0_ref, an0_ref, ct0_ref, o0_ref, STRIDES[0])
    detect(y3, wh1_ref, bh1_ref, ga1_ref, an1_ref, ct1_ref, o1_ref, STRIDES[1])


# ---------------------------- pallas wrapper -------------------------------
def _const_spec(shape):
    if len(shape) == 2:
        return pl.BlockSpec(shape, lambda b: (0, 0))
    return pl.BlockSpec(shape, lambda b: (0, 0, 0))


def _input_s2d(x_nhwc):
    """(B,32,32,3) -> (B, XS1_ROWS, 12) space-to-depth slab (tiny, XLA)."""
    bsz, h, w, c = x_nhwc.shape
    ho, wo = h // 2, w // 2
    xp = jnp.pad(x_nhwc, ((0, 0), (1, 1), (1, 1), (0, 0)))
    xs = xp.reshape(bsz, ho + 1, 2, wo + 1, 2, c).transpose(0, 1, 3, 2, 4, 5)
    xs = xs.reshape(bsz, (ho + 1) * (wo + 1), 4 * c)
    return jnp.pad(xs, ((0, 0), (0, XS1_ROWS - (ho + 1) * (wo + 1)), (0, 0)))


def _decode_epilogue(o, h, w):
    """(B, h*(w+1), 128) decoded slab -> (B, na*h*w, no), torch ordering."""
    bsz = o.shape[0]
    d = o[:, :, :NA * NO].reshape(bsz, h, w + 1, NA, NO)[:, :, :w]
    return d.transpose(0, 3, 1, 2, 4).reshape(bsz, NA * h * w, NO)


def tracing_wrapper_forward(q, x_nchw):
    x = jnp.transpose(x_nchw, (0, 2, 3, 1)).astype(jnp.float32)
    bsz = x.shape[0]
    xs1 = _input_s2d(x)

    in_specs = [
        pl.BlockSpec((None, XS1_ROWS, 4 * CIN), lambda b: (b, 0, 0)),
        _const_spec((4, 4 * CIN, C1)), _const_spec((1, C1)),
        _const_spec((4, XS2_ROWS, M1)),
        _const_spec((4, 4 * C1, C2)), _const_spec((1, C2)),
        _const_spec((4, XS3_ROWS, M2)),
        _const_spec((4, 4 * C2, C3)), _const_spec((1, C3)),
        _const_spec((C2, NP)), _const_spec((1, NP)), _const_spec((M2, NP)),
        _const_spec((1, NP)), _const_spec((1, NP)),
        _const_spec((C3, NP)), _const_spec((1, NP)), _const_spec((M3, NP)),
        _const_spec((1, NP)), _const_spec((1, NP)),
    ]
    out_specs = (pl.BlockSpec((None, M2, NP), lambda b: (b, 0, 0)),
                 pl.BlockSpec((None, M3, NP), lambda b: (b, 0, 0)))

    o0, o1 = pl.pallas_call(
        _yolov5_fused_kernel,
        out_shape=(jax.ShapeDtypeStruct((bsz, M2, NP), jnp.float32),
                   jax.ShapeDtypeStruct((bsz, M3, NP), jnp.float32)),
        grid=(bsz,),
        in_specs=in_specs,
        out_specs=out_specs,
        scratch_shapes=[pltpu.VMEM((XS2_ROWS, 4 * C1), jnp.float32),
                        pltpu.VMEM((XS3_ROWS, 4 * C2), jnp.float32)],
        compiler_params=pltpu.CompilerParams(dimension_semantics=("parallel",)),
    )(xs1, q["w1"], q["b1"], q["p1"], q["w2"], q["b2"], q["p2"], q["w3"], q["b3"],
      q["wh0"], q["bh0"], q["ga0"], q["an0"], q["ct0"],
      q["wh1"], q["bh1"], q["ga1"], q["an1"], q["ct1"])

    d0 = _decode_epilogue(o0, H2, W2)
    d1 = _decode_epilogue(o1, H3, W3)
    # model(x, augment=False) returns (pred, feature_maps); the wrapper takes [0]
    return jnp.concatenate([d0, d1], axis=1)


# ------------------- one-time weight / constant repacking ------------------
def _s2d_weight(w_oihw):
    """(Cout,Cin,3,3) -> (4 taps, 4*Cin, Cout) bf16; invalid phase rows = 0."""
    w = np.asarray(w_oihw, np.float32)
    cout, cin = w.shape[0], w.shape[1]
    out = np.zeros((4, 4, cin, cout), np.float32)
    for dh in range(2):
        for dw in range(2):
            for ph in range(2):
                for pw in range(2):
                    kh, kw = 2 * dh + ph, 2 * dw + pw
                    if kh > 2 or kw > 2:
                        continue
                    out[2 * dh + dw, 2 * ph + pw] = w[:, :, kh, kw].T
    return jnp.asarray(out.reshape(4, 4 * cin, cout), jnp.bfloat16)


def _perm_matrix(ho, wo, rows_next):
    """0/1 selection matrices: xs_next[:, ph*C:(ph+1)*C] = P[ph] @ y_wide."""
    wxs = wo + 1
    mout = ho * wxs
    hn, wn = ho // 2, wo // 2
    wxs_n = wn + 1
    p = np.zeros((4, rows_next, mout), np.float32)
    for hp in range(hn + 1):
        for wq in range(wxs_n):
            j = hp * wxs_n + wq
            for ph in range(2):
                r = 2 * hp + ph - 1
                if r < 0 or r >= ho:
                    continue
                for pw in range(2):
                    c = 2 * wq + pw - 1
                    if c < 0 or c >= wo:
                        continue
                    p[2 * ph + pw, j, r * wxs + c] = 1.0
    return jnp.asarray(p, jnp.bfloat16)


def _head_weight(w):
    w = np.asarray(w, np.float32).reshape(w.shape[0], w.shape[1])   # (21, C)
    out = np.zeros((w.shape[1], NP), np.float32)
    out[:, :w.shape[0]] = w.T
    return jnp.asarray(out, jnp.bfloat16)


def _pad_bias_row(b, n):
    b = np.asarray(b, np.float32)
    out = np.zeros((1, n), np.float32)
    out[0, :b.shape[0]] = b
    return jnp.asarray(out)


def _head_consts(h, w, stride, anchors):
    """Grid-add (rows,128), 4*anchor row (1,128), column-type row (1,128)."""
    wxs = w + 1
    mw = h * wxs
    ga = np.zeros((mw, NP), np.float32)
    an = np.zeros((1, NP), np.float32)
    ct = np.full((1, NP), 2, np.int32)
    for m in range(mw):
        gx, gy = m % wxs, m // wxs
        for a in range(NA):
            ga[m, a * NO + 0] = (gx - 0.5) * stride
            ga[m, a * NO + 1] = (gy - 0.5) * stride
    for a in range(NA):
        ct[0, a * NO + 0] = 0
        ct[0, a * NO + 1] = 0
        ct[0, a * NO + 2] = 1
        ct[0, a * NO + 3] = 1
        an[0, a * NO + 2] = 4.0 * anchors[a][0]
        an[0, a * NO + 3] = 4.0 * anchors[a][1]
    return jnp.asarray(ga), jnp.asarray(an), jnp.asarray(ct)


def prepare_params(p):
    q = {}
    q["w1"], q["b1"] = _s2d_weight(p["w1"]), _pad_bias_row(p["b1"], C1)
    q["w2"], q["b2"] = _s2d_weight(p["w2"]), _pad_bias_row(p["b2"], C2)
    q["w3"], q["b3"] = _s2d_weight(p["w3"]), _pad_bias_row(p["b3"], C3)
    q["p1"] = _perm_matrix(H1, W1, XS2_ROWS)
    q["p2"] = _perm_matrix(H2, W2, XS3_ROWS)
    q["wh0"], q["bh0"] = _head_weight(p["wd0"]), _pad_bias_row(p["bd0"], NP)
    q["ga0"], q["an0"], q["ct0"] = _head_consts(H2, W2, STRIDES[0], ANCHORS_PX[0])
    q["wh1"], q["bh1"] = _head_weight(p["wd1"]), _pad_bias_row(p["bd1"], NP)
    q["ga1"], q["an1"], q["ct1"] = _head_consts(H3, W3, STRIDES[1], ANCHORS_PX[1])
    return q


def init_params(key):
    ks = jax.random.split(key, 10)
    p = {}
    p["w1"] = 0.05 * jax.random.normal(ks[0], (C1, CIN, 3, 3), jnp.float32)
    p["b1"] = 0.01 * jax.random.normal(ks[1], (C1,), jnp.float32)
    p["w2"] = 0.05 * jax.random.normal(ks[2], (C2, C1, 3, 3), jnp.float32)
    p["b2"] = 0.01 * jax.random.normal(ks[3], (C2,), jnp.float32)
    p["w3"] = 0.05 * jax.random.normal(ks[4], (C3, C2, 3, 3), jnp.float32)
    p["b3"] = 0.01 * jax.random.normal(ks[5], (C3,), jnp.float32)
    p["wd0"] = 0.05 * jax.random.normal(ks[6], (NA * NO, C2, 1, 1), jnp.float32)
    p["bd0"] = 0.01 * jax.random.normal(ks[7], (NA * NO,), jnp.float32)
    p["wd1"] = 0.05 * jax.random.normal(ks[8], (NA * NO, C3, 1, 1), jnp.float32)
    p["bd1"] = 0.01 * jax.random.normal(ks[9], (NA * NO,), jnp.float32)
    return p


# ------------------------- pure-JAX reference ------------------------------
def reference_forward(p, x_nchw):
    def rb(w):  # the kernel consumes bf16-rounded weights on the MXU
        return w.astype(jnp.bfloat16).astype(jnp.float32)

    x = jnp.transpose(x_nchw, (0, 2, 3, 1)).astype(jnp.float32)

    def conv(x, w, b):
        y = lax.conv_general_dilated(
            x, jnp.transpose(rb(w), (2, 3, 1, 0)), (2, 2), ((1, 1), (1, 1)),
            dimension_numbers=("NHWC", "HWIO", "NHWC"),
            precision=lax.Precision.HIGHEST)
        y = y + b
        return y * jax.nn.sigmoid(y)

    f1 = conv(x, p["w1"], p["b1"])
    f2 = conv(f1, p["w2"], p["b2"])
    f3 = conv(f2, p["w3"], p["b3"])

    def head(f, w, b, anchors, stride):
        bsz, h, wd, c = f.shape
        t = jnp.einsum("bhwc,oc->bhwo", f, rb(w).reshape(NA * NO, c)) + b
        s = jax.nn.sigmoid(t).reshape(bsz, h, wd, NA, NO)
        gx = jnp.arange(wd, dtype=jnp.float32).reshape(1, 1, wd, 1)
        gy = jnp.arange(h, dtype=jnp.float32).reshape(1, h, 1, 1)
        anc = jnp.asarray(anchors, jnp.float32)
        xx = (s[..., 0] * 2.0 - 0.5 + gx) * stride
        yy = (s[..., 1] * 2.0 - 0.5 + gy) * stride
        ww = (s[..., 2] * 2.0) ** 2 * anc[:, 0].reshape(1, 1, 1, NA)
        hh = (s[..., 3] * 2.0) ** 2 * anc[:, 1].reshape(1, 1, 1, NA)
        out = jnp.concatenate(
            [xx[..., None], yy[..., None], ww[..., None], hh[..., None], s[..., 4:]],
            axis=-1)
        return out.transpose(0, 3, 1, 2, 4).reshape(bsz, NA * h * wd, NO)

    d0 = head(f2, p["wd0"], p["bd0"], ANCHORS_PX[0], STRIDES[0])
    d1 = head(f3, p["wd1"], p["bd1"], ANCHORS_PX[1], STRIDES[1])
    return jnp.concatenate([d0, d1], axis=1)


# --------------------------------- main ------------------------------------
if __name__ == "__main__":
    key = jax.random.PRNGKey(0)
    pkey, xkey = jax.random.split(key)
    params = init_params(pkey)
    packed = prepare_params(params)              # one-time repack (host/XLA)
    x = jax.random.normal(xkey, (2, CIN, 32, 32), jnp.float32)   # NCHW input

    fwd = jax.jit(functools.partial(tracing_wrapper_forward, packed))
    out = fwd(x)
    jax.block_until_ready(out)

    expected_n = NA * H2 * W2 + NA * H3 * W3     # 240
    assert out.shape == (2, expected_n, NO), out.shape
    assert bool(jnp.all(jnp.isfinite(out)))

    ref = reference_forward(params, x)
    max_err = float(jnp.max(jnp.abs(out - ref)))
    assert bool(jnp.allclose(out, ref, rtol=0.1, atol=0.3)), max_err
    print("KERNEL_OK")
</pallas_src>

<mosaic_0001>
module attributes {stable_mosaic.version = 11 : i64} {
  func.func @_yolov5_fused_kernel(%arg0: i32, %arg1: memref<1x296x12xf32, #tpu.memory_space<vmem>>, %arg2: memref<4x12x16xbf16, #tpu.memory_space<vmem>>, %arg3: memref<1x16xf32, #tpu.memory_space<vmem>>, %arg4: memref<4x88x272xbf16, #tpu.memory_space<vmem>>, %arg5: memref<4x64x32xbf16, #tpu.memory_space<vmem>>, %arg6: memref<1x32xf32, #tpu.memory_space<vmem>>, %arg7: memref<4x32x72xbf16, #tpu.memory_space<vmem>>, %arg8: memref<4x128x64xbf16, #tpu.memory_space<vmem>>, %arg9: memref<1x64xf32, #tpu.memory_space<vmem>>, %arg10: memref<32x128xbf16, #tpu.memory_space<vmem>>, %arg11: memref<1x128xf32, #tpu.memory_space<vmem>>, %arg12: memref<72x128xf32, #tpu.memory_space<vmem>>, %arg13: memref<1x128xf32, #tpu.memory_space<vmem>>, %arg14: memref<1x128xi32, #tpu.memory_space<vmem>>, %arg15: memref<64x128xbf16, #tpu.memory_space<vmem>>, %arg16: memref<1x128xf32, #tpu.memory_space<vmem>>, %arg17: memref<20x128xf32, #tpu.memory_space<vmem>>, %arg18: memref<1x128xf32, #tpu.memory_space<vmem>>, %arg19: memref<1x128xi32, #tpu.memory_space<vmem>>, %arg20: memref<1x72x128xf32, #tpu.memory_space<vmem>>, %arg21: memref<1x20x128xf32, #tpu.memory_space<vmem>>, %arg22: memref<88x64xf32, #tpu.memory_space<vmem>>, %arg23: memref<32x128xf32, #tpu.memory_space<vmem>>) attributes {dimension_semantics = [#tpu.dimension_semantics<parallel>], iteration_bounds = array<i64: 2>, scalar_prefetch = 0 : i64, scratch_operands = 2 : i64, tpu.core_type = #tpu.core_type<tc>, window_params = [{transform_indices = @transform_0, window_bounds = array<i64: 1, 296, 12>}, {pipeline_mode = #tpu.pipeline_mode<synchronous>, transform_indices = @transform_1, window_bounds = array<i64: 4, 12, 16>}, {pipeline_mode = #tpu.pipeline_mode<synchronous>, transform_indices = @transform_2, window_bounds = array<i64: 1, 16>}, {pipeline_mode = #tpu.pipeline_mode<synchronous>, transform_indices = @transform_3, window_bounds = array<i64: 4, 88, 272>}, {pipeline_mode = #tpu.pipeline_mode<synchronous>, transform_indices = @transform_4, window_bounds = array<i64: 4, 64, 32>}, {pipeline_mode = #tpu.pipeline_mode<synchronous>, transform_indices = @transform_5, window_bounds = array<i64: 1, 32>}, {pipeline_mode = #tpu.pipeline_mode<synchronous>, transform_indices = @transform_6, window_bounds = array<i64: 4, 32, 72>}, {pipeline_mode = #tpu.pipeline_mode<synchronous>, transform_indices = @transform_7, window_bounds = array<i64: 4, 128, 64>}, {pipeline_mode = #tpu.pipeline_mode<synchronous>, transform_indices = @transform_8, window_bounds = array<i64: 1, 64>}, {pipeline_mode = #tpu.pipeline_mode<synchronous>, transform_indices = @transform_9, window_bounds = array<i64: 32, 128>}, {pipeline_mode = #tpu.pipeline_mode<synchronous>, transform_indices = @transform_10, window_bounds = array<i64: 1, 128>}, {pipeline_mode = #tpu.pipeline_mode<synchronous>, transform_indices = @transform_11, window_bounds = array<i64: 72, 128>}, {pipeline_mode = #tpu.pipeline_mode<synchronous>, transform_indices = @transform_12, window_bounds = array<i64: 1, 128>}, {pipeline_mode = #tpu.pipeline_mode<synchronous>, transform_indices = @transform_13, window_bounds = array<i64: 1, 128>}, {pipeline_mode = #tpu.pipeline_mode<synchronous>, transform_indices = @transform_14, window_bounds = array<i64: 64, 128>}, {pipeline_mode = #tpu.pipeline_mode<synchronous>, transform_indices = @transform_15, window_bounds = array<i64: 1, 128>}, {pipeline_mode = #tpu.pipeline_mode<synchronous>, transform_indices = @transform_16, window_bounds = array<i64: 20, 128>}, {pipeline_mode = #tpu.pipeline_mode<synchronous>, transform_indices = @transform_17, window_bounds = array<i64: 1, 128>}, {pipeline_mode = #tpu.pipeline_mode<synchronous>, transform_indices = @transform_18, window_bounds = array<i64: 1, 128>}, {transform_indices = @transform_19, window_bounds = array<i64: 1, 72, 128>}, {transform_indices = @transform_20, window_bounds = array<i64: 1, 20, 128>}]} {
    %c0 = arith.constant 0 : index
    %c0_0 = arith.constant 0 : index
    %c0_1 = arith.constant 0 : index
    %0 = vector.load %arg1[%c0, %c0_0, %c0_1] : memref<1x296x12xf32, #tpu.memory_space<vmem>>, vector<1x272x12xf32>
    %1 = vector.shape_cast %0 : vector<1x272x12xf32> to vector<272x12xf32>
    %2 = arith.truncf %1 : vector<272x12xf32> to vector<272x12xbf16>
    %c0_2 = arith.constant 0 : index
    %c0_3 = arith.constant 0 : index
    %c0_4 = arith.constant 0 : index
    %3 = vector.load %arg2[%c0_2, %c0_3, %c0_4] : memref<4x12x16xbf16, #tpu.memory_space<vmem>>, vector<1x12x16xbf16>
    %4 = vector.shape_cast %3 : vector<1x12x16xbf16> to vector<12x16xbf16>
    %cst = arith.constant dense<0.000000e+00> : vector<272x16xf32>
    %5 = tpu.matmul %2, %4, %cst {dimension_numbers = #tpu.dot_dimension_numbers<[1], [0], [0], [1], [0, 0, 1, 1], [], []>} : vector<272x12xbf16>, vector<12x16xbf16>, vector<272x16xf32> -> vector<272x16xf32>
    %c0_5 = arith.constant 0 : index
    %c1 = arith.constant 1 : index
    %c0_6 = arith.constant 0 : index
    %6 = vector.load %arg1[%c0_5, %c1, %c0_6] : memref<1x296x12xf32, #tpu.memory_space<vmem>>, vector<1x272x12xf32>
    %7 = vector.shape_cast %6 : vector<1x272x12xf32> to vector<272x12xf32>
    %8 = arith.truncf %7 : vector<272x12xf32> to vector<272x12xbf16>
    %c1_7 = arith.constant 1 : index
    %c0_8 = arith.constant 0 : index
    %c0_9 = arith.constant 0 : index
    %9 = vector.load %arg2[%c1_7, %c0_8, %c0_9] : memref<4x12x16xbf16, #tpu.memory_space<vmem>>, vector<1x12x16xbf16>
    %10 = vector.shape_cast %9 : vector<1x12x16xbf16> to vector<12x16xbf16>
    %cst_10 = arith.constant dense<0.000000e+00> : vector<272x16xf32>
    %11 = tpu.matmul %8, %10, %cst_10 {dimension_numbers = #tpu.dot_dimension_numbers<[1], [0], [0], [1], [0, 0, 1, 1], [], []>} : vector<272x12xbf16>, vector<12x16xbf16>, vector<272x16xf32> -> vector<272x16xf32>
    %c0_11 = arith.constant 0 : index
    %c17 = arith.constant 17 : index
    %c0_12 = arith.constant 0 : index
    %12 = vector.load %arg1[%c0_11, %c17, %c0_12] : memref<1x296x12xf32, #tpu.memory_space<vmem>>, vector<1x272x12xf32>
    %13 = vector.shape_cast %12 : vector<1x272x12xf32> to vector<272x12xf32>
    %14 = arith.truncf %13 : vector<272x12xf32> to vector<272x12xbf16>
    %c2 = arith.constant 2 : index
    %c0_13 = arith.constant 0 : index
    %c0_14 = arith.constant 0 : index
    %15 = vector.load %arg2[%c2, %c0_13, %c0_14] : memref<4x12x16xbf16, #tpu.memory_space<vmem>>, vector<1x12x16xbf16>
    %16 = vector.shape_cast %15 : vector<1x12x16xbf16> to vector<12x16xbf16>
    %cst_15 = arith.constant dense<0.000000e+00> : vector<272x16xf32>
    %17 = tpu.matmul %14, %16, %cst_15 {dimension_numbers = #tpu.dot_dimension_numbers<[1], [0], [0], [1], [0, 0, 1, 1], [], []>} : vector<272x12xbf16>, vector<12x16xbf16>, vector<272x16xf32> -> vector<272x16xf32>
    %c0_16 = arith.constant 0 : index
    %c18 = arith.constant 18 : index
    %c0_17 = arith.constant 0 : index
    %18 = vector.load %arg1[%c0_16, %c18, %c0_17] : memref<1x296x12xf32, #tpu.memory_space<vmem>>, vector<1x272x12xf32>
    %19 = vector.shape_cast %18 : vector<1x272x12xf32> to vector<272x12xf32>
    %20 = arith.truncf %19 : vector<272x12xf32> to vector<272x12xbf16>
    %c3 = arith.constant 3 : index
    %c0_18 = arith.constant 0 : index
    %c0_19 = arith.constant 0 : index
    %21 = vector.load %arg2[%c3, %c0_18, %c0_19] : memref<4x12x16xbf16, #tpu.memory_space<vmem>>, vector<1x12x16xbf16>
    %22 = vector.shape_cast %21 : vector<1x12x16xbf16> to vector<12x16xbf16>
    %cst_20 = arith.constant dense<0.000000e+00> : vector<272x16xf32>
    %23 = tpu.matmul %20, %22, %cst_20 {dimension_numbers = #tpu.dot_dimension_numbers<[1], [0], [0], [1], [0, 0, 1, 1], [], []>} : vector<272x12xbf16>, vector<12x16xbf16>, vector<272x16xf32> -> vector<272x16xf32>
    %24 = arith.addf %5, %11 : vector<272x16xf32>
    %25 = arith.addf %24, %17 : vector<272x16xf32>
    %26 = arith.addf %25, %23 : vector<272x16xf32>
    %c0_21 = arith.constant 0 : index
    %c0_22 = arith.constant 0 : index
    %27 = vector.load %arg3[%c0_21, %c0_22] : memref<1x16xf32, #tpu.memory_space<vmem>>, vector<1x16xf32>
    %28 = vector.broadcast %27 : vector<1x16xf32> to vector<272x16xf32>
    %29 = arith.addf %26, %28 : vector<272x16xf32>
    %30 = arith.negf %29 : vector<272x16xf32>
    %31 = math.exp %30 : vector<272x16xf32>
    %cst_23 = arith.constant 1.000000e+00 : f32
    %32 = vector.broadcast %cst_23 : f32 to vector<272x16xf32>
    %33 = arith.addf %32, %31 : vector<272x16xf32>
    %34 = arith.divf %32, %33 : vector<272x16xf32>
    %35 = arith.mulf %29, %34 : vector<272x16xf32>
    %36 = arith.truncf %35 : vector<272x16xf32> to vector<272x16xbf16>
    %c0_24 = arith.constant 0 : index
    %c0_25 = arith.constant 0 : index
    %c0_26 = arith.constant 0 : index
    %37 = vector.load %arg4[%c0_24, %c0_25, %c0_26] : memref<4x88x272xbf16, #tpu.memory_space<vmem>>, vector<1x88x272xbf16>
    %38 = vector.shape_cast %37 : vector<1x88x272xbf16> to vector<88x272xbf16>
    %cst_27 = arith.constant dense<0.000000e+00> : vector<88x16xf32>
    %39 = tpu.matmul %38, %36, %cst_27 {dimension_numbers = #tpu.dot_dimension_numbers<[1], [0], [0], [1], [0, 0, 1, 1], [], []>} : vector<88x272xbf16>, vector<272x16xbf16>, vector<88x16xf32> -> vector<88x16xf32>
    %c1_28 = arith.constant 1 : index
    %c0_29 = arith.constant 0 : index
    %c0_30 = arith.constant 0 : index
    %40 = vector.load %arg4[%c1_28, %c0_29, %c0_30] : memref<4x88x272xbf16, #tpu.memory_space<vmem>>, vector<1x88x272xbf16>
    %41 = vector.shape_cast %40 : vector<1x88x272xbf16> to vector<88x272xbf16>
    %cst_31 = arith.constant dense<0.000000e+00> : vector<88x16xf32>
    %42 = tpu.matmul %41, %36, %cst_31 {dimension_numbers = #tpu.dot_dimension_numbers<[1], [0], [0], [1], [0, 0, 1, 1], [], []>} : vector<88x272xbf16>, vector<272x16xbf16>, vector<88x16xf32> -> vector<88x16xf32>
    %c2_32 = arith.constant 2 : index
    %c0_33 = arith.constant 0 : index
    %c0_34 = arith.constant 0 : index
    %43 = vector.load %arg4[%c2_32, %c0_33, %c0_34] : memref<4x88x272xbf16, #tpu.memory_space<vmem>>, vector<1x88x272xbf16>
    %44 = vector.shape_cast %43 : vector<1x88x272xbf16> to vector<88x272xbf16>
    %cst_35 = arith.constant dense<0.000000e+00> : vector<88x16xf32>
    %45 = tpu.matmul %44, %36, %cst_35 {dimension_numbers = #tpu.dot_dimension_numbers<[1], [0], [0], [1], [0, 0, 1, 1], [], []>} : vector<88x272xbf16>, vector<272x16xbf16>, vector<88x16xf32> -> vector<88x16xf32>
    %c3_36 = arith.constant 3 : index
    %c0_37 = arith.constant 0 : index
    %c0_38 = arith.constant 0 : index
    %46 = vector.load %arg4[%c3_36, %c0_37, %c0_38] : memref<4x88x272xbf16, #tpu.memory_space<vmem>>, vector<1x88x272xbf16>
    %47 = vector.shape_cast %46 : vector<1x88x272xbf16> to vector<88x272xbf16>
    %cst_39 = arith.constant dense<0.000000e+00> : vector<88x16xf32>
    %48 = tpu.matmul %47, %36, %cst_39 {dimension_numbers = #tpu.dot_dimension_numbers<[1], [0], [0], [1], [0, 0, 1, 1], [], []>} : vector<88x272xbf16>, vector<272x16xbf16>, vector<88x16xf32> -> vector<88x16xf32>
    %49 = tpu.concatenate %39, %42, %45, %48 in 1 : vector<88x16xf32>, vector<88x16xf32>, vector<88x16xf32>, vector<88x16xf32> -> vector<88x64xf32>
    %c0_40 = arith.constant 0 : index
    %c0_41 = arith.constant 0 : index
    %50 = vector.load %arg22[%c0_40, %c0_41] : memref<88x64xf32, #tpu.memory_space<vmem>>, vector<88x64xf32>
    tpu.vector_store %arg22[%c0_40, %c0_41], %49 {strides = array<i32>} : memref<88x64xf32, #tpu.memory_space<vmem>>, vector<88x64xf32>,
    %c0_42 = arith.constant 0 : index
    %c0_43 = arith.constant 0 : index
    %51 = vector.load %arg22[%c0_42, %c0_43] : memref<88x64xf32, #tpu.memory_space<vmem>>, vector<72x64xf32>
    %52 = arith.truncf %51 : vector<72x64xf32> to vector<72x64xbf16>
    %c0_44 = arith.constant 0 : index
    %c0_45 = arith.constant 0 : index
    %c0_46 = arith.constant 0 : index
    %53 = vector.load %arg5[%c0_44, %c0_45, %c0_46] : memref<4x64x32xbf16, #tpu.memory_space<vmem>>, vector<1x64x32xbf16>
    %54 = vector.shape_cast %53 : vector<1x64x32xbf16> to vector<64x32xbf16>
    %cst_47 = arith.constant dense<0.000000e+00> : vector<72x32xf32>
    %55 = tpu.matmul %52, %54, %cst_47 {dimension_numbers = #tpu.dot_dimension_numbers<[1], [0], [0], [1], [0, 0, 1, 1], [], []>} : vector<72x64xbf16>, vector<64x32xbf16>, vector<72x32xf32> -> vector<72x32xf32>
    %c1_48 = arith.constant 1 : index
    %c0_49 = arith.constant 0 : index
    %56 = vector.load %arg22[%c1_48, %c0_49] : memref<88x64xf32, #tpu.memory_space<vmem>>, vector<72x64xf32>
    %57 = arith.truncf %56 : vector<72x64xf32> to vector<72x64xbf16>
    %c1_50 = arith.constant 1 : index
    %c0_51 = arith.constant 0 : index
    %c0_52 = arith.constant 0 : index
    %58 = vector.load %arg5[%c1_50, %c0_51, %c0_52] : memref<4x64x32xbf16, #tpu.memory_space<vmem>>, vector<1x64x32xbf16>
    %59 = vector.shape_cast %58 : vector<1x64x32xbf16> to vector<64x32xbf16>
    %cst_53 = arith.constant dense<0.000000e+00> : vector<72x32xf32>
    %60 = tpu.matmul %57, %59, %cst_53 {dimension_numbers = #tpu.dot_dimension_numbers<[1], [0], [0], [1], [0, 0, 1, 1], [], []>} : vector<72x64xbf16>, vector<64x32xbf16>, vector<72x32xf32> -> vector<72x32xf32>
    %c9 = arith.constant 9 : index
    %c0_54 = arith.constant 0 : index
    %61 = vector.load %arg22[%c9, %c0_54] : memref<88x64xf32, #tpu.memory_space<vmem>>, vector<72x64xf32>
    %62 = arith.truncf %61 : vector<72x64xf32> to vector<72x64xbf16>
    %c2_55 = arith.constant 2 : index
    %c0_56 = arith.constant 0 : index
    %c0_57 = arith.constant 0 : index
    %63 = vector.load %arg5[%c2_55, %c0_56, %c0_57] : memref<4x64x32xbf16, #tpu.memory_space<vmem>>, vector<1x64x32xbf16>
    %64 = vector.shape_cast %63 : vector<1x64x32xbf16> to vector<64x32xbf16>
    %cst_58 = arith.constant dense<0.000000e+00> : vector<72x32xf32>
    %65 = tpu.matmul %62, %64, %cst_58 {dimension_numbers = #tpu.dot_dimension_numbers<[1], [0], [0], [1], [0, 0, 1, 1], [], []>} : vector<72x64xbf16>, vector<64x32xbf16>, vector<72x32xf32> -> vector<72x32xf32>
    %c10 = arith.constant 10 : index
    %c0_59 = arith.constant 0 : index
    %66 = vector.load %arg22[%c10, %c0_59] : memref<88x64xf32, #tpu.memory_space<vmem>>, vector<72x64xf32>
    %67 = arith.truncf %66 : vector<72x64xf32> to vector<72x64xbf16>
    %c3_60 = arith.constant 3 : index
    %c0_61 = arith.constant 0 : index
    %c0_62 = arith.constant 0 : index
    %68 = vector.load %arg5[%c3_60, %c0_61, %c0_62] : memref<4x64x32xbf16, #tpu.memory_space<vmem>>, vector<1x64x32xbf16>
    %69 = vector.shape_cast %68 : vector<1x64x32xbf16> to vector<64x32xbf16>
    %cst_63 = arith.constant dense<0.000000e+00> : vector<72x32xf32>
    %70 = tpu.matmul %67, %69, %cst_63 {dimension_numbers = #tpu.dot_dimension_numbers<[1], [0], [0], [1], [0, 0, 1, 1], [], []>} : vector<72x64xbf16>, vector<64x32xbf16>, vector<72x32xf32> -> vector<72x32xf32>
    %71 = arith.addf %55, %60 : vector<72x32xf32>
    %72 = arith.addf %71, %65 : vector<72x32xf32>
    %73 = arith.addf %72, %70 : vector<72x32xf32>
    %c0_64 = arith.constant 0 : index
    %c0_65 = arith.constant 0 : index
    %74 = vector.load %arg6[%c0_64, %c0_65] : memref<1x32xf32, #tpu.memory_space<vmem>>, vector<1x32xf32>
    %75 = vector.broadcast %74 : vector<1x32xf32> to vector<72x32xf32>
    %76 = arith.addf %73, %75 : vector<72x32xf32>
    %77 = arith.negf %76 : vector<72x32xf32>
    %78 = math.exp %77 : vector<72x32xf32>
    %cst_66 = arith.constant 1.000000e+00 : f32
    %79 = vector.broadcast %cst_66 : f32 to vector<72x32xf32>
    %80 = arith.addf %79, %78 : vector<72x32xf32>
    %81 = arith.divf %79, %80 : vector<72x32xf32>
    %82 = arith.mulf %76, %81 : vector<72x32xf32>
    %83 = arith.truncf %82 : vector<72x32xf32> to vector<72x32xbf16>
    %c0_67 = arith.constant 0 : index
    %c0_68 = arith.constant 0 : index
    %c0_69 = arith.constant 0 : index
    %84 = vector.load %arg7[%c0_67, %c0_68, %c0_69] : memref<4x32x72xbf16, #tpu.memory_space<vmem>>, vector<1x32x72xbf16>
    %85 = vector.shape_cast %84 : vector<1x32x72xbf16> to vector<32x72xbf16>
    %cst_70 = arith.constant dense<0.000000e+00> : vector<32x32xf32>
    %86 = tpu.matmul %85, %83, %cst_70 {dimension_numbers = #tpu.dot_dimension_numbers<[1], [0], [0], [1], [0, 0, 1, 1], [], []>} : vector<32x72xbf16>, vector<72x32xbf16>, vector<32x32xf32> -> vector<32x32xf32>
    %c1_71 = arith.constant 1 : index
    %c0_72 = arith.constant 0 : index
    %c0_73 = arith.constant 0 : index
    %87 = vector.load %arg7[%c1_71, %c0_72, %c0_73] : memref<4x32x72xbf16, #tpu.memory_space<vmem>>, vector<1x32x72xbf16>
    %88 = vector.shape_cast %87 : vector<1x32x72xbf16> to vector<32x72xbf16>
    %cst_74 = arith.constant dense<0.000000e+00> : vector<32x32xf32>
    %89 = tpu.matmul %88, %83, %cst_74 {dimension_numbers = #tpu.dot_dimension_numbers<[1], [0], [0], [1], [0, 0, 1, 1], [], []>} : vector<32x72xbf16>, vector<72x32xbf16>, vector<32x32xf32> -> vector<32x32xf32>
    %c2_75 = arith.constant 2 : index
    %c0_76 = arith.constant 0 : index
    %c0_77 = arith.constant 0 : index
    %90 = vector.load %arg7[%c2_75, %c0_76, %c0_77] : memref<4x32x72xbf16, #tpu.memory_space<vmem>>, vector<1x32x72xbf16>
    %91 = vector.shape_cast %90 : vector<1x32x72xbf16> to vector<32x72xbf16>
    %cst_78 = arith.constant dense<0.000000e+00> : vector<32x32xf32>
    %92 = tpu.matmul %91, %83, %cst_78 {dimension_numbers = #tpu.dot_dimension_numbers<[1], [0], [0], [1], [0, 0, 1, 1], [], []>} : vector<32x72xbf16>, vector<72x32xbf16>, vector<32x32xf32> -> vector<32x32xf32>
    %c3_79 = arith.constant 3 : index
    %c0_80 = arith.constant 0 : index
    %c0_81 = arith.constant 0 : index
    %93 = vector.load %arg7[%c3_79, %c0_80, %c0_81] : memref<4x32x72xbf16, #tpu.memory_space<vmem>>, vector<1x32x72xbf16>
    %94 = vector.shape_cast %93 : vector<1x32x72xbf16> to vector<32x72xbf16>
    %cst_82 = arith.constant dense<0.000000e+00> : vector<32x32xf32>
    %95 = tpu.matmul %94, %83, %cst_82 {dimension_numbers = #tpu.dot_dimension_numbers<[1], [0], [0], [1], [0, 0, 1, 1], [], []>} : vector<32x72xbf16>, vector<72x32xbf16>, vector<32x32xf32> -> vector<32x32xf32>
    %96 = tpu.concatenate %86, %89, %92, %95 in 1 : vector<32x32xf32>, vector<32x32xf32>, vector<32x32xf32>, vector<32x32xf32> -> vector<32x128xf32>
    %c0_83 = arith.constant 0 : index
    %c0_84 = arith.constant 0 : index
    %97 = vector.load %arg23[%c0_83, %c0_84] : memref<32x128xf32, #tpu.memory_space<vmem>>, vector<32x128xf32>
    tpu.vector_store %arg23[%c0_83, %c0_84], %96 {strides = array<i32>} : memref<32x128xf32, #tpu.memory_space<vmem>>, vector<32x128xf32>,
    %c0_85 = arith.constant 0 : index
    %c0_86 = arith.constant 0 : index
    %98 = vector.load %arg23[%c0_85, %c0_86] : memref<32x128xf32, #tpu.memory_space<vmem>>, vector<20x128xf32>
    %99 = arith.truncf %98 : vector<20x128xf32> to vector<20x128xbf16>
    %c0_87 = arith.constant 0 : index
    %c0_88 = arith.constant 0 : index
    %c0_89 = arith.constant 0 : index
    %100 = vector.load %arg8[%c0_87, %c0_88, %c0_89] : memref<4x128x64xbf16, #tpu.memory_space<vmem>>, vector<1x128x64xbf16>
    %101 = vector.shape_cast %100 : vector<1x128x64xbf16> to vector<128x64xbf16>
    %cst_90 = arith.constant dense<0.000000e+00> : vector<20x64xf32>
    %102 = tpu.matmul %99, %101, %cst_90 {dimension_numbers = #tpu.dot_dimension_numbers<[1], [0], [0], [1], [0, 0, 1, 1], [], []>} : vector<20x128xbf16>, vector<128x64xbf16>, vector<20x64xf32> -> vector<20x64xf32>
    %c1_91 = arith.constant 1 : index
    %c0_92 = arith.constant 0 : index
    %103 = vector.load %arg23[%c1_91, %c0_92] : memref<32x128xf32, #tpu.memory_space<vmem>>, vector<20x128xf32>
    %104 = arith.truncf %103 : vector<20x128xf32> to vector<20x128xbf16>
    %c1_93 = arith.constant 1 : index
    %c0_94 = arith.constant 0 : index
    %c0_95 = arith.constant 0 : index
    %105 = vector.load %arg8[%c1_93, %c0_94, %c0_95] : memref<4x128x64xbf16, #tpu.memory_space<vmem>>, vector<1x128x64xbf16>
    %106 = vector.shape_cast %105 : vector<1x128x64xbf16> to vector<128x64xbf16>
    %cst_96 = arith.constant dense<0.000000e+00> : vector<20x64xf32>
    %107 = tpu.matmul %104, %106, %cst_96 {dimension_numbers = #tpu.dot_dimension_numbers<[1], [0], [0], [1], [0, 0, 1, 1], [], []>} : vector<20x128xbf16>, vector<128x64xbf16>, vector<20x64xf32> -> vector<20x64xf32>
    %c5 = arith.constant 5 : index
    %c0_97 = arith.constant 0 : index
    %108 = vector.load %arg23[%c5, %c0_97] : memref<32x128xf32, #tpu.memory_space<vmem>>, vector<20x128xf32>
    %109 = arith.truncf %108 : vector<20x128xf32> to vector<20x128xbf16>
    %c2_98 = arith.constant 2 : index
    %c0_99 = arith.constant 0 : index
    %c0_100 = arith.constant 0 : index
    %110 = vector.load %arg8[%c2_98, %c0_99, %c0_100] : memref<4x128x64xbf16, #tpu.memory_space<vmem>>, vector<1x128x64xbf16>
    %111 = vector.shape_cast %110 : vector<1x128x64xbf16> to vector<128x64xbf16>
    %cst_101 = arith.constant dense<0.000000e+00> : vector<20x64xf32>
    %112 = tpu.matmul %109, %111, %cst_101 {dimension_numbers = #tpu.dot_dimension_numbers<[1], [0], [0], [1], [0, 0, 1, 1], [], []>} : vector<20x128xbf16>, vector<128x64xbf16>, vector<20x64xf32> -> vector<20x64xf32>
    %c6 = arith.constant 6 : index
    %c0_102 = arith.constant 0 : index
    %113 = vector.load %arg23[%c6, %c0_102] : memref<32x128xf32, #tpu.memory_space<vmem>>, vector<20x128xf32>
    %114 = arith.truncf %113 : vector<20x128xf32> to vector<20x128xbf16>
    %c3_103 = arith.constant 3 : index
    %c0_104 = arith.constant 0 : index
    %c0_105 = arith.constant 0 : index
    %115 = vector.load %arg8[%c3_103, %c0_104, %c0_105] : memref<4x128x64xbf16, #tpu.memory_space<vmem>>, vector<1x128x64xbf16>
    %116 = vector.shape_cast %115 : vector<1x128x64xbf16> to vector<128x64xbf16>
    %cst_106 = arith.constant dense<0.000000e+00> : vector<20x64xf32>
    %117 = tpu.matmul %114, %116, %cst_106 {dimension_numbers = #tpu.dot_dimension_numbers<[1], [0], [0], [1], [0, 0, 1, 1], [], []>} : vector<20x128xbf16>, vector<128x64xbf16>, vector<20x64xf32> -> vector<20x64xf32>
    %118 = arith.addf %102, %107 : vector<20x64xf32>
    %119 = arith.addf %118, %112 : vector<20x64xf32>
    %120 = arith.addf %119, %117 : vector<20x64xf32>
    %c0_107 = arith.constant 0 : index
    %c0_108 = arith.constant 0 : index
    %121 = vector.load %arg9[%c0_107, %c0_108] : memref<1x64xf32, #tpu.memory_space<vmem>>, vector<1x64xf32>
    %122 = vector.broadcast %121 : vector<1x64xf32> to vector<20x64xf32>
    %123 = arith.addf %120, %122 : vector<20x64xf32>
    %124 = arith.negf %123 : vector<20x64xf32>
    %125 = math.exp %124 : vector<20x64xf32>
    %cst_109 = arith.constant 1.000000e+00 : f32
    %126 = vector.broadcast %cst_109 : f32 to vector<20x64xf32>
    %127 = arith.addf %126, %125 : vector<20x64xf32>
    %128 = arith.divf %126, %127 : vector<20x64xf32>
    %129 = arith.mulf %123, %128 : vector<20x64xf32>
    %130 = arith.truncf %82 : vector<72x32xf32> to vector<72x32xbf16>
    %c0_110 = arith.constant 0 : index
    %c0_111 = arith.constant 0 : index
    %131 = vector.load %arg10[%c0_110, %c0_111] : memref<32x128xbf16, #tpu.memory_space<vmem>>, vector<32x128xbf16>
    %cst_112 = arith.constant dense<0.000000e+00> : vector<72x128xf32>
    %132 = tpu.matmul %130, %131, %cst_112 {dimension_numbers = #tpu.dot_dimension_numbers<[1], [0], [0], [1], [0, 0, 1, 1], [], []>} : vector<72x32xbf16>, vector<32x128xbf16>, vector<72x128xf32> -> vector<72x128xf32>
    %c0_113 = arith.constant 0 : index
    %c0_114 = arith.constant 0 : index
    %133 = vector.load %arg11[%c0_113, %c0_114] : memref<1x128xf32, #tpu.memory_space<vmem>>, vector<1x128xf32>
    %134 = vector.broadcast %133 : vector<1x128xf32> to vector<72x128xf32>
    %135 = arith.addf %132, %134 : vector<72x128xf32>
    %136 = arith.negf %135 : vector<72x128xf32>
    %137 = math.exp %136 : vector<72x128xf32>
    %cst_115 = arith.constant 1.000000e+00 : f32
    %138 = vector.broadcast %cst_115 : f32 to vector<72x128xf32>
    %139 = arith.addf %138, %137 : vector<72x128xf32>
    %140 = arith.divf %138, %139 : vector<72x128xf32>
    %c0_116 = arith.constant 0 : index
    %c0_117 = arith.constant 0 : index
    %141 = vector.load %arg14[%c0_116, %c0_117] : memref<1x128xi32, #tpu.memory_space<vmem>>, vector<1x128xi32>
    %cst_118 = arith.constant 8.000000e+00 : f32
    %142 = vector.broadcast %cst_118 : f32 to vector<72x128xf32>
    %143 = arith.mulf %140, %142 : vector<72x128xf32>
    %c0_119 = arith.constant 0 : index
    %c0_120 = arith.constant 0 : index
    %144 = vector.load %arg12[%c0_119, %c0_120] : memref<72x128xf32, #tpu.memory_space<vmem>>, vector<72x128xf32>
    %145 = arith.addf %143, %144 : vector<72x128xf32>
    %146 = arith.mulf %140, %140 : vector<72x128xf32>
    %c0_121 = arith.constant 0 : index
    %c0_122 = arith.constant 0 : index
    %147 = vector.load %arg13[%c0_121, %c0_122] : memref<1x128xf32, #tpu.memory_space<vmem>>, vector<1x128xf32>
    %148 = vector.broadcast %147 : vector<1x128xf32> to vector<72x128xf32>
    %149 = arith.mulf %146, %148 : vector<72x128xf32>
    %c0_i32 = arith.constant 0 : i32
    %150 = vector.broadcast %c0_i32 : i32 to vector<1x128xi32>
    %151 = arith.cmpi eq, %141, %150 : vector<1x128xi32>
    %c1_i32 = arith.constant 1 : i32
    %152 = vector.broadcast %c1_i32 : i32 to vector<1x128xi32>
    %153 = arith.cmpi eq, %141, %152 : vector<1x128xi32>
    %154 = vector.shape_cast %153 : vector<1x128xi1> to vector<1x128xi1>
    %155 = vector.broadcast %154 : vector<1x128xi1> to vector<72x128xi1>
    %156 = arith.select %155, %149, %140 : vector<72x128xi1>, vector<72x128xf32>
    %157 = vector.shape_cast %151 : vector<1x128xi1> to vector<1x128xi1>
    %158 = vector.broadcast %157 : vector<1x128xi1> to vector<72x128xi1>
    %159 = arith.select %158, %145, %156 : vector<72x128xi1>, vector<72x128xf32>
    %c0_123 = arith.constant 0 : index
    %c0_124 = arith.constant 0 : index
    %c0_125 = arith.constant 0 : index
    %160 = vector.load %arg20[%c0_123, %c0_124, %c0_125] : memref<1x72x128xf32, #tpu.memory_space<vmem>>, vector<1x72x128xf32>
    %161 = vector.shape_cast %160 : vector<1x72x128xf32> to vector<72x128xf32>
    %162 = vector.shape_cast %159 : vector<72x128xf32> to vector<1x72x128xf32>
    tpu.vector_store %arg20[%c0_123, %c0_124, %c0_125], %162 {strides = array<i32>} : memref<1x72x128xf32, #tpu.memory_space<vmem>>, vector<1x72x128xf32>,
    %163 = arith.truncf %129 : vector<20x64xf32> to vector<20x64xbf16>
    %c0_126 = arith.constant 0 : index
    %c0_127 = arith.constant 0 : index
    %164 = vector.load %arg15[%c0_126, %c0_127] : memref<64x128xbf16, #tpu.memory_space<vmem>>, vector<64x128xbf16>
    %cst_128 = arith.constant dense<0.000000e+00> : vector<20x128xf32>
    %165 = tpu.matmul %163, %164, %cst_128 {dimension_numbers = #tpu.dot_dimension_numbers<[1], [0], [0], [1], [0, 0, 1, 1], [], []>} : vector<20x64xbf16>, vector<64x128xbf16>, vector<20x128xf32> -> vector<20x128xf32>
    %c0_129 = arith.constant 0 : index
    %c0_130 = arith.constant 0 : index
    %166 = vector.load %arg16[%c0_129, %c0_130] : memref<1x128xf32, #tpu.memory_space<vmem>>, vector<1x128xf32>
    %167 = vector.broadcast %166 : vector<1x128xf32> to vector<20x128xf32>
    %168 = arith.addf %165, %167 : vector<20x128xf32>
    %169 = arith.negf %168 : vector<20x128xf32>
    %170 = math.exp %169 : vector<20x128xf32>
    %cst_131 = arith.constant 1.000000e+00 : f32
    %171 = vector.broadcast %cst_131 : f32 to vector<20x128xf32>
    %172 = arith.addf %171, %170 : vector<20x128xf32>
    %173 = arith.divf %171, %172 : vector<20x128xf32>
    %c0_132 = arith.constant 0 : index
    %c0_133 = arith.constant 0 : index
    %174 = vector.load %arg19[%c0_132, %c0_133] : memref<1x128xi32, #tpu.memory_space<vmem>>, vector<1x128xi32>
    %cst_134 = arith.constant 1.600000e+01 : f32
    %175 = vector.broadcast %cst_134 : f32 to vector<20x128xf32>
    %176 = arith.mulf %173, %175 : vector<20x128xf32>
    %c0_135 = arith.constant 0 : index
    %c0_136 = arith.constant 0 : index
    %177 = vector.load %arg17[%c0_135, %c0_136] : memref<20x128xf32, #tpu.memory_space<vmem>>, vector<20x128xf32>
    %178 = arith.addf %176, %177 : vector<20x128xf32>
    %179 = arith.mulf %173, %173 : vector<20x128xf32>
    %c0_137 = arith.constant 0 : index
    %c0_138 = arith.constant 0 : index
    %180 = vector.load %arg18[%c0_137, %c0_138] : memref<1x128xf32, #tpu.memory_space<vmem>>, vector<1x128xf32>
    %181 = vector.broadcast %180 : vector<1x128xf32> to vector<20x128xf32>
    %182 = arith.mulf %179, %181 : vector<20x128xf32>
    %c0_i32_139 = arith.constant 0 : i32
    %183 = vector.broadcast %c0_i32_139 : i32 to vector<1x128xi32>
    %184 = arith.cmpi eq, %174, %183 : vector<1x128xi32>
    %c1_i32_140 = arith.constant 1 : i32
    %185 = vector.broadcast %c1_i32_140 : i32 to vector<1x128xi32>
    %186 = arith.cmpi eq, %174, %185 : vector<1x128xi32>
    %187 = vector.shape_cast %186 : vector<1x128xi1> to vector<1x128xi1>
    %188 = vector.broadcast %187 : vector<1x128xi1> to vector<20x128xi1>
    %189 = arith.select %188, %182, %173 : vector<20x128xi1>, vector<20x128xf32>
    %190 = vector.shape_cast %184 : vector<1x128xi1> to vector<1x128xi1>
    %191 = vector.broadcast %190 : vector<1x128xi1> to vector<20x128xi1>
    %192 = arith.select %191, %178, %189 : vector<20x128xi1>, vector<20x128xf32>
    %c0_141 = arith.constant 0 : index
    %c0_142 = arith.constant 0 : index
    %c0_143 = arith.constant 0 : index
    %193 = vector.load %arg21[%c0_141, %c0_142, %c0_143] : memref<1x20x128xf32, #tpu.memory_space<vmem>>, vector<1x20x128xf32>
    %194 = vector.shape_cast %193 : vector<1x20x128xf32> to vector<20x128xf32>
    %195 = vector.shape_cast %192 : vector<20x128xf32> to vector<1x20x128xf32>
    tpu.vector_store %arg21[%c0_141, %c0_142, %c0_143], %195 {strides = array<i32>} : memref<1x20x128xf32, #tpu.memory_space<vmem>>, vector<1x20x128xf32>,
    return
  }
  func.func @transform_0(%arg0: i32) -> (i32, i32, i32) {
    %c0_i32 = arith.constant 0 : i32
    %c0_i32_0 = arith.constant 0 : i32
    %c0_i32_1 = arith.constant 0 : i32
    return %arg0, %c0_i32, %c0_i32_0 : i32, i32, i32
  }
  func.func @transform_1(%arg0: i32) -> (i32, i32, i32) {
    %c0_i32 = arith.constant 0 : i32
    %c0_i32_0 = arith.constant 0 : i32
    %c0_i32_1 = arith.constant 0 : i32
    %c0_i32_2 = arith.constant 0 : i32
    return %c0_i32, %c0_i32_0, %c0_i32_1 : i32, i32, i32
  }
  func.func @transform_2(%arg0: i32) -> (i32, i32) {
    %c0_i32 = arith.constant 0 : i32
    %c0_i32_0 = arith.constant 0 : i32
    %c0_i32_1 = arith.constant 0 : i32
    return %c0_i32, %c0_i32_0 : i32, i32
  }
  func.func @transform_3(%arg0: i32) -> (i32, i32, i32) {
    %c0_i32 = arith.constant 0 : i32
    %c0_i32_0 = arith.constant 0 : i32
    %c0_i32_1 = arith.constant 0 : i32
    %c0_i32_2 = arith.constant 0 : i32
    return %c0_i32, %c0_i32_0, %c0_i32_1 : i32, i32, i32
  }
  func.func @transform_4(%arg0: i32) -> (i32, i32, i32) {
    %c0_i32 = arith.constant 0 : i32
    %c0_i32_0 = arith.constant 0 : i32
    %c0_i32_1 = arith.constant 0 : i32
    %c0_i32_2 = arith.constant 0 : i32
    return %c0_i32, %c0_i32_0, %c0_i32_1 : i32, i32, i32
  }
  func.func @transform_5(%arg0: i32) -> (i32, i32) {
    %c0_i32 = arith.constant 0 : i32
    %c0_i32_0 = arith.constant 0 : i32
    %c0_i32_1 = arith.constant 0 : i32
    return %c0_i32, %c0_i32_0 : i32, i32
  }
  func.func @transform_6(%arg0: i32) -> (i32, i32, i32) {
    %c0_i32 = arith.constant 0 : i32
    %c0_i32_0 = arith.constant 0 : i32
    %c0_i32_1 = arith.constant 0 : i32
    %c0_i32_2 = arith.constant 0 : i32
    return %c0_i32, %c0_i32_0, %c0_i32_1 : i32, i32, i32
  }
  func.func @transform_7(%arg0: i32) -> (i32, i32, i32) {
    %c0_i32 = arith.constant 0 : i32
    %c0_i32_0 = arith.constant 0 : i32
    %c0_i32_1 = arith.constant 0 : i32
    %c0_i32_2 = arith.constant 0 : i32
    return %c0_i32, %c0_i32_0, %c0_i32_1 : i32, i32, i32
  }
  func.func @transform_8(%arg0: i32) -> (i32, i32) {
    %c0_i32 = arith.constant 0 : i32
    %c0_i32_0 = arith.constant 0 : i32
    %c0_i32_1 = arith.constant 0 : i32
    return %c0_i32, %c0_i32_0 : i32, i32
  }
  func.func @transform_9(%arg0: i32) -> (i32, i32) {
    %c0_i32 = arith.constant 0 : i32
    %c0_i32_0 = arith.constant 0 : i32
    %c0_i32_1 = arith.constant 0 : i32
    return %c0_i32, %c0_i32_0 : i32, i32
  }
  func.func @transform_10(%arg0: i32) -> (i32, i32) {
    %c0_i32 = arith.constant 0 : i32
    %c0_i32_0 = arith.constant 0 : i32
    %c0_i32_1 = arith.constant 0 : i32
    return %c0_i32, %c0_i32_0 : i32, i32
  }
  func.func @transform_11(%arg0: i32) -> (i32, i32) {
    %c0_i32 = arith.constant 0 : i32
    %c0_i32_0 = arith.constant 0 : i32
    %c0_i32_1 = arith.constant 0 : i32
    return %c0_i32, %c0_i32_0 : i32, i32
  }
  func.func @transform_12(%arg0: i32) -> (i32, i32) {
    %c0_i32 = arith.constant 0 : i32
    %c0_i32_0 = arith.constant 0 : i32
    %c0_i32_1 = arith.constant 0 : i32
    return %c0_i32, %c0_i32_0 : i32, i32
  }
  func.func @transform_13(%arg0: i32) -> (i32, i32) {
    %c0_i32 = arith.constant 0 : i32
    %c0_i32_0 = arith.constant 0 : i32
    %c0_i32_1 = arith.constant 0 : i32
    return %c0_i32, %c0_i32_0 : i32, i32
  }
  func.func @transform_14(%arg0: i32) -> (i32, i32) {
    %c0_i32 = arith.constant 0 : i32
    %c0_i32_0 = arith.constant 0 : i32
    %c0_i32_1 = arith.constant 0 : i32
    return %c0_i32, %c0_i32_0 : i32, i32
  }
  func.func @transform_15(%arg0: i32) -> (i32, i32) {
    %c0_i32 = arith.constant 0 : i32
    %c0_i32_0 = arith.constant 0 : i32
    %c0_i32_1 = arith.constant 0 : i32
    return %c0_i32, %c0_i32_0 : i32, i32
  }
  func.func @transform_16(%arg0: i32) -> (i32, i32) {
    %c0_i32 = arith.constant 0 : i32
    %c0_i32_0 = arith.constant 0 : i32
    %c0_i32_1 = arith.constant 0 : i32
    return %c0_i32, %c0_i32_0 : i32, i32
  }
  func.func @transform_17(%arg0: i32) -> (i32, i32) {
    %c0_i32 = arith.constant 0 : i32
    %c0_i32_0 = arith.constant 0 : i32
    %c0_i32_1 = arith.constant 0 : i32
    return %c0_i32, %c0_i32_0 : i32, i32
  }
  func.func @transform_18(%arg0: i32) -> (i32, i32) {
    %c0_i32 = arith.constant 0 : i32
    %c0_i32_0 = arith.constant 0 : i32
    %c0_i32_1 = arith.constant 0 : i32
    return %c0_i32, %c0_i32_0 : i32, i32
  }
  func.func @transform_19(%arg0: i32) -> (i32, i32, i32) {
    %c0_i32 = arith.constant 0 : i32
    %c0_i32_0 = arith.constant 0 : i32
    %c0_i32_1 = arith.constant 0 : i32
    return %arg0, %c0_i32, %c0_i32_0 : i32, i32, i32
  }
  func.func @transform_20(%arg0: i32) -> (i32, i32, i32) {
    %c0_i32 = arith.constant 0 : i32
    %c0_i32_0 = arith.constant 0 : i32
    %c0_i32_1 = arith.constant 0 : i32
    return %arg0, %c0_i32, %c0_i32_0 : i32, i32, i32
  }
}

</mosaic_0001>

<llo_original>
// kernel: tracing_wrapper_forward.1
$region0: #{tracing_wrapper_forward.1}
  #allocation0 [shape = 'u32[]', space=smem, size = 0x4, offset = 0x4, fixed_abs, tag = 'smem constant byte address 0x4 - core index']
  #allocation1 [shape = 'u32[72,128]{1,0:T(1,128)}', space=vmem, size = 0x9000, scoped, tag = 'internal scratch']
  #allocation2 [shape = 'f32[88,64]{1,0:T(8,128)}', space=vmem, size = 0xb000, scoped, tag = 'scratch operand']
  #allocation3 [shape = 'f32[32,128]{1,0:T(8,128)}', space=vmem, size = 0x4000, scoped, tag = 'scratch operand']
  %s0 = inlined_call_operand.vmem [shape: f32[2,296,12], index: 0, kind: input, shape index: {}]
  %s1 = inlined_call_operand.vmem [shape: bf16[4,12,16], index: 1, kind: input, shape index: {}]
  %s2 = inlined_call_operand.vmem [shape: f32[1,16], index: 2, kind: input, shape index: {}]
  %s3 = inlined_call_operand.vmem [shape: bf16[4,88,272], index: 3, kind: input, shape index: {}]
  %s4 = inlined_call_operand.vmem [shape: bf16[4,64,32], index: 4, kind: input, shape index: {}]
  %s5 = inlined_call_operand.vmem [shape: f32[1,32], index: 5, kind: input, shape index: {}]
  %s6 = inlined_call_operand.vmem [shape: bf16[4,32,72], index: 6, kind: input, shape index: {}]
  %s7 = inlined_call_operand.vmem [shape: bf16[4,128,64], index: 7, kind: input, shape index: {}]
  %s8 = inlined_call_operand.vmem [shape: f32[1,64], index: 8, kind: input, shape index: {}]
  %s9 = inlined_call_operand.vmem [shape: bf16[32,128], index: 9, kind: input, shape index: {}]
  %s10 = inlined_call_operand.vmem [shape: f32[1,128], index: 10, kind: input, shape index: {}]
  %s11 = inlined_call_operand.vmem [shape: f32[72,128], index: 11, kind: input, shape index: {}]
  %s12 = inlined_call_operand.vmem [shape: f32[1,128], index: 12, kind: input, shape index: {}]
  %s13 = inlined_call_operand.vmem [shape: s32[1,128], index: 13, kind: input, shape index: {}, may-alias: {13,18}]
  %s14 = inlined_call_operand.vmem [shape: bf16[64,128], index: 14, kind: input, shape index: {}]
  %s15 = inlined_call_operand.vmem [shape: f32[1,128], index: 15, kind: input, shape index: {}]
  %s16 = inlined_call_operand.vmem [shape: f32[20,128], index: 16, kind: input, shape index: {}]
  %s17 = inlined_call_operand.vmem [shape: f32[1,128], index: 17, kind: input, shape index: {}]
  %s18 = inlined_call_operand.vmem [shape: s32[1,128], index: 18, kind: input, shape index: {}, may-alias: {13,18}]
  %s19 = inlined_call_operand.vmem [shape: f32[2,72,128], index: 19, kind: output, shape index: {0}]
  %s20 = inlined_call_operand.vmem [shape: f32[2,20,128], index: 20, kind: output, shape index: {1}]
  %21 = xla_tuple %s19, %s20
  %s22 = sld [smem:[#allocation0]]
  $region117: #{tracing_wrapper_forward.1} parent=0
    _
  %s24 = ssub.s32 1, %s22
  %s25 = scalar_select 0, %s24, %s22
  loop: start=0, step=1, limit=4
  $region2: #{tracing_wrapper_forward.1} parent=0 // loop_pre_header
    _
  $region3: #{tracing_wrapper_forward.1} parent=0 // loop_header
    %s27 = sphi 0, %s31
    %p28 = scmp.ge.s32.totalorder %s27, 4
    %s37 = sphi 0, %s39
    %s40 = sphi 0, %s37
    %s41 = sphi 0, %s40
    %s57 = sphi 0, %s41
    %s61 = sphi 0, %s61
    %s63 = sphi 0, %s61
    %s64 = sphi 0, %s63
    %s78 = sphi 0, %s64
    %s82 = sphi 0, %s82
    %s84 = sphi 0, %s82
    %s85 = sphi 0, %s84
    %s99 = sphi 0, %s85
    %s103 = sphi 0, %s103
    %s105 = sphi 0, %s103
    %s106 = sphi 0, %s105
    %s120 = sphi 0, %s106
    %s124 = sphi 0, %s124
    %s126 = sphi 0, %s124
    %s127 = sphi 0, %s126
    %s141 = sphi 0, %s127
    %s145 = sphi 0, %s145
    %s147 = sphi 0, %s145
    %s148 = sphi 0, %s147
    %s162 = sphi 0, %s148
    %s166 = sphi 0, %s166
    %s168 = sphi 0, %s166
    %s169 = sphi 0, %s168
    %s183 = sphi 0, %s169
    %s187 = sphi 0, %s187
    %s189 = sphi 0, %s187
    %s190 = sphi 0, %s189
    %s204 = sphi 0, %s190
    %s208 = sphi 0, %s208
    %s210 = sphi 0, %s208
    %s211 = sphi 0, %s210
    %s225 = sphi 0, %s211
    %s229 = sphi 0, %s229
    %s231 = sphi 0, %s229
    %s232 = sphi 0, %s231
    %s246 = sphi 0, %s232
    %s250 = sphi 0, %s250
    %s252 = sphi 0, %s250
    %s253 = sphi 0, %s252
    %s267 = sphi 0, %s253
    %s271 = sphi 0, %s271
    %s273 = sphi 0, %s271
    %s274 = sphi 0, %s273
    %s288 = sphi 0, %s274
    %s292 = sphi 0, %s292
    %s294 = sphi 0, %s292
    %s295 = sphi 0, %s294
    %s309 = sphi 0, %s295
    %s313 = sphi 0, %s313
    %s315 = sphi 0, %s313
    %s316 = sphi 0, %s315
    %s330 = sphi 0, %s316
    %s334 = sphi 0, %s334
    %s336 = sphi 0, %s334
    %s337 = sphi 0, %s336
    %s351 = sphi 0, %s337
    %s355 = sphi 0, %s355
    %s357 = sphi 0, %s355
    %s358 = sphi 0, %s357
    %s372 = sphi 0, %s358
    %s376 = sphi 0, %s376
    %s378 = sphi 0, %s376
    %s379 = sphi 0, %s378
    %s393 = sphi 0, %s379
    %s397 = sphi 0, %s397
    %s399 = sphi 0, %s397
    %s400 = sphi 0, %s399
    %s414 = sphi 0, %s400
    %s418 = sphi 0, %s418
    %s420 = sphi 0, %s418
    %s421 = sphi 0, %s420
    %s435 = sphi 0, %s421
    %s441 = sphi 0, %s443
    %s444 = sphi 0, %s441
    %s445 = sphi 0, %s444
    %s461 = sphi 0, %s445
    %s467 = sphi 0, %s469
    %s470 = sphi 0, %s467
    %s471 = sphi 0, %s470
    %s487 = sphi 0, %s471
  $region4: #{tracing_wrapper_forward.1} parent=0 // loop_header_branch
    %30 = sbr.rel (%p28) target = $region8
  $region5: #{tracing_wrapper_forward.1} parent=0 // loop_body
    %s32 = ssub.s32 %s27, 1
    %s33 = ssub.s32 %s27, 2
    %s34 = sadd.s32 %s27, 1
    %s35 = ssub.s32 %s27, %s34
    %p36 = scmp.eq.s32.totalorder %s35, 0
    %s38 = sadd.s32 %s37, 1
    %s39 = scalar_select %p36, %s37, %s38
    %p42 = pneg %p36
    %p43 = scmp.eq.s32.totalorder %s27, 1
    %p44 = por %p42, %p43
    %p45 = scmp.ne.s32.totalorder %s37, %s40
    %p46 = scmp.eq.s32.totalorder %s27, 0
    %p47 = por %p45, %p46
    %p48 = scmp.ne.s32.totalorder %s37, %s40
    %p49 = scmp.eq.s32.totalorder %s32, 1
    %p50 = por %p48, %p49
    %p51 = scmp.ne.s32.totalorder %s40, %s41
    %p52 = scmp.eq.s32.totalorder %s32, 0
    %p53 = por %p51, %p52
    %p54 = scmp.ne.s32.totalorder %s40, %s41
    %p55 = scmp.eq.s32.totalorder %s33, 1
    %p56 = por %p54, %p55
    %p58 = scmp.ne.s32.totalorder %s41, %s57
    %p59 = scmp.eq.s32.totalorder %s33, 0
    %p60 = por %p58, %p59
    %s62 = sadd.s32 %s61, 1
    %p65 = scmp.eq.s32.totalorder %s27, 1
    %p66 = scmp.ne.s32.totalorder %s61, %s63
    %p67 = scmp.eq.s32.totalorder %s27, 0
    %p68 = por %p66, %p67
    %p69 = scmp.ne.s32.totalorder %s61, %s63
    %p70 = scmp.eq.s32.totalorder %s32, 1
    %p71 = por %p69, %p70
    %p72 = scmp.ne.s32.totalorder %s63, %s64
    %p73 = scmp.eq.s32.totalorder %s32, 0
    %p74 = por %p72, %p73
    %p75 = scmp.ne.s32.totalorder %s63, %s64
    %p76 = scmp.eq.s32.totalorder %s33, 1
    %p77 = por %p75, %p76
    %p79 = scmp.ne.s32.totalorder %s64, %s78
    %p80 = scmp.eq.s32.totalorder %s33, 0
    %p81 = por %p79, %p80
    %s83 = sadd.s32 %s82, 1
    %p86 = scmp.eq.s32.totalorder %s27, 1
    %p87 = scmp.ne.s32.totalorder %s82, %s84
    %p88 = scmp.eq.s32.totalorder %s27, 0
    %p89 = por %p87, %p88
    %p90 = scmp.ne.s32.totalorder %s82, %s84
    %p91 = scmp.eq.s32.totalorder %s32, 1
    %p92 = por %p90, %p91
    %p93 = scmp.ne.s32.totalorder %s84, %s85
    %p94 = scmp.eq.s32.totalorder %s32, 0
    %p95 = por %p93, %p94
    %p96 = scmp.ne.s32.totalorder %s84, %s85
    %p97 = scmp.eq.s32.totalorder %s33, 1
    %p98 = por %p96, %p97
    %p100 = scmp.ne.s32.totalorder %s85, %s99
    %p101 = scmp.eq.s32.totalorder %s33, 0
    %p102 = por %p100, %p101
    %s104 = sadd.s32 %s103, 1
    %p107 = scmp.eq.s32.totalorder %s27, 1
    %p108 = scmp.ne.s32.totalorder %s103, %s105
    %p109 = scmp.eq.s32.totalorder %s27, 0
    %p110 = por %p108, %p109
    %p111 = scmp.ne.s32.totalorder %s103, %s105
    %p112 = scmp.eq.s32.totalorder %s32, 1
    %p113 = por %p111, %p112
    %p114 = scmp.ne.s32.totalorder %s105, %s106
    %p115 = scmp.eq.s32.totalorder %s32, 0
    %p116 = por %p114, %p115
    %p117 = scmp.ne.s32.totalorder %s105, %s106
    %p118 = scmp.eq.s32.totalorder %s33, 1
    %p119 = por %p117, %p118
    %p121 = scmp.ne.s32.totalorder %s106, %s120
    %p122 = scmp.eq.s32.totalorder %s33, 0
    %p123 = por %p121, %p122
    %s125 = sadd.s32 %s124, 1
    %p128 = scmp.eq.s32.totalorder %s27, 1
    %p129 = scmp.ne.s32.totalorder %s124, %s126
    %p130 = scmp.eq.s32.totalorder %s27, 0
    %p131 = por %p129, %p130
    %p132 = scmp.ne.s32.totalorder %s124, %s126
    %p133 = scmp.eq.s32.totalorder %s32, 1
    %p134 = por %p132, %p133
    %p135 = scmp.ne.s32.totalorder %s126, %s127
    %p136 = scmp.eq.s32.totalorder %s32, 0
    %p137 = por %p135, %p136
    %p138 = scmp.ne.s32.totalorder %s126, %s127
    %p139 = scmp.eq.s32.totalorder %s33, 1
    %p140 = por %p138, %p139
    %p142 = scmp.ne.s32.totalorder %s127, %s141
    %p143 = scmp.eq.s32.totalorder %s33, 0
    %p144 = por %p142, %p143
    %s146 = sadd.s32 %s145, 1
    %p149 = scmp.eq.s32.totalorder %s27, 1
    %p150 = scmp.ne.s32.totalorder %s145, %s147
    %p151 = scmp.eq.s32.totalorder %s27, 0
    %p152 = por %p150, %p151
    %p153 = scmp.ne.s32.totalorder %s145, %s147
    %p154 = scmp.eq.s32.totalorder %s32, 1
    %p155 = por %p153, %p154
    %p156 = scmp.ne.s32.totalorder %s147, %s148
    %p157 = scmp.eq.s32.totalorder %s32, 0
    %p158 = por %p156, %p157
    %p159 = scmp.ne.s32.totalorder %s147, %s148
    %p160 = scmp.eq.s32.totalorder %s33, 1
    %p161 = por %p159, %p160
    %p163 = scmp.ne.s32.totalorder %s148, %s162
    %p164 = scmp.eq.s32.totalorder %s33, 0
    %p165 = por %p163, %p164
    %s167 = sadd.s32 %s166, 1
    %p170 = scmp.eq.s32.totalorder %s27, 1
    %p171 = scmp.ne.s32.totalorder %s166, %s168
    %p172 = scmp.eq.s32.totalorder %s27, 0
    %p173 = por %p171, %p172
    %p174 = scmp.ne.s32.totalorder %s166, %s168
    %p175 = scmp.eq.s32.totalorder %s32, 1
    %p176 = por %p174, %p175
    %p177 = scmp.ne.s32.totalorder %s168, %s169
    %p178 = scmp.eq.s32.totalorder %s32, 0
    %p179 = por %p177, %p178
    %p180 = scmp.ne.s32.totalorder %s168, %s169
    %p181 = scmp.eq.s32.totalorder %s33, 1
    %p182 = por %p180, %p181
    %p184 = scmp.ne.s32.totalorder %s169, %s183
    %p185 = scmp.eq.s32.totalorder %s33, 0
    %p186 = por %p184, %p185
    %s188 = sadd.s32 %s187, 1
    %p191 = scmp.eq.s32.totalorder %s27, 1
    %p192 = scmp.ne.s32.totalorder %s187, %s189
    %p193 = scmp.eq.s32.totalorder %s27, 0
    %p194 = por %p192, %p193
    %p195 = scmp.ne.s32.totalorder %s187, %s189
    %p196 = scmp.eq.s32.totalorder %s32, 1
    %p197 = por %p195, %p196
    %p198 = scmp.ne.s32.totalorder %s189, %s190
    %p199 = scmp.eq.s32.totalorder %s32, 0
    %p200 = por %p198, %p199
    %p201 = scmp.ne.s32.totalorder %s189, %s190
    %p202 = scmp.eq.s32.totalorder %s33, 1
    %p203 = por %p201, %p202
    %p205 = scmp.ne.s32.totalorder %s190, %s204
    %p206 = scmp.eq.s32.totalorder %s33, 0
    %p207 = por %p205, %p206
    %s209 = sadd.s32 %s208, 1
    %p212 = scmp.eq.s32.totalorder %s27, 1
    %p213 = scmp.ne.s32.totalorder %s208, %s210
    %p214 = scmp.eq.s32.totalorder %s27, 0
    %p215 = por %p213, %p214
    %p216 = scmp.ne.s32.totalorder %s208, %s210
    %p217 = scmp.eq.s32.totalorder %s32, 1
    %p218 = por %p216, %p217
    %p219 = scmp.ne.s32.totalorder %s210, %s211
    %p220 = scmp.eq.s32.totalorder %s32, 0
    %p221 = por %p219, %p220
    %p222 = scmp.ne.s32.totalorder %s210, %s211
    %p223 = scmp.eq.s32.totalorder %s33, 1
    %p224 = por %p222, %p223
    %p226 = scmp.ne.s32.totalorder %s211, %s225
    %p227 = scmp.eq.s32.totalorder %s33, 0
    %p228 = por %p226, %p227
    %s230 = sadd.s32 %s229, 1
    %p233 = scmp.eq.s32.totalorder %s27, 1
    %p234 = scmp.ne.s32.totalorder %s229, %s231
    %p235 = scmp.eq.s32.totalorder %s27, 0
    %p236 = por %p234, %p235
    %p237 = scmp.ne.s32.totalorder %s229, %s231
    %p238 = scmp.eq.s32.totalorder %s32, 1
    %p239 = por %p237, %p238
    %p240 = scmp.ne.s32.totalorder %s231, %s232
    %p241 = scmp.eq.s32.totalorder %s32, 0
    %p242 = por %p240, %p241
    %p243 = scmp.ne.s32.totalorder %s231, %s232
    %p244 = scmp.eq.s32.totalorder %s33, 1
    %p245 = por %p243, %p244
    %p247 = scmp.ne.s32.totalorder %s232, %s246
    %p248 = scmp.eq.s32.totalorder %s33, 0
    %p249 = por %p247, %p248
    %s251 = sadd.s32 %s250, 1
    %p254 = scmp.eq.s32.totalorder %s27, 1
    %p255 = scmp.ne.s32.totalorder %s250, %s252
    %p256 = scmp.eq.s32.totalorder %s27, 0
    %p257 = por %p255, %p256
    %p258 = scmp.ne.s32.totalorder %s250, %s252
    %p259 = scmp.eq.s32.totalorder %s32, 1
    %p260 = por %p258, %p259
    %p261 = scmp.ne.s32.totalorder %s252, %s253
    %p262 = scmp.eq.s32.totalorder %s32, 0
    %p263 = por %p261, %p262
    %p264 = scmp.ne.s32.totalorder %s252, %s253
    %p265 = scmp.eq.s32.totalorder %s33, 1
    %p266 = por %p264, %p265
    %p268 = scmp.ne.s32.totalorder %s253, %s267
    %p269 = scmp.eq.s32.totalorder %s33, 0
    %p270 = por %p268, %p269
    %s272 = sadd.s32 %s271, 1
    %p275 = scmp.eq.s32.totalorder %s27, 1
    %p276 = scmp.ne.s32.totalorder %s271, %s273
    %p277 = scmp.eq.s32.totalorder %s27, 0
    %p278 = por %p276, %p277
    %p279 = scmp.ne.s32.totalorder %s271, %s273
    %p280 = scmp.eq.s32.totalorder %s32, 1
    %p281 = por %p279, %p280
    %p282 = scmp.ne.s32.totalorder %s273, %s274
    %p283 = scmp.eq.s32.totalorder %s32, 0
    %p284 = por %p282, %p283
    %p285 = scmp.ne.s32.totalorder %s273, %s274
    %p286 = scmp.eq.s32.totalorder %s33, 1
    %p287 = por %p285, %p286
    %p289 = scmp.ne.s32.totalorder %s274, %s288
    %p290 = scmp.eq.s32.totalorder %s33, 0
    %p291 = por %p289, %p290
    %s293 = sadd.s32 %s292, 1
    %p296 = scmp.eq.s32.totalorder %s27, 1
    %p297 = scmp.ne.s32.totalorder %s292, %s294
    %p298 = scmp.eq.s32.totalorder %s27, 0
    %p299 = por %p297, %p298
    %p300 = scmp.ne.s32.totalorder %s292, %s294
    %p301 = scmp.eq.s32.totalorder %s32, 1
    %p302 = por %p300, %p301
    %p303 = scmp.ne.s32.totalorder %s294, %s295
    %p304 = scmp.eq.s32.totalorder %s32, 0
    %p305 = por %p303, %p304
    %p306 = scmp.ne.s32.totalorder %s294, %s295
    %p307 = scmp.eq.s32.totalorder %s33, 1
    %p308 = por %p306, %p307
    %p310 = scmp.ne.s32.totalorder %s295, %s309
    %p311 = scmp.eq.s32.totalorder %s33, 0
    %p312 = por %p310, %p311
    %s314 = sadd.s32 %s313, 1
    %p317 = scmp.eq.s32.totalorder %s27, 1
    %p318 = scmp.ne.s32.totalorder %s313, %s315
    %p319 = scmp.eq.s32.totalorder %s27, 0
    %p320 = por %p318, %p319
    %p321 = scmp.ne.s32.totalorder %s313, %s315
    %p322 = scmp.eq.s32.totalorder %s32, 1
    %p323 = por %p321, %p322
    %p324 = scmp.ne.s32.totalorder %s315, %s316
    %p325 = scmp.eq.s32.totalorder %s32, 0
    %p326 = por %p324, %p325
    %p327 = scmp.ne.s32.totalorder %s315, %s316
    %p328 = scmp.eq.s32.totalorder %s33, 1
    %p329 = por %p327, %p328
    %p331 = scmp.ne.s32.totalorder %s316, %s330
    %p332 = scmp.eq.s32.totalorder %s33, 0
    %p333 = por %p331, %p332
    %s335 = sadd.s32 %s334, 1
    %p338 = scmp.eq.s32.totalorder %s27, 1
    %p339 = scmp.ne.s32.totalorder %s334, %s336
    %p340 = scmp.eq.s32.totalorder %s27, 0
    %p341 = por %p339, %p340
    %p342 = scmp.ne.s32.totalorder %s334, %s336
    %p343 = scmp.eq.s32.totalorder %s32, 1
    %p344 = por %p342, %p343
    %p345 = scmp.ne.s32.totalorder %s336, %s337
    %p346 = scmp.eq.s32.totalorder %s32, 0
    %p347 = por %p345, %p346
    %p348 = scmp.ne.s32.totalorder %s336, %s337
    %p349 = scmp.eq.s32.totalorder %s33, 1
    %p350 = por %p348, %p349
    %p352 = scmp.ne.s32.totalorder %s337, %s351
    %p353 = scmp.eq.s32.totalorder %s33, 0
    %p354 = por %p352, %p353
    %s356 = sadd.s32 %s355, 1
    %p359 = scmp.eq.s32.totalorder %s27, 1
    %p360 = scmp.ne.s32.totalorder %s355, %s357
    %p361 = scmp.eq.s32.totalorder %s27, 0
    %p362 = por %p360, %p361
    %p363 = scmp.ne.s32.totalorder %s355, %s357
    %p364 = scmp.eq.s32.totalorder %s32, 1
    %p365 = por %p363, %p364
    %p366 = scmp.ne.s32.totalorder %s357, %s358
    %p367 = scmp.eq.s32.totalorder %s32, 0
    %p368 = por %p366, %p367
    %p369 = scmp.ne.s32.totalorder %s357, %s358
    %p370 = scmp.eq.s32.totalorder %s33, 1
    %p371 = por %p369, %p370
    %p373 = scmp.ne.s32.totalorder %s358, %s372
    %p374 = scmp.eq.s32.totalorder %s33, 0
    %p375 = por %p373, %p374
    %s377 = sadd.s32 %s376, 1
    %p380 = scmp.eq.s32.totalorder %s27, 1
    %p381 = scmp.ne.s32.totalorder %s376, %s378
    %p382 = scmp.eq.s32.totalorder %s27, 0
    %p383 = por %p381, %p382
    %p384 = scmp.ne.s32.totalorder %s376, %s378
    %p385 = scmp.eq.s32.totalorder %s32, 1
    %p386 = por %p384, %p385
    %p387 = scmp.ne.s32.totalorder %s378, %s379
    %p388 = scmp.eq.s32.totalorder %s32, 0
    %p389 = por %p387, %p388
    %p390 = scmp.ne.s32.totalorder %s378, %s379
    %p391 = scmp.eq.s32.totalorder %s33, 1
    %p392 = por %p390, %p391
    %p394 = scmp.ne.s32.totalorder %s379, %s393
    %p395 = scmp.eq.s32.totalorder %s33, 0
    %p396 = por %p394, %p395
    %s398 = sadd.s32 %s397, 1
    %p401 = scmp.eq.s32.totalorder %s27, 1
    %p402 = scmp.ne.s32.totalorder %s397, %s399
    %p403 = scmp.eq.s32.totalorder %s27, 0
    %p404 = por %p402, %p403
    %p405 = scmp.ne.s32.totalorder %s397, %s399
    %p406 = scmp.eq.s32.totalorder %s32, 1
    %p407 = por %p405, %p406
    %p408 = scmp.ne.s32.totalorder %s399, %s400
    %p409 = scmp.eq.s32.totalorder %s32, 0
    %p410 = por %p408, %p409
    %p411 = scmp.ne.s32.totalorder %s399, %s400
    %p412 = scmp.eq.s32.totalorder %s33, 1
    %p413 = por %p411, %p412
    %p415 = scmp.ne.s32.totalorder %s400, %s414
    %p416 = scmp.eq.s32.totalorder %s33, 0
    %p417 = por %p415, %p416
    %s419 = sadd.s32 %s418, 1
    %p422 = scmp.eq.s32.totalorder %s27, 1
    %p423 = scmp.ne.s32.totalorder %s418, %s420
    %p424 = scmp.eq.s32.totalorder %s27, 0
    %p425 = por %p423, %p424
    %p426 = scmp.ne.s32.totalorder %s418, %s420
    %p427 = scmp.eq.s32.totalorder %s32, 1
    %p428 = por %p426, %p427
    %p429 = scmp.ne.s32.totalorder %s420, %s421
    %p430 = scmp.eq.s32.totalorder %s32, 0
    %p431 = por %p429, %p430
    %p432 = scmp.ne.s32.totalorder %s420, %s421
    %p433 = scmp.eq.s32.totalorder %s33, 1
    %p434 = por %p432, %p433
    %p436 = scmp.ne.s32.totalorder %s421, %s435
    %p437 = scmp.eq.s32.totalorder %s33, 0
    %p438 = por %p436, %p437
    %s439 = ssub.s32 %s27, %s34
    %p440 = scmp.eq.s32.totalorder %s439, 0
    %s442 = sadd.s32 %s441, 1
    %s443 = scalar_select %p440, %s441, %s442
    %p446 = pneg %p440
    %p447 = scmp.eq.s32.totalorder %s27, 1
    %p448 = por %p446, %p447
    %p449 = scmp.ne.s32.totalorder %s441, %s444
    %p450 = scmp.eq.s32.totalorder %s27, 0
    %p451 = por %p449, %p450
    %p452 = scmp.ne.s32.totalorder %s441, %s444
    %p453 = scmp.eq.s32.totalorder %s32, 1
    %p454 = por %p452, %p453
    %p455 = scmp.ne.s32.totalorder %s444, %s445
    %p456 = scmp.eq.s32.totalorder %s32, 0
    %p457 = por %p455, %p456
    %p458 = scmp.ne.s32.totalorder %s444, %s445
    %p459 = scmp.eq.s32.totalorder %s33, 1
    %p460 = por %p458, %p459
    %p462 = scmp.ne.s32.totalorder %s445, %s461
    %p463 = scmp.eq.s32.totalorder %s33, 0
    %p464 = por %p462, %p463
    %s465 = ssub.s32 %s27, %s34
    %p466 = scmp.eq.s32.totalorder %s465, 0
    %s468 = sadd.s32 %s467, 1
    %s469 = scalar_select %p466, %s467, %s468
    %p472 = pneg %p466
    %p473 = scmp.eq.s32.totalorder %s27, 1
    %p474 = por %p472, %p473
    %p475 = scmp.ne.s32.totalorder %s467, %s470
    %p476 = scmp.eq.s32.totalorder %s27, 0
    %p477 = por %p475, %p476
    %p478 = scmp.ne.s32.totalorder %s467, %s470
    %p479 = scmp.eq.s32.totalorder %s32, 1
    %p480 = por %p478, %p479
    %p481 = scmp.ne.s32.totalorder %s470, %s471
    %p482 = scmp.eq.s32.totalorder %s32, 0
    %p483 = por %p481, %p482
    %p484 = scmp.ne.s32.totalorder %s470, %s471
    %p485 = scmp.eq.s32.totalorder %s33, 1
    %p486 = por %p484, %p485
    %p488 = scmp.ne.s32.totalorder %s471, %s487
    %p489 = scmp.eq.s32.totalorder %s33, 0
    %p490 = por %p488, %p489
    %p491 = scmp.le.s32.totalorder 1, %s27
    %p492 = scmp.lt.s32.totalorder %s27, 3
    %p493 = pnand %p491, %p492
    %p494 = pneg %p493
    // Predicated region
    $region9: #{tracing_wrapper_forward.1} parent=5 // pred_check
      _
    $region10: #{tracing_wrapper_forward.1} parent=5 // pred_check_branch
      %496 = sbr.rel (%p493) target = $region12
    $region11: #{tracing_wrapper_forward.1} parent=5 // pred_region
      %s497 = ssub.s32 %s27, 1
      // Predicated region
      $region13: #{tracing_wrapper_forward.1} parent=11 // pred_check
        %p498 = pneg %p74
      $region14: #{tracing_wrapper_forward.1} parent=11 // pred_check_branch
        %500 = sbr.rel (%p498) target = $region16
      $region15: #{tracing_wrapper_forward.1} parent=11 // pred_region
        _
      $region16: #{tracing_wrapper_forward.1} parent=11 // pred_fallthru
        _
      // Predicated region
      $region17: #{tracing_wrapper_forward.1} parent=11 // pred_check
        %p501 = pneg %p95
      $region18: #{tracing_wrapper_forward.1} parent=11 // pred_check_branch
        %503 = sbr.rel (%p501) target = $region20
      $region19: #{tracing_wrapper_forward.1} parent=11 // pred_region
        _
      $region20: #{tracing_wrapper_forward.1} parent=11 // pred_fallthru
        _
      // Predicated region
      $region21: #{tracing_wrapper_forward.1} parent=11 // pred_check
        %p504 = pneg %p116
      $region22: #{tracing_wrapper_forward.1} parent=11 // pred_check_branch
        %506 = sbr.rel (%p504) target = $region24
      $region23: #{tracing_wrapper_forward.1} parent=11 // pred_region
        _
      $region24: #{tracing_wrapper_forward.1} parent=11 // pred_fallthru
        _
      // Predicated region
      $region25: #{tracing_wrapper_forward.1} parent=11 // pred_check
        %p507 = pneg %p137
      $region26: #{tracing_wrapper_forward.1} parent=11 // pred_check_branch
        %509 = sbr.rel (%p507) target = $region28
      $region27: #{tracing_wrapper_forward.1} parent=11 // pred_region
        _
      $region28: #{tracing_wrapper_forward.1} parent=11 // pred_fallthru
        _
      // Predicated region
      $region29: #{tracing_wrapper_forward.1} parent=11 // pred_check
        %p510 = pneg %p158
      $region30: #{tracing_wrapper_forward.1} parent=11 // pred_check_branch
        %512 = sbr.rel (%p510) target = $region32
      $region31: #{tracing_wrapper_forward.1} parent=11 // pred_region
        _
      $region32: #{tracing_wrapper_forward.1} parent=11 // pred_fallthru
        _
      // Predicated region
      $region33: #{tracing_wrapper_forward.1} parent=11 // pred_check
        %p513 = pneg %p179
      $region34: #{tracing_wrapper_forward.1} parent=11 // pred_check_branch
        %515 = sbr.rel (%p513) target = $region36
      $region35: #{tracing_wrapper_forward.1} parent=11 // pred_region
        _
      $region36: #{tracing_wrapper_forward.1} parent=11 // pred_fallthru
        _
      // Predicated region
      $region37: #{tracing_wrapper_forward.1} parent=11 // pred_check
        %p516 = pneg %p200
      $region38: #{tracing_wrapper_forward.1} parent=11 // pred_check_branch
        %518 = sbr.rel (%p516) target = $region40
      $region39: #{tracing_wrapper_forward.1} parent=11 // pred_region
        _
      $region40: #{tracing_wrapper_forward.1} parent=11 // pred_fallthru
        _
      // Predicated region
      $region41: #{tracing_wrapper_forward.1} parent=11 // pred_check
        %p519 = pneg %p221
      $region42: #{tracing_wrapper_forward.1} parent=11 // pred_check_branch
        %521 = sbr.rel (%p519) target = $region44
      $region43: #{tracing_wrapper_forward.1} parent=11 // pred_region
        _
      $region44: #{tracing_wrapper_forward.1} parent=11 // pred_fallthru
        _
      // Predicated region
      $region45: #{tracing_wrapper_forward.1} parent=11 // pred_check
        %p522 = pneg %p242
      $region46: #{tracing_wrapper_forward.1} parent=11 // pred_check_branch
        %524 = sbr.rel (%p522) target = $region48
      $region47: #{tracing_wrapper_forward.1} parent=11 // pred_region
        _
      $region48: #{tracing_wrapper_forward.1} parent=11 // pred_fallthru
        _
      // Predicated region
      $region49: #{tracing_wrapper_forward.1} parent=11 // pred_check
        %p525 = pneg %p263
      $region50: #{tracing_wrapper_forward.1} parent=11 // pred_check_branch
        %527 = sbr.rel (%p525) target = $region52
      $region51: #{tracing_wrapper_forward.1} parent=11 // pred_region
        _
      $region52: #{tracing_wrapper_forward.1} parent=11 // pred_fallthru
        _
      // Predicated region
      $region53: #{tracing_wrapper_forward.1} parent=11 // pred_check
        %p528 = pneg %p284
      $region54: #{tracing_wrapper_forward.1} parent=11 // pred_check_branch
        %530 = sbr.rel (%p528) target = $region56
      $region55: #{tracing_wrapper_forward.1} parent=11 // pred_region
        _
      $region56: #{tracing_wrapper_forward.1} parent=11 // pred_fallthru
        _
      // Predicated region
      $region57: #{tracing_wrapper_forward.1} parent=11 // pred_check
        %p531 = pneg %p305
      $region58: #{tracing_wrapper_forward.1} parent=11 // pred_check_branch
        %533 = sbr.rel (%p531) target = $region60
      $region59: #{tracing_wrapper_forward.1} parent=11 // pred_region
        _
      $region60: #{tracing_wrapper_forward.1} parent=11 // pred_fallthru
        _
      // Predicated region
      $region61: #{tracing_wrapper_forward.1} parent=11 // pred_check
        %p534 = pneg %p326
      $region62: #{tracing_wrapper_forward.1} parent=11 // pred_check_branch
        %536 = sbr.rel (%p534) target = $region64
      $region63: #{tracing_wrapper_forward.1} parent=11 // pred_region
        _
      $region64: #{tracing_wrapper_forward.1} parent=11 // pred_fallthru
        _
      // Predicated region
      $region65: #{tracing_wrapper_forward.1} parent=11 // pred_check
        %p537 = pneg %p347
      $region66: #{tracing_wrapper_forward.1} parent=11 // pred_check_branch
        %539 = sbr.rel (%p537) target = $region68
      $region67: #{tracing_wrapper_forward.1} parent=11 // pred_region
        _
      $region68: #{tracing_wrapper_forward.1} parent=11 // pred_fallthru
        _
      // Predicated region
      $region69: #{tracing_wrapper_forward.1} parent=11 // pred_check
        %p540 = pneg %p368
      $region70: #{tracing_wrapper_forward.1} parent=11 // pred_check_branch
        %542 = sbr.rel (%p540) target = $region72
      $region71: #{tracing_wrapper_forward.1} parent=11 // pred_region
        _
      $region72: #{tracing_wrapper_forward.1} parent=11 // pred_fallthru
        _
      // Predicated region
      $region73: #{tracing_wrapper_forward.1} parent=11 // pred_check
        %p543 = pneg %p389
      $region74: #{tracing_wrapper_forward.1} parent=11 // pred_check_branch
        %545 = sbr.rel (%p543) target = $region76
      $region75: #{tracing_wrapper_forward.1} parent=11 // pred_region
        _
      $region76: #{tracing_wrapper_forward.1} parent=11 // pred_fallthru
        _
      // Predicated region
      $region77: #{tracing_wrapper_forward.1} parent=11 // pred_check
        %p546 = pneg %p410
      $region78: #{tracing_wrapper_forward.1} parent=11 // pred_check_branch
        %548 = sbr.rel (%p546) target = $region80
      $region79: #{tracing_wrapper_forward.1} parent=11 // pred_region
        _
      $region80: #{tracing_wrapper_forward.1} parent=11 // pred_fallthru
        _
      // Predicated region
      $region81: #{tracing_wrapper_forward.1} parent=11 // pred_check
        %p549 = pneg %p431
      $region82: #{tracing_wrapper_forward.1} parent=11 // pred_check_branch
        %551 = sbr.rel (%p549) target = $region84
      $region83: #{tracing_wrapper_forward.1} parent=11 // pred_region
        _
      $region84: #{tracing_wrapper_forward.1} parent=11 // pred_fallthru
        _
    $region12: #{tracing_wrapper_forward.1} parent=5 // pred_fallthru
      _
    %p552 = scmp.lt.s32.totalorder %s27, 2
    // Predicated region
    $region85: #{tracing_wrapper_forward.1} parent=5 // pred_check
      %p553 = pneg %p552
    $region86: #{tracing_wrapper_forward.1} parent=5 // pred_check_branch
      %555 = sbr.rel (%p553) target = $region88
    $region87: #{tracing_wrapper_forward.1} parent=5 // pred_region
      // Predicated region
      $region89: #{tracing_wrapper_forward.1} parent=87 // pred_check
        %p556 = pneg %p47
      $region90: #{tracing_wrapper_forward.1} parent=87 // pred_check_branch
        %558 = sbr.rel (%p556) target = $region92
      $region91: #{tracing_wrapper_forward.1} parent=87 // pred_region
        %p559 = scmp.lt.s32.totalorder %s27, 1
        %s560 = scalar_select %p559, %s27, 1
        %s561 = smul.addr %s560, 37
        %s562 = smul.addr %s561, 8
        %s563 = scalar_lea.vmem %s0, %s562
      $region92: #{tracing_wrapper_forward.1} parent=87 // pred_fallthru
        _
    $region88: #{tracing_wrapper_forward.1} parent=5 // pred_fallthru
      _
    %p564 = scmp.le.s32.totalorder 1, %s27
    %p565 = scmp.lt.s32.totalorder %s27, 3
    %p566 = pnand %p564, %p565
    %p567 = pneg %p566
    // Predicated region
    $region93: #{tracing_wrapper_forward.1} parent=5 // pred_check
      _
    $region94: #{tracing_wrapper_forward.1} parent=5 // pred_check_branch
      %569 = sbr.rel (%p566) target = $region96
    $region95: #{tracing_wrapper_forward.1} parent=5 // pred_region
      %s570 = ssub.s32 %s27, 1
      %p571 = scmp.lt.s32.totalorder %s32, 1
      %s572 = scalar_select %p571, %s32, 1
      %s573 = smul.addr %s572, 37
      %s574 = smul.addr %s573, 8
      %s575 = scalar_lea.vmem %s0, %s574
      %p576 = pneg %p53
      %p577 = pneg %p50
      %p578 = pneg %p74
      %p579 = pneg %p71
      %p580 = pneg %p95
      %p581 = pneg %p92
      %p582 = pneg %p116
      %p583 = pneg %p113
      %p584 = pneg %p137
      %p585 = pneg %p134
      %p586 = pneg %p158
      %p587 = pneg %p155
      %p588 = pneg %p179
      %p589 = pneg %p176
      %p590 = pneg %p200
      %p591 = pneg %p197
      %p592 = pneg %p221
      %p593 = pneg %p218
      %p594 = pneg %p242
      %p595 = pneg %p239
      %p596 = pneg %p263
      %p597 = pneg %p260
      %p598 = pneg %p284
      %p599 = pneg %p281
      %p600 = pneg %p305
      %p601 = pneg %p302
      %p602 = pneg %p326
      %p603 = pneg %p323
      %p604 = pneg %p347
      %p605 = pneg %p344
      %p606 = pneg %p368
      %p607 = pneg %p365
      %p608 = pneg %p389
      %p609 = pneg %p386
      %p610 = pneg %p410
      %p611 = pneg %p407
      %p612 = pneg %p431
      %p613 = pneg %p428
      %p614 = pneg %p457
      %p615 = pneg %p454
      %p616 = scmp.lt.s32.totalorder %s32, 1
      %s617 = scalar_select %p616, %s32, 1
      %s618 = smul.addr %s617, 9
      %s619 = smul.addr %s618, 8
      %s620 = scalar_lea.vmem %s19, %s619
      %p621 = pneg %p483
      %p622 = pneg %p480
      %p623 = scmp.lt.s32.totalorder %s32, 1
      %s624 = scalar_select %p623, %s32, 1
      %s625 = smul.addr %s624, 3
      %s626 = smul.addr %s625, 8
      %s627 = scalar_lea.vmem %s20, %s626
      %p628 = scmp.lt.s32.totalorder %s32, 1
      %s629 = scalar_select %p628, %s32, 1
      %s630 = smul.addr %s629, 37
      %s631 = smul.addr %s630, 8
      %s632 = scalar_lea.vmem %s0, %s631
      %p633 = scmp.lt.s32.totalorder %s32, 1
      %s634 = scalar_select %p633, %s32, 1
      %s635 = smul.addr %s634, 9
      %s636 = smul.addr %s635, 8
      %s637 = scalar_lea.vmem %s19, %s636
      %p638 = scmp.lt.s32.totalorder %s32, 1
      %s639 = scalar_select %p638, %s32, 1
      %s640 = smul.addr %s639, 3
      %s641 = smul.addr %s640, 8
      %s642 = scalar_lea.vmem %s20, %s641
      %v644 = vld [vmem:[%s632] sm:$0xff]
      %v645 = vld [vmem:[%s632 + $0x8] sm:$0xff]
      %v646 = vld [vmem:[%s632 + $0x10] sm:$0xff]
      %v647 = vld [vmem:[%s632 + $0x18] sm:$0xff]
      %v648 = vld [vmem:[%s632 + $0x20] sm:$0xff]
      %v649 = vld [vmem:[%s632 + $0x28] sm:$0xff]
      %v650 = vld [vmem:[%s632 + $0x30] sm:$0xff]
      %v651 = vld [vmem:[%s632 + $0x38] sm:$0xff]
      %v652 = vld [vmem:[%s632 + $0x40] sm:$0xff]
      %v653 = vld [vmem:[%s632 + $0x48] sm:$0xff]
      %v654 = vld [vmem:[%s632 + $0x50] sm:$0xff]
      %v655 = vld [vmem:[%s632 + $0x58] sm:$0xff]
      %v656 = vld [vmem:[%s632 + $0x60] sm:$0xff]
      %v657 = vld [vmem:[%s632 + $0x68] sm:$0xff]
      %v658 = vld [vmem:[%s632 + $0x70] sm:$0xff]
      %v659 = vld [vmem:[%s632 + $0x78] sm:$0xff]
      %v660 = vld [vmem:[%s632 + $0x80] sm:$0xff]
      %v661 = vld [vmem:[%s632 + $0x88] sm:$0xff]
      %v662 = vld [vmem:[%s632 + $0x90] sm:$0xff]
      %v663 = vld [vmem:[%s632 + $0x98] sm:$0xff]
      %v664 = vld [vmem:[%s632 + $0xa0] sm:$0xff]
      %v665 = vld [vmem:[%s632 + $0xa8] sm:$0xff]
      %v666 = vld [vmem:[%s632 + $0xb0] sm:$0xff]
      %v667 = vld [vmem:[%s632 + $0xb8] sm:$0xff]
      %v668 = vld [vmem:[%s632 + $0xc0] sm:$0xff]
      %v669 = vld [vmem:[%s632 + $0xc8] sm:$0xff]
      %v670 = vld [vmem:[%s632 + $0xd0] sm:$0xff]
      %v671 = vld [vmem:[%s632 + $0xd8] sm:$0xff]
      %v672 = vld [vmem:[%s632 + $0xe0] sm:$0xff]
      %v673 = vld [vmem:[%s632 + $0xe8] sm:$0xff]
      %v674 = vld [vmem:[%s632 + $0xf0] sm:$0xff]
      %v675 = vld [vmem:[%s632 + $0xf8] sm:$0xff]
      %v676 = vld [vmem:[%s632 + $0x100] sm:$0xff]
      %v677 = vld [vmem:[%s632 + $0x108] sm:$0xff]
      %v678 = vpack.c.bf16 %v645, %v644
      %v679 = vpack.c.bf16 %v647, %v646
      %v680 = vpack.c.bf16 %v649, %v648
      %v681 = vpack.c.bf16 %v651, %v650
      %v682 = vpack.c.bf16 %v653, %v652
      %v683 = vpack.c.bf16 %v655, %v654
      %v684 = vpack.c.bf16 %v657, %v656
      %v685 = vpack.c.bf16 %v659, %v658
      %v686 = vpack.c.bf16 %v661, %v660
      %v687 = vpack.c.bf16 %v663, %v662
      %v688 = vpack.c.bf16 %v665, %v664
      %v689 = vpack.c.bf16 %v667, %v666
      %v690 = vpack.c.bf16 %v669, %v668
      %v691 = vpack.c.bf16 %v671, %v670
      %v692 = vpack.c.bf16 %v673, %v672
      %v693 = vpack.c.bf16 %v675, %v674
      %v694 = vpack.c.bf16 %v677, %v676
      %v695 = vld [vmem:[%s1] sm:$0xf]
      %v696 = vld [vmem:[%s1 + $0x4] sm:$0x3]
      %v697 = vld [vmem:[%s632 + $0x1] sm:$0xff]
      %v698 = vld [vmem:[%s632 + $0x9] sm:$0xff]
      %v699 = vld [vmem:[%s632 + $0x11] sm:$0xff]
      %v700 = vld [vmem:[%s632 + $0x19] sm:$0xff]
      %v701 = vld [vmem:[%s632 + $0x21] sm:$0xff]
      %v702 = vld [vmem:[%s632 + $0x29] sm:$0xff]
      %v703 = vld [vmem:[%s632 + $0x31] sm:$0xff]
      %v704 = vld [vmem:[%s632 + $0x39] sm:$0xff]
      %v705 = vld [vmem:[%s632 + $0x41] sm:$0xff]
      %v706 = vld [vmem:[%s632 + $0x49] sm:$0xff]
      %v707 = vld [vmem:[%s632 + $0x51] sm:$0xff]
      %v708 = vld [vmem:[%s632 + $0x59] sm:$0xff]
      %v709 = vld [vmem:[%s632 + $0x61] sm:$0xff]
      %v710 = vld [vmem:[%s632 + $0x69] sm:$0xff]
      %v711 = vld [vmem:[%s632 + $0x71] sm:$0xff]
      %v712 = vld [vmem:[%s632 + $0x79] sm:$0xff]
      %v713 = vld [vmem:[%s632 + $0x81] sm:$0xff]
      %v714 = vld [vmem:[%s632 + $0x89] sm:$0xff]
      %v715 = vld [vmem:[%s632 + $0x91] sm:$0xff]
      %v716 = vld [vmem:[%s632 + $0x99] sm:$0xff]
      %v717 = vld [vmem:[%s632 + $0xa1] sm:$0xff]
      %v718 = vld [vmem:[%s632 + $0xa9] sm:$0xff]
      %v719 = vld [vmem:[%s632 + $0xb1] sm:$0xff]
      %v720 = vld [vmem:[%s632 + $0xb9] sm:$0xff]
      %v721 = vld [vmem:[%s632 + $0xc1] sm:$0xff]
      %v722 = vld [vmem:[%s632 + $0xc9] sm:$0xff]
      %v723 = vld [vmem:[%s632 + $0xd1] sm:$0xff]
      %v724 = vld [vmem:[%s632 + $0xd9] sm:$0xff]
      %v725 = vld [vmem:[%s632 + $0xe1] sm:$0xff]
      %v726 = vld [vmem:[%s632 + $0xe9] sm:$0xff]
      %v727 = vld [vmem:[%s632 + $0xf1] sm:$0xff]
      %v728 = vld [vmem:[%s632 + $0xf9] sm:$0xff]
      %v729 = vld [vmem:[%s632 + $0x101] sm:$0xff]
      %v730 = vld [vmem:[%s632 + $0x109] sm:$0xff]
      %v731 = vpack.c.bf16 %v698, %v697
      %v732 = vpack.c.bf16 %v700, %v699
      %v733 = vpack.c.bf16 %v702, %v701
      %v734 = vpack.c.bf16 %v704, %v703
      %v735 = vpack.c.bf16 %v706, %v705
      %v736 = vpack.c.bf16 %v708, %v707
      %v737 = vpack.c.bf16 %v710, %v709
      %v738 = vpack.c.bf16 %v712, %v711
      %v739 = vpack.c.bf16 %v714, %v713
      %v740 = vpack.c.bf16 %v716, %v715
      %v741 = vpack.c.bf16 %v718, %v717
      %v742 = vpack.c.bf16 %v720, %v719
      %v743 = vpack.c.bf16 %v722, %v721
      %v744 = vpack.c.bf16 %v724, %v723
      %v745 = vpack.c.bf16 %v726, %v725
      %v746 = vpack.c.bf16 %v728, %v727
      %v747 = vpack.c.bf16 %v730, %v729
      %s748 = scalar_lea.vmem %s1, 8
      %v749 = vld [vmem:[%s748] sm:$0xf]
      %v750 = vld [vmem:[%s748 + $0x4] sm:$0x3]
      %v753 = vunpack.c.l.b16 %v749
      %v754 = vunpack.c.l.b16 %v750
      %v755 = vpack.c.b16 %v754, %v753
      %vm756 = vcmask 97280
      %v758 = vsel %vm756, %v731, 0
      %v761 = vsel %vm756, %v732, 0
      %v764 = vsel %vm756, %v733, 0
      %v767 = vsel %vm756, %v734, 0
      %v770 = vsel %vm756, %v735, 0
      %v773 = vsel %vm756, %v736, 0
      %v776 = vsel %vm756, %v737, 0
      %v779 = vsel %vm756, %v738, 0
      %v782 = vsel %vm756, %v739, 0
      %v785 = vsel %vm756, %v740, 0
      %v788 = vsel %vm756, %v741, 0
      %v791 = vsel %vm756, %v742, 0
      %v794 = vsel %vm756, %v743, 0
      %v797 = vsel %vm756, %v744, 0
      %v800 = vsel %vm756, %v745, 0
      %v803 = vsel %vm756, %v746, 0
      %v806 = vsel %vm756, %v747, 0
      %vm808 = vcmask 1045504
      %v810 = vsel %vm808, %v755, 0
      %812 = vmatpush.bf16.msra.mxu0 0
      %813 = vmatpush.bf16.msra.mxu0 0
      %814 = vmatpush.bf16.msra.mxu0 0
      %815 = vmatpush.bf16.msra.mxu0 0
      %816 = vmatpush.bf16.msra.mxu0 0
      %817 = vmatpush.bf16.msra.mxu0 0
      %818 = vmatpush.bf16.msra.mxu0 0
      %819 = vmatpush.bf16.msra.mxu0 %v810
      %820 = vmatmul.bf16.gmra.mxu0 %v758
      %v821 = vpop.f32.mrf.mxu0
      %v822 = vadd.f32 0.0, %v821
      %v823 = vpop.f32.mrf.mxu0
      %v824 = vadd.f32 0.0, %v823
      %825 = vmatmul.bf16.gmra.mxu0 %v761
      %v826 = vpop.f32.mrf.mxu0
      %v827 = vadd.f32 0.0, %v826
      %v828 = vpop.f32.mrf.mxu0
      %v829 = vadd.f32 0.0, %v828
      %830 = vmatmul.bf16.gmra.mxu0 %v764
      %v831 = vpop.f32.mrf.mxu0
      %v832 = vadd.f32 0.0, %v831
      %v833 = vpop.f32.mrf.mxu0
      %v834 = vadd.f32 0.0, %v833
      %835 = vmatmul.bf16.gmra.mxu0 %v767
      %v836 = vpop.f32.mrf.mxu0
      %v837 = vadd.f32 0.0, %v836
      %v838 = vpop.f32.mrf.mxu0
      %v839 = vadd.f32 0.0, %v838
      %840 = vmatmul.bf16.gmra.mxu0 %v770
      %v841 = vpop.f32.mrf.mxu0
      %v842 = vadd.f32 0.0, %v841
      %v843 = vpop.f32.mrf.mxu0
      %v844 = vadd.f32 0.0, %v843
      %845 = vmatmul.bf16.gmra.mxu0 %v773
      %v846 = vpop.f32.mrf.mxu0
      %v847 = vadd.f32 0.0, %v846
      %v848 = vpop.f32.mrf.mxu0
      %v849 = vadd.f32 0.0, %v848
      %850 = vmatmul.bf16.gmra.mxu0 %v776
      %v851 = vpop.f32.mrf.mxu0
      %v852 = vadd.f32 0.0, %v851
      %v853 = vpop.f32.mrf.mxu0
      %v854 = vadd.f32 0.0, %v853
      %855 = vmatmul.bf16.gmra.mxu0 %v779
      %v856 = vpop.f32.mrf.mxu0
      %v857 = vadd.f32 0.0, %v856
      %v858 = vpop.f32.mrf.mxu0
      %v859 = vadd.f32 0.0, %v858
      %860 = vmatmul.bf16.gmra.mxu0 %v782
      %v861 = vpop.f32.mrf.mxu0
      %v862 = vadd.f32 0.0, %v861
      %v863 = vpop.f32.mrf.mxu0
      %v864 = vadd.f32 0.0, %v863
      %865 = vmatmul.bf16.gmra.mxu0 %v785
      %v866 = vpop.f32.mrf.mxu0
      %v867 = vadd.f32 0.0, %v866
      %v868 = vpop.f32.mrf.mxu0
      %v869 = vadd.f32 0.0, %v868
      %870 = vmatmul.bf16.gmra.mxu0 %v788
      %v871 = vpop.f32.mrf.mxu0
      %v872 = vadd.f32 0.0, %v871
      %v873 = vpop.f32.mrf.mxu0
      %v874 = vadd.f32 0.0, %v873
      %875 = vmatmul.bf16.gmra.mxu0 %v791
      %v876 = vpop.f32.mrf.mxu0
      %v877 = vadd.f32 0.0, %v876
      %v878 = vpop.f32.mrf.mxu0
      %v879 = vadd.f32 0.0, %v878
      %880 = vmatmul.bf16.gmra.mxu0 %v794
      %v881 = vpop.f32.mrf.mxu0
      %v882 = vadd.f32 0.0, %v881
      %v883 = vpop.f32.mrf.mxu0
      %v884 = vadd.f32 0.0, %v883
      %885 = vmatmul.bf16.gmra.mxu0 %v797
      %v886 = vpop.f32.mrf.mxu0
      %v887 = vadd.f32 0.0, %v886
      %v888 = vpop.f32.mrf.mxu0
      %v889 = vadd.f32 0.0, %v888
      %890 = vmatmul.bf16.gmra.mxu0 %v800
      %v891 = vpop.f32.mrf.mxu0
      %v892 = vadd.f32 0.0, %v891
      %v893 = vpop.f32.mrf.mxu0
      %v894 = vadd.f32 0.0, %v893
      %895 = vmatmul.bf16.gmra.mxu0 %v803
      %v896 = vpop.f32.mrf.mxu0
      %v897 = vadd.f32 0.0, %v896
      %v898 = vpop.f32.mrf.mxu0
      %v899 = vadd.f32 0.0, %v898
      %900 = vmatmul.bf16.gmra.mxu0 %v806
      %v901 = vpop.f32.mrf.mxu0
      %v902 = vadd.f32 0.0, %v901
      %v903 = vpop.f32.mrf.mxu0
      %v904 = vadd.f32 0.0, %v903
      %905 = vdwg.mxu0
      %v906 = vld [vmem:[%s632 + $0x11] sm:$0xff]
      %v907 = vld [vmem:[%s632 + $0x19] sm:$0xff]
      %v908 = vld [vmem:[%s632 + $0x21] sm:$0xff]
      %v909 = vld [vmem:[%s632 + $0x29] sm:$0xff]
      %v910 = vld [vmem:[%s632 + $0x31] sm:$0xff]
      %v911 = vld [vmem:[%s632 + $0x39] sm:$0xff]
      %v912 = vld [vmem:[%s632 + $0x41] sm:$0xff]
      %v913 = vld [vmem:[%s632 + $0x49] sm:$0xff]
      %v914 = vld [vmem:[%s632 + $0x51] sm:$0xff]
      %v915 = vld [vmem:[%s632 + $0x59] sm:$0xff]
      %v916 = vld [vmem:[%s632 + $0x61] sm:$0xff]
      %v917 = vld [vmem:[%s632 + $0x69] sm:$0xff]
      %v918 = vld [vmem:[%s632 + $0x71] sm:$0xff]
      %v919 = vld [vmem:[%s632 + $0x79] sm:$0xff]
      %v920 = vld [vmem:[%s632 + $0x81] sm:$0xff]
      %v921 = vld [vmem:[%s632 + $0x89] sm:$0xff]
      %v922 = vld [vmem:[%s632 + $0x91] sm:$0xff]
      %v923 = vld [vmem:[%s632 + $0x99] sm:$0xff]
      %v924 = vld [vmem:[%s632 + $0xa1] sm:$0xff]
      %v925 = vld [vmem:[%s632 + $0xa9] sm:$0xff]
      %v926 = vld [vmem:[%s632 + $0xb1] sm:$0xff]
      %v927 = vld [vmem:[%s632 + $0xb9] sm:$0xff]
      %v928 = vld [vmem:[%s632 + $0xc1] sm:$0xff]
      %v929 = vld [vmem:[%s632 + $0xc9] sm:$0xff]
      %v930 = vld [vmem:[%s632 + $0xd1] sm:$0xff]
      %v931 = vld [vmem:[%s632 + $0xd9] sm:$0xff]
      %v932 = vld [vmem:[%s632 + $0xe1] sm:$0xff]
      %v933 = vld [vmem:[%s632 + $0xe9] sm:$0xff]
      %v934 = vld [vmem:[%s632 + $0xf1] sm:$0xff]
      %v935 = vld [vmem:[%s632 + $0xf9] sm:$0xff]
      %v936 = vld [vmem:[%s632 + $0x101] sm:$0xff]
      %v937 = vld [vmem:[%s632 + $0x109] sm:$0xff]
      %v938 = vld [vmem:[%s632 + $0x111] sm:$0xff]
      %v939 = vld [vmem:[%s632 + $0x119] sm:$0xff]
      %v940 = vpack.c.bf16 %v907, %v906
      %v941 = vpack.c.bf16 %v909, %v908
      %v942 = vpack.c.bf16 %v911, %v910
      %v943 = vpack.c.bf16 %v913, %v912
      %v944 = vpack.c.bf16 %v915, %v914
      %v945 = vpack.c.bf16 %v917, %v916
      %v946 = vpack.c.bf16 %v919, %v918
      %v947 = vpack.c.bf16 %v921, %v920
      %v948 = vpack.c.bf16 %v923, %v922
      %v949 = vpack.c.bf16 %v925, %v924
      %v950 = vpack.c.bf16 %v927, %v926
      %v951 = vpack.c.bf16 %v929, %v928
      %v952 = vpack.c.bf16 %v931, %v930
      %v953 = vpack.c.bf16 %v933, %v932
      %v954 = vpack.c.bf16 %v935, %v934
      %v955 = vpack.c.bf16 %v937, %v936
      %v956 = vpack.c.bf16 %v939, %v938
      %s957 = scalar_lea.vmem %s1, 16
      %v958 = vld [vmem:[%s957] sm:$0xf]
      %v959 = vld [vmem:[%s957 + $0x4] sm:$0x3]
      %v962 = vunpack.c.l.b16 %v958
      %v963 = vunpack.c.l.b16 %v959
      %v964 = vpack.c.b16 %v963, %v962
      %v966 = vsel %vm756, %v940, 0
      %v969 = vsel %vm756, %v941, 0
      %v972 = vsel %vm756, %v942, 0
      %v975 = vsel %vm756, %v943, 0
      %v978 = vsel %vm756, %v944, 0
      %v981 = vsel %vm756, %v945, 0
      %v984 = vsel %vm756, %v946, 0
      %v987 = vsel %vm756, %v947, 0
      %v990 = vsel %vm756, %v948, 0
      %v993 = vsel %vm756, %v949, 0
      %v996 = vsel %vm756, %v950, 0
      %v999 = vsel %vm756, %v951, 0
      %v1002 = vsel %vm756, %v952, 0
      %v1005 = vsel %vm756, %v953, 0
      %v1008 = vsel %vm756, %v954, 0
      %v1011 = vsel %vm756, %v955, 0
      %v1014 = vsel %vm756, %v956, 0
      %v1017 = vsel %vm808, %v964, 0
      %1019 = vmatpush.bf16.msra.mxu0 0
      %1020 = vmatpush.bf16.msra.mxu0 0
      %1021 = vmatpush.bf16.msra.mxu0 0
      %1022 = vmatpush.bf16.msra.mxu0 0
      %1023 = vmatpush.bf16.msra.mxu0 0
      %1024 = vmatpush.bf16.msra.mxu0 0
      %1025 = vmatpush.bf16.msra.mxu0 0
      %1026 = vmatpush.bf16.msra.mxu0 %v1017
      %1027 = vmatmul.bf16.gmra.mxu0 %v966
      %v1028 = vpop.f32.mrf.mxu0
      %v1029 = vadd.f32 0.0, %v1028
      %v1030 = vpop.f32.mrf.mxu0
      %v1031 = vadd.f32 0.0, %v1030
      %1032 = vmatmul.bf16.gmra.mxu0 %v969
      %v1033 = vpop.f32.mrf.mxu0
      %v1034 = vadd.f32 0.0, %v1033
      %v1035 = vpop.f32.mrf.mxu0
      %v1036 = vadd.f32 0.0, %v1035
      %1037 = vmatmul.bf16.gmra.mxu0 %v972
      %v1038 = vpop.f32.mrf.mxu0
      %v1039 = vadd.f32 0.0, %v1038
      %v1040 = vpop.f32.mrf.mxu0
      %v1041 = vadd.f32 0.0, %v1040
      %1042 = vmatmul.bf16.gmra.mxu0 %v975
      %v1043 = vpop.f32.mrf.mxu0
      %v1044 = vadd.f32 0.0, %v1043
      %v1045 = vpop.f32.mrf.mxu0
      %v1046 = vadd.f32 0.0, %v1045
      %1047 = vmatmul.bf16.gmra.mxu0 %v978
      %v1048 = vpop.f32.mrf.mxu0
      %v1049 = vadd.f32 0.0, %v1048
      %v1050 = vpop.f32.mrf.mxu0
      %v1051 = vadd.f32 0.0, %v1050
      %1052 = vmatmul.bf16.gmra.mxu0 %v981
      %v1053 = vpop.f32.mrf.mxu0
      %v1054 = vadd.f32 0.0, %v1053
      %v1055 = vpop.f32.mrf.mxu0
      %v1056 = vadd.f32 0.0, %v1055
      %1057 = vmatmul.bf16.gmra.mxu0 %v984
      %v1058 = vpop.f32.mrf.mxu0
      %v1059 = vadd.f32 0.0, %v1058
      %v1060 = vpop.f32.mrf.mxu0
      %v1061 = vadd.f32 0.0, %v1060
      %1062 = vmatmul.bf16.gmra.mxu0 %v987
      %v1063 = vpop.f32.mrf.mxu0
      %v1064 = vadd.f32 0.0, %v1063
      %v1065 = vpop.f32.mrf.mxu0
      %v1066 = vadd.f32 0.0, %v1065
      %1067 = vmatmul.bf16.gmra.mxu0 %v990
      %v1068 = vpop.f32.mrf.mxu0
      %v1069 = vadd.f32 0.0, %v1068
      %v1070 = vpop.f32.mrf.mxu0
      %v1071 = vadd.f32 0.0, %v1070
      %1072 = vmatmul.bf16.gmra.mxu0 %v993
      %v1073 = vpop.f32.mrf.mxu0
      %v1074 = vadd.f32 0.0, %v1073
      %v1075 = vpop.f32.mrf.mxu0
      %v1076 = vadd.f32 0.0, %v1075
      %1077 = vmatmul.bf16.gmra.mxu0 %v996
      %v1078 = vpop.f32.mrf.mxu0
      %v1079 = vadd.f32 0.0, %v1078
      %v1080 = vpop.f32.mrf.mxu0
      %v1081 = vadd.f32 0.0, %v1080
      %1082 = vmatmul.bf16.gmra.mxu0 %v999
      %v1083 = vpop.f32.mrf.mxu0
      %v1084 = vadd.f32 0.0, %v1083
      %v1085 = vpop.f32.mrf.mxu0
      %v1086 = vadd.f32 0.0, %v1085
      %1087 = vmatmul.bf16.gmra.mxu0 %v1002
      %v1088 = vpop.f32.mrf.mxu0
      %v1089 = vadd.f32 0.0, %v1088
      %v1090 = vpop.f32.mrf.mxu0
      %v1091 = vadd.f32 0.0, %v1090
      %1092 = vmatmul.bf16.gmra.mxu0 %v1005
      %v1093 = vpop.f32.mrf.mxu0
      %v1094 = vadd.f32 0.0, %v1093
      %v1095 = vpop.f32.mrf.mxu0
      %v1096 = vadd.f32 0.0, %v1095
      %1097 = vmatmul.bf16.gmra.mxu0 %v1008
      %v1098 = vpop.f32.mrf.mxu0
      %v1099 = vadd.f32 0.0, %v1098
      %v1100 = vpop.f32.mrf.mxu0
      %v1101 = vadd.f32 0.0, %v1100
      %1102 = vmatmul.bf16.gmra.mxu0 %v1011
      %v1103 = vpop.f32.mrf.mxu0
      %v1104 = vadd.f32 0.0, %v1103
      %v1105 = vpop.f32.mrf.mxu0
      %v1106 = vadd.f32 0.0, %v1105
      %1107 = vmatmul.bf16.gmra.mxu0 %v1014
      %v1108 = vpop.f32.mrf.mxu0
      %v1109 = vadd.f32 0.0, %v1108
      %v1110 = vpop.f32.mrf.mxu0
      %v1111 = vadd.f32 0.0, %v1110
      %1112 = vdwg.mxu0
      %v1113 = vld [vmem:[%s632 + $0x12] sm:$0xff]
      %v1114 = vld [vmem:[%s632 + $0x1a] sm:$0xff]
      %v1115 = vld [vmem:[%s632 + $0x22] sm:$0xff]
      %v1116 = vld [vmem:[%s632 + $0x2a] sm:$0xff]
      %v1117 = vld [vmem:[%s632 + $0x32] sm:$0xff]
      %v1118 = vld [vmem:[%s632 + $0x3a] sm:$0xff]
      %v1119 = vld [vmem:[%s632 + $0x42] sm:$0xff]
      %v1120 = vld [vmem:[%s632 + $0x4a] sm:$0xff]
      %v1121 = vld [vmem:[%s632 + $0x52] sm:$0xff]
      %v1122 = vld [vmem:[%s632 + $0x5a] sm:$0xff]
      %v1123 = vld [vmem:[%s632 + $0x62] sm:$0xff]
      %v1124 = vld [vmem:[%s632 + $0x6a] sm:$0xff]
      %v1125 = vld [vmem:[%s632 + $0x72] sm:$0xff]
      %v1126 = vld [vmem:[%s632 + $0x7a] sm:$0xff]
      %v1127 = vld [vmem:[%s632 + $0x82] sm:$0xff]
      %v1128 = vld [vmem:[%s632 + $0x8a] sm:$0xff]
      %v1129 = vld [vmem:[%s632 + $0x92] sm:$0xff]
      %v1130 = vld [vmem:[%s632 + $0x9a] sm:$0xff]
      %v1131 = vld [vmem:[%s632 + $0xa2] sm:$0xff]
      %v1132 = vld [vmem:[%s632 + $0xaa] sm:$0xff]
      %v1133 = vld [vmem:[%s632 + $0xb2] sm:$0xff]
      %v1134 = vld [vmem:[%s632 + $0xba] sm:$0xff]
      %v1135 = vld [vmem:[%s632 + $0xc2] sm:$0xff]
      %v1136 = vld [vmem:[%s632 + $0xca] sm:$0xff]
      %v1137 = vld [vmem:[%s632 + $0xd2] sm:$0xff]
      %v1138 = vld [vmem:[%s632 + $0xda] sm:$0xff]
      %v1139 = vld [vmem:[%s632 + $0xe2] sm:$0xff]
      %v1140 = vld [vmem:[%s632 + $0xea] sm:$0xff]
      %v1141 = vld [vmem:[%s632 + $0xf2] sm:$0xff]
      %v1142 = vld [vmem:[%s632 + $0xfa] sm:$0xff]
      %v1143 = vld [vmem:[%s632 + $0x102] sm:$0xff]
      %v1144 = vld [vmem:[%s632 + $0x10a] sm:$0xff]
      %v1145 = vld [vmem:[%s632 + $0x112] sm:$0xff]
      %v1146 = vld [vmem:[%s632 + $0x11a] sm:$0xff]
      %v1147 = vpack.c.bf16 %v1114, %v1113
      %v1148 = vpack.c.bf16 %v1116, %v1115
      %v1149 = vpack.c.bf16 %v1118, %v1117
      %v1150 = vpack.c.bf16 %v1120, %v1119
      %v1151 = vpack.c.bf16 %v1122, %v1121
      %v1152 = vpack.c.bf16 %v1124, %v1123
      %v1153 = vpack.c.bf16 %v1126, %v1125
      %v1154 = vpack.c.bf16 %v1128, %v1127
      %v1155 = vpack.c.bf16 %v1130, %v1129
      %v1156 = vpack.c.bf16 %v1132, %v1131
      %v1157 = vpack.c.bf16 %v1134, %v1133
      %v1158 = vpack.c.bf16 %v1136, %v1135
      %v1159 = vpack.c.bf16 %v1138, %v1137
      %v1160 = vpack.c.bf16 %v1140, %v1139
      %v1161 = vpack.c.bf16 %v1142, %v1141
      %v1162 = vpack.c.bf16 %v1144, %v1143
      %v1163 = vpack.c.bf16 %v1146, %v1145
      %s1164 = scalar_lea.vmem %s1, 24
      %v1165 = vld [vmem:[%s1164] sm:$0xf]
      %v1166 = vld [vmem:[%s1164 + $0x4] sm:$0x3]
      %v1169 = vunpack.c.l.b16 %v1165
      %v1170 = vunpack.c.l.b16 %v1166
      %v1171 = vpack.c.b16 %v1170, %v1169
      %v1173 = vsel %vm756, %v1147, 0
      %v1176 = vsel %vm756, %v1148, 0
      %v1179 = vsel %vm756, %v1149, 0
      %v1182 = vsel %vm756, %v1150, 0
      %v1185 = vsel %vm756, %v1151, 0
      %v1188 = vsel %vm756, %v1152, 0
      %v1191 = vsel %vm756, %v1153, 0
      %v1194 = vsel %vm756, %v1154, 0
      %v1197 = vsel %vm756, %v1155, 0
      %v1200 = vsel %vm756, %v1156, 0
      %v1203 = vsel %vm756, %v1157, 0
      %v1206 = vsel %vm756, %v1158, 0
      %v1209 = vsel %vm756, %v1159, 0
      %v1212 = vsel %vm756, %v1160, 0
      %v1215 = vsel %vm756, %v1161, 0
      %v1218 = vsel %vm756, %v1162, 0
      %v1221 = vsel %vm756, %v1163, 0
      %v1224 = vsel %vm808, %v1171, 0
      %1226 = vmatpush.bf16.msra.mxu0 0
      %1227 = vmatpush.bf16.msra.mxu0 0
      %1228 = vmatpush.bf16.msra.mxu0 0
      %1229 = vmatpush.bf16.msra.mxu0 0
      %1230 = vmatpush.bf16.msra.mxu0 0
      %1231 = vmatpush.bf16.msra.mxu0 0
      %1232 = vmatpush.bf16.msra.mxu0 0
      %1233 = vmatpush.bf16.msra.mxu0 %v1224
      %1234 = vmatmul.bf16.gmra.mxu0 %v1173
      %v1235 = vpop.f32.mrf.mxu0
      %v1236 = vadd.f32 0.0, %v1235
      %v1237 = vpop.f32.mrf.mxu0
      %v1238 = vadd.f32 0.0, %v1237
      %1239 = vmatmul.bf16.gmra.mxu0 %v1176
      %v1240 = vpop.f32.mrf.mxu0
      %v1241 = vadd.f32 0.0, %v1240
      %v1242 = vpop.f32.mrf.mxu0
      %v1243 = vadd.f32 0.0, %v1242
      %1244 = vmatmul.bf16.gmra.mxu0 %v1179
      %v1245 = vpop.f32.mrf.mxu0
      %v1246 = vadd.f32 0.0, %v1245
      %v1247 = vpop.f32.mrf.mxu0
      %v1248 = vadd.f32 0.0, %v1247
      %1249 = vmatmul.bf16.gmra.mxu0 %v1182
      %v1250 = vpop.f32.mrf.mxu0
      %v1251 = vadd.f32 0.0, %v1250
      %v1252 = vpop.f32.mrf.mxu0
      %v1253 = vadd.f32 0.0, %v1252
      %1254 = vmatmul.bf16.gmra.mxu0 %v1185
      %v1255 = vpop.f32.mrf.mxu0
      %v1256 = vadd.f32 0.0, %v1255
      %v1257 = vpop.f32.mrf.mxu0
      %v1258 = vadd.f32 0.0, %v1257
      %1259 = vmatmul.bf16.gmra.mxu0 %v1188
      %v1260 = vpop.f32.mrf.mxu0
      %v1261 = vadd.f32 0.0, %v1260
      %v1262 = vpop.f32.mrf.mxu0
      %v1263 = vadd.f32 0.0, %v1262
      %1264 = vmatmul.bf16.gmra.mxu0 %v1191
      %v1265 = vpop.f32.mrf.mxu0
      %v1266 = vadd.f32 0.0, %v1265
      %v1267 = vpop.f32.mrf.mxu0
      %v1268 = vadd.f32 0.0, %v1267
      %1269 = vmatmul.bf16.gmra.mxu0 %v1194
      %v1270 = vpop.f32.mrf.mxu0
      %v1271 = vadd.f32 0.0, %v1270
      %v1272 = vpop.f32.mrf.mxu0
      %v1273 = vadd.f32 0.0, %v1272
      %1274 = vmatmul.bf16.gmra.mxu0 %v1197
      %v1275 = vpop.f32.mrf.mxu0
      %v1276 = vadd.f32 0.0, %v1275
      %v1277 = vpop.f32.mrf.mxu0
      %v1278 = vadd.f32 0.0, %v1277
      %1279 = vmatmul.bf16.gmra.mxu0 %v1200
      %v1280 = vpop.f32.mrf.mxu0
      %v1281 = vadd.f32 0.0, %v1280
      %v1282 = vpop.f32.mrf.mxu0
      %v1283 = vadd.f32 0.0, %v1282
      %1284 = vmatmul.bf16.gmra.mxu0 %v1203
      %v1285 = vpop.f32.mrf.mxu0
      %v1286 = vadd.f32 0.0, %v1285
      %v1287 = vpop.f32.mrf.mxu0
      %v1288 = vadd.f32 0.0, %v1287
      %1289 = vmatmul.bf16.gmra.mxu0 %v1206
      %v1290 = vpop.f32.mrf.mxu0
      %v1291 = vadd.f32 0.0, %v1290
      %v1292 = vpop.f32.mrf.mxu0
      %v1293 = vadd.f32 0.0, %v1292
      %1294 = vmatmul.bf16.gmra.mxu0 %v1209
      %v1295 = vpop.f32.mrf.mxu0
      %v1296 = vadd.f32 0.0, %v1295
      %v1297 = vpop.f32.mrf.mxu0
      %v1298 = vadd.f32 0.0, %v1297
      %1299 = vmatmul.bf16.gmra.mxu0 %v1212
      %v1300 = vpop.f32.mrf.mxu0
      %v1301 = vadd.f32 0.0, %v1300
      %v1302 = vpop.f32.mrf.mxu0
      %v1303 = vadd.f32 0.0, %v1302
      %1304 = vmatmul.bf16.gmra.mxu0 %v1215
      %v1305 = vpop.f32.mrf.mxu0
      %v1306 = vadd.f32 0.0, %v1305
      %v1307 = vpop.f32.mrf.mxu0
      %v1308 = vadd.f32 0.0, %v1307
      %1309 = vmatmul.bf16.gmra.mxu0 %v1218
      %v1310 = vpop.f32.mrf.mxu0
      %v1311 = vadd.f32 0.0, %v1310
      %v1312 = vpop.f32.mrf.mxu0
      %v1313 = vadd.f32 0.0, %v1312
      %1314 = vmatmul.bf16.gmra.mxu0 %v1221
      %v1315 = vpop.f32.mrf.mxu0
      %v1316 = vadd.f32 0.0, %v1315
      %v1317 = vpop.f32.mrf.mxu0
      %v1318 = vadd.f32 0.0, %v1317
      %1319 = vdwg.mxu0
      %v1322 = vunpack.c.l.b16 %v695
      %v1323 = vunpack.c.l.b16 %v696
      %v1324 = vpack.c.b16 %v1323, %v1322
      %v1326 = vsel %vm756, %v678, 0
      %v1329 = vsel %vm756, %v679, 0
      %v1332 = vsel %vm756, %v680, 0
      %v1335 = vsel %vm756, %v681, 0
      %v1338 = vsel %vm756, %v682, 0
      %v1341 = vsel %vm756, %v683, 0
      %v1344 = vsel %vm756, %v684, 0
      %v1347 = vsel %vm756, %v685, 0
      %v1350 = vsel %vm756, %v686, 0
      %v1353 = vsel %vm756, %v687, 0
      %v1356 = vsel %vm756, %v688, 0
      %v1359 = vsel %vm756, %v689, 0
      %v1362 = vsel %vm756, %v690, 0
      %v1365 = vsel %vm756, %v691, 0
      %v1368 = vsel %vm756, %v692, 0
      %v1371 = vsel %vm756, %v693, 0
      %v1374 = vsel %vm756, %v694, 0
      %v1377 = vsel %vm808, %v1324, 0
      %1379 = vmatpush.bf16.msra.mxu0 0
      %1380 = vmatpush.bf16.msra.mxu0 0
      %1381 = vmatpush.bf16.msra.mxu0 0
      %1382 = vmatpush.bf16.msra.mxu0 0
      %1383 = vmatpush.bf16.msra.mxu0 0
      %1384 = vmatpush.bf16.msra.mxu0 0
      %1385 = vmatpush.bf16.msra.mxu0 0
      %1386 = vmatpush.bf16.msra.mxu0 %v1377
      %1387 = vmatmul.bf16.gmra.mxu0 %v1326
      %v1388 = vpop.f32.mrf.mxu0
      %v1389 = vadd.f32 %v822, %v1388
      %v1390 = vpop.f32.mrf.mxu0
      %v1391 = vadd.f32 %v824, %v1390
      %1392 = vmatmul.bf16.gmra.mxu0 %v1329
      %v1393 = vpop.f32.mrf.mxu0
      %v1394 = vadd.f32 %v827, %v1393
      %v1395 = vpop.f32.mrf.mxu0
      %v1396 = vadd.f32 %v829, %v1395
      %1397 = vmatmul.bf16.gmra.mxu0 %v1332
      %v1398 = vpop.f32.mrf.mxu0
      %v1399 = vadd.f32 %v832, %v1398
      %v1400 = vpop.f32.mrf.mxu0
      %v1401 = vadd.f32 %v834, %v1400
      %1402 = vmatmul.bf16.gmra.mxu0 %v1335
      %v1403 = vpop.f32.mrf.mxu0
      %v1404 = vadd.f32 %v837, %v1403
      %v1405 = vpop.f32.mrf.mxu0
      %v1406 = vadd.f32 %v839, %v1405
      %1407 = vmatmul.bf16.gmra.mxu0 %v1338
      %v1408 = vpop.f32.mrf.mxu0
      %v1409 = vadd.f32 %v842, %v1408
      %v1410 = vpop.f32.mrf.mxu0
      %v1411 = vadd.f32 %v844, %v1410
      %1412 = vmatmul.bf16.gmra.mxu0 %v1341
      %v1413 = vpop.f32.mrf.mxu0
      %v1414 = vadd.f32 %v847, %v1413
      %v1415 = vpop.f32.mrf.mxu0
      %v1416 = vadd.f32 %v849, %v1415
      %1417 = vmatmul.bf16.gmra.mxu0 %v1344
      %v1418 = vpop.f32.mrf.mxu0
      %v1419 = vadd.f32 %v852, %v1418
      %v1420 = vpop.f32.mrf.mxu0
      %v1421 = vadd.f32 %v854, %v1420
      %1422 = vmatmul.bf16.gmra.mxu0 %v1347
      %v1423 = vpop.f32.mrf.mxu0
      %v1424 = vadd.f32 %v857, %v1423
      %v1425 = vpop.f32.mrf.mxu0
      %v1426 = vadd.f32 %v859, %v1425
      %1427 = vmatmul.bf16.gmra.mxu0 %v1350
      %v1428 = vpop.f32.mrf.mxu0
      %v1429 = vadd.f32 %v862, %v1428
      %v1430 = vpop.f32.mrf.mxu0
      %v1431 = vadd.f32 %v864, %v1430
      %1432 = vmatmul.bf16.gmra.mxu0 %v1353
      %v1433 = vpop.f32.mrf.mxu0
      %v1434 = vadd.f32 %v867, %v1433
      %v1435 = vpop.f32.mrf.mxu0
      %v1436 = vadd.f32 %v869, %v1435
      %1437 = vmatmul.bf16.gmra.mxu0 %v1356
      %v1438 = vpop.f32.mrf.mxu0
      %v1439 = vadd.f32 %v872, %v1438
      %v1440 = vpop.f32.mrf.mxu0
      %v1441 = vadd.f32 %v874, %v1440
      %1442 = vmatmul.bf16.gmra.mxu0 %v1359
      %v1443 = vpop.f32.mrf.mxu0
      %v1444 = vadd.f32 %v877, %v1443
      %v1445 = vpop.f32.mrf.mxu0
      %v1446 = vadd.f32 %v879, %v1445
      %1447 = vmatmul.bf16.gmra.mxu0 %v1362
      %v1448 = vpop.f32.mrf.mxu0
      %v1449 = vadd.f32 %v882, %v1448
      %v1450 = vpop.f32.mrf.mxu0
      %v1451 = vadd.f32 %v884, %v1450
      %1452 = vmatmul.bf16.gmra.mxu0 %v1365
      %v1453 = vpop.f32.mrf.mxu0
      %v1454 = vadd.f32 %v887, %v1453
      %v1455 = vpop.f32.mrf.mxu0
      %v1456 = vadd.f32 %v889, %v1455
      %1457 = vmatmul.bf16.gmra.mxu0 %v1368
      %v1458 = vpop.f32.mrf.mxu0
      %v1459 = vadd.f32 %v892, %v1458
      %v1460 = vpop.f32.mrf.mxu0
      %v1461 = vadd.f32 %v894, %v1460
      %1462 = vmatmul.bf16.gmra.mxu0 %v1371
      %v1463 = vpop.f32.mrf.mxu0
      %v1464 = vadd.f32 %v897, %v1463
      %v1465 = vpop.f32.mrf.mxu0
      %v1466 = vadd.f32 %v899, %v1465
      %1467 = vmatmul.bf16.gmra.mxu0 %v1374
      %v1468 = vpop.f32.mrf.mxu0
      %v1469 = vadd.f32 %v902, %v1468
      %v1470 = vpop.f32.mrf.mxu0
      %v1471 = vadd.f32 %v904, %v1470
      %1472 = vdwg.mxu0
      %v1473 = vadd.f32 %v1389, %v1029
      %v1474 = vadd.f32 %v1391, %v1031
      %v1475 = vadd.f32 %v1394, %v1034
      %v1476 = vadd.f32 %v1396, %v1036
      %v1477 = vadd.f32 %v1399, %v1039
      %v1478 = vadd.f32 %v1401, %v1041
      %v1479 = vadd.f32 %v1404, %v1044
      %v1480 = vadd.f32 %v1406, %v1046
      %v1481 = vadd.f32 %v1409, %v1049
      %v1482 = vadd.f32 %v1411, %v1051
      %v1483 = vadd.f32 %v1414, %v1054
      %v1484 = vadd.f32 %v1416, %v1056
      %v1485 = vadd.f32 %v1419, %v1059
      %v1486 = vadd.f32 %v1421, %v1061
      %v1487 = vadd.f32 %v1424, %v1064
      %v1488 = vadd.f32 %v1426, %v1066
      %v1489 = vadd.f32 %v1429, %v1069
      %v1490 = vadd.f32 %v1431, %v1071
      %v1491 = vadd.f32 %v1434, %v1074
      %v1492 = vadd.f32 %v1436, %v1076
      %v1493 = vadd.f32 %v1439, %v1079
      %v1494 = vadd.f32 %v1441, %v1081
      %v1495 = vadd.f32 %v1444, %v1084
      %v1496 = vadd.f32 %v1446, %v1086
      %v1497 = vadd.f32 %v1449, %v1089
      %v1498 = vadd.f32 %v1451, %v1091
      %v1499 = vadd.f32 %v1454, %v1094
      %v1500 = vadd.f32 %v1456, %v1096
      %v1501 = vadd.f32 %v1459, %v1099
      %v1502 = vadd.f32 %v1461, %v1101
      %v1503 = vadd.f32 %v1464, %v1104
      %v1504 = vadd.f32 %v1466, %v1106
      %v1505 = vadd.f32 %v1469, %v1109
      %v1506 = vadd.f32 %v1471, %v1111
      %v1507 = vadd.f32 %v1473, %v1236
      %v1508 = vadd.f32 %v1474, %v1238
      %v1509 = vadd.f32 %v1475, %v1241
      %v1510 = vadd.f32 %v1476, %v1243
      %v1511 = vadd.f32 %v1477, %v1246
      %v1512 = vadd.f32 %v1478, %v1248
      %v1513 = vadd.f32 %v1479, %v1251
      %v1514 = vadd.f32 %v1480, %v1253
      %v1515 = vadd.f32 %v1481, %v1256
      %v1516 = vadd.f32 %v1482, %v1258
      %v1517 = vadd.f32 %v1483, %v1261
      %v1518 = vadd.f32 %v1484, %v1263
      %v1519 = vadd.f32 %v1485, %v1266
      %v1520 = vadd.f32 %v1486, %v1268
      %v1521 = vadd.f32 %v1487, %v1271
      %v1522 = vadd.f32 %v1488, %v1273
      %v1523 = vadd.f32 %v1489, %v1276
      %v1524 = vadd.f32 %v1490, %v1278
      %v1525 = vadd.f32 %v1491, %v1281
      %v1526 = vadd.f32 %v1492, %v1283
      %v1527 = vadd.f32 %v1493, %v1286
      %v1528 = vadd.f32 %v1494, %v1288
      %v1529 = vadd.f32 %v1495, %v1291
      %v1530 = vadd.f32 %v1496, %v1293
      %v1531 = vadd.f32 %v1497, %v1296
      %v1532 = vadd.f32 %v1498, %v1298
      %v1533 = vadd.f32 %v1499, %v1301
      %v1534 = vadd.f32 %v1500, %v1303
      %v1535 = vadd.f32 %v1501, %v1306
      %v1536 = vadd.f32 %v1502, %v1308
      %v1537 = vadd.f32 %v1503, %v1311
      %v1538 = vadd.f32 %v1504, %v1313
      %v1539 = vadd.f32 %v1505, %v1316
      %v1540 = vadd.f32 %v1506, %v1318
      %v1541 = vld [vmem:[%s2] sm:$0x1]
      %v1543 = vperm.slane %v1541, 0
      %v1545 = vadd.f32 %v1507, %v1543
      %v1546 = vadd.f32 %v1508, %v1543
      %v1547 = vadd.f32 %v1509, %v1543
      %v1548 = vadd.f32 %v1510, %v1543
      %v1549 = vadd.f32 %v1511, %v1543
      %v1550 = vadd.f32 %v1512, %v1543
      %v1551 = vadd.f32 %v1513, %v1543
      %v1552 = vadd.f32 %v1514, %v1543
      %v1553 = vadd.f32 %v1515, %v1543
      %v1554 = vadd.f32 %v1516, %v1543
      %v1555 = vadd.f32 %v1517, %v1543
      %v1556 = vadd.f32 %v1518, %v1543
      %v1557 = vadd.f32 %v1519, %v1543
      %v1558 = vadd.f32 %v1520, %v1543
      %v1559 = vadd.f32 %v1521, %v1543
      %v1560 = vadd.f32 %v1522, %v1543
      %v1561 = vadd.f32 %v1523, %v1543
      %v1562 = vadd.f32 %v1524, %v1543
      %v1563 = vadd.f32 %v1525, %v1543
      %v1564 = vadd.f32 %v1526, %v1543
      %v1565 = vadd.f32 %v1527, %v1543
      %v1566 = vadd.f32 %v1528, %v1543
      %v1567 = vadd.f32 %v1529, %v1543
      %v1568 = vadd.f32 %v1530, %v1543
      %v1569 = vadd.f32 %v1531, %v1543
      %v1570 = vadd.f32 %v1532, %v1543
      %v1571 = vadd.f32 %v1533, %v1543
      %v1572 = vadd.f32 %v1534, %v1543
      %v1573 = vadd.f32 %v1535, %v1543
      %v1574 = vadd.f32 %v1536, %v1543
      %v1575 = vadd.f32 %v1537, %v1543
      %v1576 = vadd.f32 %v1538, %v1543
      %v1577 = vadd.f32 %v1539, %v1543
      %v1578 = vadd.f32 %v1540, %v1543
      %v1579 = vxor.u32 %v1545, 2147483648
      %v1580 = vxor.u32 %v1546, 2147483648
      %v1581 = vxor.u32 %v1547, 2147483648
      %v1582 = vxor.u32 %v1548, 2147483648
      %v1583 = vxor.u32 %v1549, 2147483648
      %v1584 = vxor.u32 %v1550, 2147483648
      %v1585 = vxor.u32 %v1551, 2147483648
      %v1586 = vxor.u32 %v1552, 2147483648
      %v1587 = vxor.u32 %v1553, 2147483648
      %v1588 = vxor.u32 %v1554, 2147483648
      %v1589 = vxor.u32 %v1555, 2147483648
      %v1590 = vxor.u32 %v1556, 2147483648
      %v1591 = vxor.u32 %v1557, 2147483648
      %v1592 = vxor.u32 %v1558, 2147483648
      %v1593 = vxor.u32 %v1559, 2147483648
      %v1594 = vxor.u32 %v1560, 2147483648
      %v1595 = vxor.u32 %v1561, 2147483648
      %v1596 = vxor.u32 %v1562, 2147483648
      %v1597 = vxor.u32 %v1563, 2147483648
      %v1598 = vxor.u32 %v1564, 2147483648
      %v1599 = vxor.u32 %v1565, 2147483648
      %v1600 = vxor.u32 %v1566, 2147483648
      %v1601 = vxor.u32 %v1567, 2147483648
      %v1602 = vxor.u32 %v1568, 2147483648
      %v1603 = vxor.u32 %v1569, 2147483648
      %v1604 = vxor.u32 %v1570, 2147483648
      %v1605 = vxor.u32 %v1571, 2147483648
      %v1606 = vxor.u32 %v1572, 2147483648
      %v1607 = vxor.u32 %v1573, 2147483648
      %v1608 = vxor.u32 %v1574, 2147483648
      %v1609 = vxor.u32 %v1575, 2147483648
      %v1610 = vxor.u32 %v1576, 2147483648
      %v1611 = vxor.u32 %v1577, 2147483648
      %v1612 = vxor.u32 %v1578, 2147483648
      %v1613 = vmul.f32 %v1579, 1.442695
      %v1614 = vpow.pop %v1613
      %v1615 = vmul.f32 %v1580, 1.442695
      %v1616 = vpow.pop %v1615
      %v1617 = vmul.f32 %v1581, 1.442695
      %v1618 = vpow.pop %v1617
      %v1619 = vmul.f32 %v1582, 1.442695
      %v1620 = vpow.pop %v1619
      %v1621 = vmul.f32 %v1583, 1.442695
      %v1622 = vpow.pop %v1621
      %v1623 = vmul.f32 %v1584, 1.442695
      %v1624 = vpow.pop %v1623
      %v1625 = vmul.f32 %v1585, 1.442695
      %v1626 = vpow.pop %v1625
      %v1627 = vmul.f32 %v1586, 1.442695
      %v1628 = vpow.pop %v1627
      %v1629 = vmul.f32 %v1587, 1.442695
      %v1630 = vpow.pop %v1629
      %v1631 = vmul.f32 %v1588, 1.442695
      %v1632 = vpow.pop %v1631
      %v1633 = vmul.f32 %v1589, 1.442695
      %v1634 = vpow.pop %v1633
      %v1635 = vmul.f32 %v1590, 1.442695
      %v1636 = vpow.pop %v1635
      %v1637 = vmul.f32 %v1591, 1.442695
      %v1638 = vpow.pop %v1637
      %v1639 = vmul.f32 %v1592, 1.442695
      %v1640 = vpow.pop %v1639
      %v1641 = vmul.f32 %v1593, 1.442695
      %v1642 = vpow.pop %v1641
      %v1643 = vmul.f32 %v1594, 1.442695
      %v1644 = vpow.pop %v1643
      %v1645 = vmul.f32 %v1595, 1.442695
      %v1646 = vpow.pop %v1645
      %v1647 = vmul.f32 %v1596, 1.442695
      %v1648 = vpow.pop %v1647
      %v1649 = vmul.f32 %v1597, 1.442695
      %v1650 = vpow.pop %v1649
      %v1651 = vmul.f32 %v1598, 1.442695
      %v1652 = vpow.pop %v1651
      %v1653 = vmul.f32 %v1599, 1.442695
      %v1654 = vpow.pop %v1653
      %v1655 = vmul.f32 %v1600, 1.442695
      %v1656 = vpow.pop %v1655
      %v1657 = vmul.f32 %v1601, 1.442695
      %v1658 = vpow.pop %v1657
      %v1659 = vmul.f32 %v1602, 1.442695
      %v1660 = vpow.pop %v1659
      %v1661 = vmul.f32 %v1603, 1.442695
      %v1662 = vpow.pop %v1661
      %v1663 = vmul.f32 %v1604, 1.442695
      %v1664 = vpow.pop %v1663
      %v1665 = vmul.f32 %v1605, 1.442695
      %v1666 = vpow.pop %v1665
      %v1667 = vmul.f32 %v1606, 1.442695
      %v1668 = vpow.pop %v1667
      %v1669 = vmul.f32 %v1607, 1.442695
      %v1670 = vpow.pop %v1669
      %v1671 = vmul.f32 %v1608, 1.442695
      %v1672 = vpow.pop %v1671
      %v1673 = vmul.f32 %v1609, 1.442695
      %v1674 = vpow.pop %v1673
      %v1675 = vmul.f32 %v1610, 1.442695
      %v1676 = vpow.pop %v1675
      %v1677 = vmul.f32 %v1611, 1.442695
      %v1678 = vpow.pop %v1677
      %v1679 = vmul.f32 %v1612, 1.442695
      %v1680 = vpow.pop %v1679
      %v1681 = vadd.f32 %v1614, 1.0
      %v1682 = vadd.f32 %v1616, 1.0
      %v1683 = vadd.f32 %v1618, 1.0
      %v1684 = vadd.f32 %v1620, 1.0
      %v1685 = vadd.f32 %v1622, 1.0
      %v1686 = vadd.f32 %v1624, 1.0
      %v1687 = vadd.f32 %v1626, 1.0
      %v1688 = vadd.f32 %v1628, 1.0
      %v1689 = vadd.f32 %v1630, 1.0
      %v1690 = vadd.f32 %v1632, 1.0
      %v1691 = vadd.f32 %v1634, 1.0
      %v1692 = vadd.f32 %v1636, 1.0
      %v1693 = vadd.f32 %v1638, 1.0
      %v1694 = vadd.f32 %v1640, 1.0
      %v1695 = vadd.f32 %v1642, 1.0
      %v1696 = vadd.f32 %v1644, 1.0
      %v1697 = vadd.f32 %v1646, 1.0
      %v1698 = vadd.f32 %v1648, 1.0
      %v1699 = vadd.f32 %v1650, 1.0
      %v1700 = vadd.f32 %v1652, 1.0
      %v1701 = vadd.f32 %v1654, 1.0
      %v1702 = vadd.f32 %v1656, 1.0
      %v1703 = vadd.f32 %v1658, 1.0
      %v1704 = vadd.f32 %v1660, 1.0
      %v1705 = vadd.f32 %v1662, 1.0
      %v1706 = vadd.f32 %v1664, 1.0
      %v1707 = vadd.f32 %v1666, 1.0
      %v1708 = vadd.f32 %v1668, 1.0
      %v1709 = vadd.f32 %v1670, 1.0
      %v1710 = vadd.f32 %v1672, 1.0
      %v1711 = vadd.f32 %v1674, 1.0
      %v1712 = vadd.f32 %v1676, 1.0
      %v1713 = vadd.f32 %v1678, 1.0
      %v1714 = vadd.f32 %v1680, 1.0
      %v1715 = vrcp.pop %v1681
      %v1716 = vmul.f32 %v1681, %v1715
      %v1717 = vsub.f32 1.0, %v1716
      %v1718 = vmul.f32 %v1715, %v1717
      %v1719 = vadd.f32 %v1715, %v1718
      %vm1720 = vweird.f32 %v1681
      %vm1721 = vweird.f32 %v1715
      %vm1722 = vmor %vm1720, %vm1721
      %v1723 = vsel %vm1722, %v1715, %v1719
      %v1724 = vand.u32 2147483647, %v1681
      %vm1725 = vcmp.eq.f32.partialorder %v1724, 8.507059e+37
      %v1726 = vand.u32 %v1681, 2147483648
      %v1727 = vor.u32 1.1754944e-38, %v1726
      %v1728 = vsel %vm1725, %v1727, %v1723
      %v1729 = vmul.f32 1.0, %v1728
      %v1730 = vrcp.pop %v1682
      %v1731 = vmul.f32 %v1682, %v1730
      %v1732 = vsub.f32 1.0, %v1731
      %v1733 = vmul.f32 %v1730, %v1732
      %v1734 = vadd.f32 %v1730, %v1733
      %vm1735 = vweird.f32 %v1682
      %vm1736 = vweird.f32 %v1730
      %vm1737 = vmor %vm1735, %vm1736
      %v1738 = vsel %vm1737, %v1730, %v1734
      %v1739 = vand.u32 2147483647, %v1682
      %vm1740 = vcmp.eq.f32.partialorder %v1739, 8.507059e+37
      %v1741 = vand.u32 %v1682, 2147483648
      %v1742 = vor.u32 1.1754944e-38, %v1741
      %v1743 = vsel %vm1740, %v1742, %v1738
      %v1744 = vmul.f32 1.0, %v1743
      %v1745 = vrcp.pop %v1683
      %v1746 = vmul.f32 %v1683, %v1745
      %v1747 = vsub.f32 1.0, %v1746
      %v1748 = vmul.f32 %v1745, %v1747
      %v1749 = vadd.f32 %v1745, %v1748
      %vm1750 = vweird.f32 %v1683
      %vm1751 = vweird.f32 %v1745
      %vm1752 = vmor %vm1750, %vm1751
      %v1753 = vsel %vm1752, %v1745, %v1749
      %v1754 = vand.u32 2147483647, %v1683
      %vm1755 = vcmp.eq.f32.partialorder %v1754, 8.507059e+37
      %v1756 = vand.u32 %v1683, 2147483648
      %v1757 = vor.u32 1.1754944e-38, %v1756
      %v1758 = vsel %vm1755, %v1757, %v1753
      %v1759 = vmul.f32 1.0, %v1758
      %v1760 = vrcp.pop %v1684
      %v1761 = vmul.f32 %v1684, %v1760
      %v1762 = vsub.f32 1.0, %v1761
      %v1763 = vmul.f32 %v1760, %v1762
      %v1764 = vadd.f32 %v1760, %v1763
      %vm1765 = vweird.f32 %v1684
      %vm1766 = vweird.f32 %v1760
      %vm1767 = vmor %vm1765, %vm1766
      %v1768 = vsel %vm1767, %v1760, %v1764
      %v1769 = vand.u32 2147483647, %v1684
      %vm1770 = vcmp.eq.f32.partialorder %v1769, 8.507059e+37
      %v1771 = vand.u32 %v1684, 2147483648
      %v1772 = vor.u32 1.1754944e-38, %v1771
      %v1773 = vsel %vm1770, %v1772, %v1768
      %v1774 = vmul.f32 1.0, %v1773
      %v1775 = vrcp.pop %v1685
      %v1776 = vmul.f32 %v1685, %v1775
      %v1777 = vsub.f32 1.0, %v1776
      %v1778 = vmul.f32 %v1775, %v1777
      %v1779 = vadd.f32 %v1775, %v1778
      %vm1780 = vweird.f32 %v1685
      %vm1781 = vweird.f32 %v1775
      %vm1782 = vmor %vm1780, %vm1781
      %v1783 = vsel %vm1782, %v1775, %v1779
      %v1784 = vand.u32 2147483647, %v1685
      %vm1785 = vcmp.eq.f32.partialorder %v1784, 8.507059e+37
      %v1786 = vand.u32 %v1685, 2147483648
      %v1787 = vor.u32 1.1754944e-38, %v1786
      %v1788 = vsel %vm1785, %v1787, %v1783
      %v1789 = vmul.f32 1.0, %v1788
      %v1790 = vrcp.pop %v1686
      %v1791 = vmul.f32 %v1686, %v1790
      %v1792 = vsub.f32 1.0, %v1791
      %v1793 = vmul.f32 %v1790, %v1792
      %v1794 = vadd.f32 %v1790, %v1793
      %vm1795 = vweird.f32 %v1686
      %vm1796 = vweird.f32 %v1790
      %vm1797 = vmor %vm1795, %vm1796
      %v1798 = vsel %vm1797, %v1790, %v1794
      %v1799 = vand.u32 2147483647, %v1686
      %vm1800 = vcmp.eq.f32.partialorder %v1799, 8.507059e+37
      %v1801 = vand.u32 %v1686, 2147483648
      %v1802 = vor.u32 1.1754944e-38, %v1801
      %v1803 = vsel %vm1800, %v1802, %v1798
      %v1804 = vmul.f32 1.0, %v1803
      %v1805 = vrcp.pop %v1687
      %v1806 = vmul.f32 %v1687, %v1805
      %v1807 = vsub.f32 1.0, %v1806
      %v1808 = vmul.f32 %v1805, %v1807
      %v1809 = vadd.f32 %v1805, %v1808
      %vm1810 = vweird.f32 %v1687
      %vm1811 = vweird.f32 %v1805
      %vm1812 = vmor %vm1810, %vm1811
      %v1813 = vsel %vm1812, %v1805, %v1809
      %v1814 = vand.u32 2147483647, %v1687
      %vm1815 = vcmp.eq.f32.partialorder %v1814, 8.507059e+37
      %v1816 = vand.u32 %v1687, 2147483648
      %v1817 = vor.u32 1.1754944e-38, %v1816
      %v1818 = vsel %vm1815, %v1817, %v1813
      %v1819 = vmul.f32 1.0, %v1818
      %v1820 = vrcp.pop %v1688
      %v1821 = vmul.f32 %v1688, %v1820
      %v1822 = vsub.f32 1.0, %v1821
      %v1823 = vmul.f32 %v1820, %v1822
      %v1824 = vadd.f32 %v1820, %v1823
      %vm1825 = vweird.f32 %v1688
      %vm1826 = vweird.f32 %v1820
      %vm1827 = vmor %vm1825, %vm1826
      %v1828 = vsel %vm1827, %v1820, %v1824
      %v1829 = vand.u32 2147483647, %v1688
      %vm1830 = vcmp.eq.f32.partialorder %v1829, 8.507059e+37
      %v1831 = vand.u32 %v1688, 2147483648
      %v1832 = vor.u32 1.1754944e-38, %v1831
      %v1833 = vsel %vm1830, %v1832, %v1828
      %v1834 = vmul.f32 1.0, %v1833
      %v1835 = vrcp.pop %v1689
      %v1836 = vmul.f32 %v1689, %v1835
      %v1837 = vsub.f32 1.0, %v1836
      %v1838 = vmul.f32 %v1835, %v1837
      %v1839 = vadd.f32 %v1835, %v1838
      %vm1840 = vweird.f32 %v1689
      %vm1841 = vweird.f32 %v1835
      %vm1842 = vmor %vm1840, %vm1841
      %v1843 = vsel %vm1842, %v1835, %v1839
      %v1844 = vand.u32 2147483647, %v1689
      %vm1845 = vcmp.eq.f32.partialorder %v1844, 8.507059e+37
      %v1846 = vand.u32 %v1689, 2147483648
      %v1847 = vor.u32 1.1754944e-38, %v1846
      %v1848 = vsel %vm1845, %v1847, %v1843
      %v1849 = vmul.f32 1.0, %v1848
      %v1850 = vrcp.pop %v1690
      %v1851 = vmul.f32 %v1690, %v1850
      %v1852 = vsub.f32 1.0, %v1851
      %v1853 = vmul.f32 %v1850, %v1852
      %v1854 = vadd.f32 %v1850, %v1853
      %vm1855 = vweird.f32 %v1690
      %vm1856 = vweird.f32 %v1850
      %vm1857 = vmor %vm1855, %vm1856
      %v1858 = vsel %vm1857, %v1850, %v1854
      %v1859 = vand.u32 2147483647, %v1690
      %vm1860 = vcmp.eq.f32.partialorder %v1859, 8.507059e+37
      %v1861 = vand.u32 %v1690, 2147483648
      %v1862 = vor.u32 1.1754944e-38, %v1861
      %v1863 = vsel %vm1860, %v1862, %v1858
      %v1864 = vmul.f32 1.0, %v1863
      %v1865 = vrcp.pop %v1691
      %v1866 = vmul.f32 %v1691, %v1865
      %v1867 = vsub.f32 1.0, %v1866
      %v1868 = vmul.f32 %v1865, %v1867
      %v1869 = vadd.f32 %v1865, %v1868
      %vm1870 = vweird.f32 %v1691
      %vm1871 = vweird.f32 %v1865
      %vm1872 = vmor %vm1870, %vm1871
      %v1873 = vsel %vm1872, %v1865, %v1869
      %v1874 = vand.u32 2147483647, %v1691
      %vm1875 = vcmp.eq.f32.partialorder %v1874, 8.507059e+37
      %v1876 = vand.u32 %v1691, 2147483648
      %v1877 = vor.u32 1.1754944e-38, %v1876
      %v1878 = vsel %vm1875, %v1877, %v1873
      %v1879 = vmul.f32 1.0, %v1878
      %v1880 = vrcp.pop %v1692
      %v1881 = vmul.f32 %v1692, %v1880
      %v1882 = vsub.f32 1.0, %v1881
      %v1883 = vmul.f32 %v1880, %v1882
      %v1884 = vadd.f32 %v1880, %v1883
      %vm1885 = vweird.f32 %v1692
      %vm1886 = vweird.f32 %v1880
      %vm1887 = vmor %vm1885, %vm1886
      %v1888 = vsel %vm1887, %v1880, %v1884
      %v1889 = vand.u32 2147483647, %v1692
      %vm1890 = vcmp.eq.f32.partialorder %v1889, 8.507059e+37
      %v1891 = vand.u32 %v1692, 2147483648
      %v1892 = vor.u32 1.1754944e-38, %v1891
      %v1893 = vsel %vm1890, %v1892, %v1888
      %v1894 = vmul.f32 1.0, %v1893
      %v1895 = vrcp.pop %v1693
      %v1896 = vmul.f32 %v1693, %v1895
      %v1897 = vsub.f32 1.0, %v1896
      %v1898 = vmul.f32 %v1895, %v1897
      %v1899 = vadd.f32 %v1895, %v1898
      %vm1900 = vweird.f32 %v1693
      %vm1901 = vweird.f32 %v1895
      %vm1902 = vmor %vm1900, %vm1901
      %v1903 = vsel %vm1902, %v1895, %v1899
      %v1904 = vand.u32 2147483647, %v1693
      %vm1905 = vcmp.eq.f32.partialorder %v1904, 8.507059e+37
      %v1906 = vand.u32 %v1693, 2147483648
      %v1907 = vor.u32 1.1754944e-38, %v1906
      %v1908 = vsel %vm1905, %v1907, %v1903
      %v1909 = vmul.f32 1.0, %v1908
      %v1910 = vrcp.pop %v1694
      %v1911 = vmul.f32 %v1694, %v1910
      %v1912 = vsub.f32 1.0, %v1911
      %v1913 = vmul.f32 %v1910, %v1912
      %v1914 = vadd.f32 %v1910, %v1913
      %vm1915 = vweird.f32 %v1694
      %vm1916 = vweird.f32 %v1910
      %vm1917 = vmor %vm1915, %vm1916
      %v1918 = vsel %vm1917, %v1910, %v1914
      %v1919 = vand.u32 2147483647, %v1694
      %vm1920 = vcmp.eq.f32.partialorder %v1919, 8.507059e+37
      %v1921 = vand.u32 %v1694, 2147483648
      %v1922 = vor.u32 1.1754944e-38, %v1921
      %v1923 = vsel %vm1920, %v1922, %v1918
      %v1924 = vmul.f32 1.0, %v1923
      %v1925 = vrcp.pop %v1695
      %v1926 = vmul.f32 %v1695, %v1925
      %v1927 = vsub.f32 1.0, %v1926
      %v1928 = vmul.f32 %v1925, %v1927
      %v1929 = vadd.f32 %v1925, %v1928
      %vm1930 = vweird.f32 %v1695
      %vm1931 = vweird.f32 %v1925
      %vm1932 = vmor %vm1930, %vm1931
      %v1933 = vsel %vm1932, %v1925, %v1929
      %v1934 = vand.u32 2147483647, %v1695
      %vm1935 = vcmp.eq.f32.partialorder %v1934, 8.507059e+37
      %v1936 = vand.u32 %v1695, 2147483648
      %v1937 = vor.u32 1.1754944e-38, %v1936
      %v1938 = vsel %vm1935, %v1937, %v1933
      %v1939 = vmul.f32 1.0, %v1938
      %v1940 = vrcp.pop %v1696
      %v1941 = vmul.f32 %v1696, %v1940
      %v1942 = vsub.f32 1.0, %v1941
      %v1943 = vmul.f32 %v1940, %v1942
      %v1944 = vadd.f32 %v1940, %v1943
      %vm1945 = vweird.f32 %v1696
      %vm1946 = vweird.f32 %v1940
      %vm1947 = vmor %vm1945, %vm1946
      %v1948 = vsel %vm1947, %v1940, %v1944
      %v1949 = vand.u32 2147483647, %v1696
      %vm1950 = vcmp.eq.f32.partialorder %v1949, 8.507059e+37
      %v1951 = vand.u32 %v1696, 2147483648
      %v1952 = vor.u32 1.1754944e-38, %v1951
      %v1953 = vsel %vm1950, %v1952, %v1948
      %v1954 = vmul.f32 1.0, %v1953
      %v1955 = vrcp.pop %v1697
      %v1956 = vmul.f32 %v1697, %v1955
      %v1957 = vsub.f32 1.0, %v1956
      %v1958 = vmul.f32 %v1955, %v1957
      %v1959 = vadd.f32 %v1955, %v1958
      %vm1960 = vweird.f32 %v1697
      %vm1961 = vweird.f32 %v1955
      %vm1962 = vmor %vm1960, %vm1961
      %v1963 = vsel %vm1962, %v1955, %v1959
      %v1964 = vand.u32 2147483647, %v1697
      %vm1965 = vcmp.eq.f32.partialorder %v1964, 8.507059e+37
      %v1966 = vand.u32 %v1697, 2147483648
      %v1967 = vor.u32 1.1754944e-38, %v1966
      %v1968 = vsel %vm1965, %v1967, %v1963
      %v1969 = vmul.f32 1.0, %v1968
      %v1970 = vrcp.pop %v1698
      %v1971 = vmul.f32 %v1698, %v1970
      %v1972 = vsub.f32 1.0, %v1971
      %v1973 = vmul.f32 %v1970, %v1972
      %v1974 = vadd.f32 %v1970, %v1973
      %vm1975 = vweird.f32 %v1698
      %vm1976 = vweird.f32 %v1970
      %vm1977 = vmor %vm1975, %vm1976
      %v1978 = vsel %vm1977, %v1970, %v1974
      %v1979 = vand.u32 2147483647, %v1698
      %vm1980 = vcmp.eq.f32.partialorder %v1979, 8.507059e+37
      %v1981 = vand.u32 %v1698, 2147483648
      %v1982 = vor.u32 1.1754944e-38, %v1981
      %v1983 = vsel %vm1980, %v1982, %v1978
      %v1984 = vmul.f32 1.0, %v1983
      %v1985 = vrcp.pop %v1699
      %v1986 = vmul.f32 %v1699, %v1985
      %v1987 = vsub.f32 1.0, %v1986
      %v1988 = vmul.f32 %v1985, %v1987
      %v1989 = vadd.f32 %v1985, %v1988
      %vm1990 = vweird.f32 %v1699
      %vm1991 = vweird.f32 %v1985
      %vm1992 = vmor %vm1990, %vm1991
      %v1993 = vsel %vm1992, %v1985, %v1989
      %v1994 = vand.u32 2147483647, %v1699
      %vm1995 = vcmp.eq.f32.partialorder %v1994, 8.507059e+37
      %v1996 = vand.u32 %v1699, 2147483648
      %v1997 = vor.u32 1.1754944e-38, %v1996
      %v1998 = vsel %vm1995, %v1997, %v1993
      %v1999 = vmul.f32 1.0, %v1998
      %v2000 = vrcp.pop %v1700
      %v2001 = vmul.f32 %v1700, %v2000
      %v2002 = vsub.f32 1.0, %v2001
      %v2003 = vmul.f32 %v2000, %v2002
      %v2004 = vadd.f32 %v2000, %v2003
      %vm2005 = vweird.f32 %v1700
      %vm2006 = vweird.f32 %v2000
      %vm2007 = vmor %vm2005, %vm2006
      %v2008 = vsel %vm2007, %v2000, %v2004
      %v2009 = vand.u32 2147483647, %v1700
      %vm2010 = vcmp.eq.f32.partialorder %v2009, 8.507059e+37
      %v2011 = vand.u32 %v1700, 2147483648
      %v2012 = vor.u32 1.1754944e-38, %v2011
      %v2013 = vsel %vm2010, %v2012, %v2008
      %v2014 = vmul.f32 1.0, %v2013
      %v2015 = vrcp.pop %v1701
      %v2016 = vmul.f32 %v1701, %v2015
      %v2017 = vsub.f32 1.0, %v2016
      %v2018 = vmul.f32 %v2015, %v2017
      %v2019 = vadd.f32 %v2015, %v2018
      %vm2020 = vweird.f32 %v1701
      %vm2021 = vweird.f32 %v2015
      %vm2022 = vmor %vm2020, %vm2021
      %v2023 = vsel %vm2022, %v2015, %v2019
      %v2024 = vand.u32 2147483647, %v1701
      %vm2025 = vcmp.eq.f32.partialorder %v2024, 8.507059e+37
      %v2026 = vand.u32 %v1701, 2147483648
      %v2027 = vor.u32 1.1754944e-38, %v2026
      %v2028 = vsel %vm2025, %v2027, %v2023
      %v2029 = vmul.f32 1.0, %v2028
      %v2030 = vrcp.pop %v1702
      %v2031 = vmul.f32 %v1702, %v2030
      %v2032 = vsub.f32 1.0, %v2031
      %v2033 = vmul.f32 %v2030, %v2032
      %v2034 = vadd.f32 %v2030, %v2033
      %vm2035 = vweird.f32 %v1702
      %vm2036 = vweird.f32 %v2030
      %vm2037 = vmor %vm2035, %vm2036
      %v2038 = vsel %vm2037, %v2030, %v2034
      %v2039 = vand.u32 2147483647, %v1702
      %vm2040 = vcmp.eq.f32.partialorder %v2039, 8.507059e+37
      %v2041 = vand.u32 %v1702, 2147483648
      %v2042 = vor.u32 1.1754944e-38, %v2041
      %v2043 = vsel %vm2040, %v2042, %v2038
      %v2044 = vmul.f32 1.0, %v2043
      %v2045 = vrcp.pop %v1703
      %v2046 = vmul.f32 %v1703, %v2045
      %v2047 = vsub.f32 1.0, %v2046
      %v2048 = vmul.f32 %v2045, %v2047
      %v2049 = vadd.f32 %v2045, %v2048
      %vm2050 = vweird.f32 %v1703
      %vm2051 = vweird.f32 %v2045
      %vm2052 = vmor %vm2050, %vm2051
      %v2053 = vsel %vm2052, %v2045, %v2049
      %v2054 = vand.u32 2147483647, %v1703
      %vm2055 = vcmp.eq.f32.partialorder %v2054, 8.507059e+37
      %v2056 = vand.u32 %v1703, 2147483648
      %v2057 = vor.u32 1.1754944e-38, %v2056
      %v2058 = vsel %vm2055, %v2057, %v2053
      %v2059 = vmul.f32 1.0, %v2058
      %v2060 = vrcp.pop %v1704
      %v2061 = vmul.f32 %v1704, %v2060
      %v2062 = vsub.f32 1.0, %v2061
      %v2063 = vmul.f32 %v2060, %v2062
      %v2064 = vadd.f32 %v2060, %v2063
      %vm2065 = vweird.f32 %v1704
      %vm2066 = vweird.f32 %v2060
      %vm2067 = vmor %vm2065, %vm2066
      %v2068 = vsel %vm2067, %v2060, %v2064
      %v2069 = vand.u32 2147483647, %v1704
      %vm2070 = vcmp.eq.f32.partialorder %v2069, 8.507059e+37
      %v2071 = vand.u32 %v1704, 2147483648
      %v2072 = vor.u32 1.1754944e-38, %v2071
      %v2073 = vsel %vm2070, %v2072, %v2068
      %v2074 = vmul.f32 1.0, %v2073
      %v2075 = vrcp.pop %v1705
      %v2076 = vmul.f32 %v1705, %v2075
      %v2077 = vsub.f32 1.0, %v2076
      %v2078 = vmul.f32 %v2075, %v2077
      %v2079 = vadd.f32 %v2075, %v2078
      %vm2080 = vweird.f32 %v1705
      %vm2081 = vweird.f32 %v2075
      %vm2082 = vmor %vm2080, %vm2081
      %v2083 = vsel %vm2082, %v2075, %v2079
      %v2084 = vand.u32 2147483647, %v1705
      %vm2085 = vcmp.eq.f32.partialorder %v2084, 8.507059e+37
      %v2086 = vand.u32 %v1705, 2147483648
      %v2087 = vor.u32 1.1754944e-38, %v2086
      %v2088 = vsel %vm2085, %v2087, %v2083
      %v2089 = vmul.f32 1.0, %v2088
      %v2090 = vrcp.pop %v1706
      %v2091 = vmul.f32 %v1706, %v2090
      %v2092 = vsub.f32 1.0, %v2091
      %v2093 = vmul.f32 %v2090, %v2092
      %v2094 = vadd.f32 %v2090, %v2093
      %vm2095 = vweird.f32 %v1706
      %vm2096 = vweird.f32 %v2090
      %vm2097 = vmor %vm2095, %vm2096
      %v2098 = vsel %vm2097, %v2090, %v2094
      %v2099 = vand.u32 2147483647, %v1706
      %vm2100 = vcmp.eq.f32.partialorder %v2099, 8.507059e+37
      %v2101 = vand.u32 %v1706, 2147483648
      %v2102 = vor.u32 1.1754944e-38, %v2101
      %v2103 = vsel %vm2100, %v2102, %v2098
      %v2104 = vmul.f32 1.0, %v2103
      %v2105 = vrcp.pop %v1707
      %v2106 = vmul.f32 %v1707, %v2105
      %v2107 = vsub.f32 1.0, %v2106
      %v2108 = vmul.f32 %v2105, %v2107
      %v2109 = vadd.f32 %v2105, %v2108
      %vm2110 = vweird.f32 %v1707
      %vm2111 = vweird.f32 %v2105
      %vm2112 = vmor %vm2110, %vm2111
      %v2113 = vsel %vm2112, %v2105, %v2109
      %v2114 = vand.u32 2147483647, %v1707
      %vm2115 = vcmp.eq.f32.partialorder %v2114, 8.507059e+37
      %v2116 = vand.u32 %v1707, 2147483648
      %v2117 = vor.u32 1.1754944e-38, %v2116
      %v2118 = vsel %vm2115, %v2117, %v2113
      %v2119 = vmul.f32 1.0, %v2118
      %v2120 = vrcp.pop %v1708
      %v2121 = vmul.f32 %v1708, %v2120
      %v2122 = vsub.f32 1.0, %v2121
      %v2123 = vmul.f32 %v2120, %v2122
      %v2124 = vadd.f32 %v2120, %v2123
      %vm2125 = vweird.f32 %v1708
      %vm2126 = vweird.f32 %v2120
      %vm2127 = vmor %vm2125, %vm2126
      %v2128 = vsel %vm2127, %v2120, %v2124
      %v2129 = vand.u32 2147483647, %v1708
      %vm2130 = vcmp.eq.f32.partialorder %v2129, 8.507059e+37
      %v2131 = vand.u32 %v1708, 2147483648
      %v2132 = vor.u32 1.1754944e-38, %v2131
      %v2133 = vsel %vm2130, %v2132, %v2128
      %v2134 = vmul.f32 1.0, %v2133
      %v2135 = vrcp.pop %v1709
      %v2136 = vmul.f32 %v1709, %v2135
      %v2137 = vsub.f32 1.0, %v2136
      %v2138 = vmul.f32 %v2135, %v2137
      %v2139 = vadd.f32 %v2135, %v2138
      %vm2140 = vweird.f32 %v1709
      %vm2141 = vweird.f32 %v2135
      %vm2142 = vmor %vm2140, %vm2141
      %v2143 = vsel %vm2142, %v2135, %v2139
      %v2144 = vand.u32 2147483647, %v1709
      %vm2145 = vcmp.eq.f32.partialorder %v2144, 8.507059e+37
      %v2146 = vand.u32 %v1709, 2147483648
      %v2147 = vor.u32 1.1754944e-38, %v2146
      %v2148 = vsel %vm2145, %v2147, %v2143
      %v2149 = vmul.f32 1.0, %v2148
      %v2150 = vrcp.pop %v1710
      %v2151 = vmul.f32 %v1710, %v2150
      %v2152 = vsub.f32 1.0, %v2151
      %v2153 = vmul.f32 %v2150, %v2152
      %v2154 = vadd.f32 %v2150, %v2153
      %vm2155 = vweird.f32 %v1710
      %vm2156 = vweird.f32 %v2150
      %vm2157 = vmor %vm2155, %vm2156
      %v2158 = vsel %vm2157, %v2150, %v2154
      %v2159 = vand.u32 2147483647, %v1710
      %vm2160 = vcmp.eq.f32.partialorder %v2159, 8.507059e+37
      %v2161 = vand.u32 %v1710, 2147483648
      %v2162 = vor.u32 1.1754944e-38, %v2161
      %v2163 = vsel %vm2160, %v2162, %v2158
      %v2164 = vmul.f32 1.0, %v2163
      %v2165 = vrcp.pop %v1711
      %v2166 = vmul.f32 %v1711, %v2165
      %v2167 = vsub.f32 1.0, %v2166
      %v2168 = vmul.f32 %v2165, %v2167
      %v2169 = vadd.f32 %v2165, %v2168
      %vm2170 = vweird.f32 %v1711
      %vm2171 = vweird.f32 %v2165
      %vm2172 = vmor %vm2170, %vm2171
      %v2173 = vsel %vm2172, %v2165, %v2169
      %v2174 = vand.u32 2147483647, %v1711
      %vm2175 = vcmp.eq.f32.partialorder %v2174, 8.507059e+37
      %v2176 = vand.u32 %v1711, 2147483648
      %v2177 = vor.u32 1.1754944e-38, %v2176
      %v2178 = vsel %vm2175, %v2177, %v2173
      %v2179 = vmul.f32 1.0, %v2178
      %v2180 = vrcp.pop %v1712
      %v2181 = vmul.f32 %v1712, %v2180
      %v2182 = vsub.f32 1.0, %v2181
      %v2183 = vmul.f32 %v2180, %v2182
      %v2184 = vadd.f32 %v2180, %v2183
      %vm2185 = vweird.f32 %v1712
      %vm2186 = vweird.f32 %v2180
      %vm2187 = vmor %vm2185, %vm2186
      %v2188 = vsel %vm2187, %v2180, %v2184
      %v2189 = vand.u32 2147483647, %v1712
      %vm2190 = vcmp.eq.f32.partialorder %v2189, 8.507059e+37
      %v2191 = vand.u32 %v1712, 2147483648
      %v2192 = vor.u32 1.1754944e-38, %v2191
      %v2193 = vsel %vm2190, %v2192, %v2188
      %v2194 = vmul.f32 1.0, %v2193
      %v2195 = vrcp.pop %v1713
      %v2196 = vmul.f32 %v1713, %v2195
      %v2197 = vsub.f32 1.0, %v2196
      %v2198 = vmul.f32 %v2195, %v2197
      %v2199 = vadd.f32 %v2195, %v2198
      %vm2200 = vweird.f32 %v1713
      %vm2201 = vweird.f32 %v2195
      %vm2202 = vmor %vm2200, %vm2201
      %v2203 = vsel %vm2202, %v2195, %v2199
      %v2204 = vand.u32 2147483647, %v1713
      %vm2205 = vcmp.eq.f32.partialorder %v2204, 8.507059e+37
      %v2206 = vand.u32 %v1713, 2147483648
      %v2207 = vor.u32 1.1754944e-38, %v2206
      %v2208 = vsel %vm2205, %v2207, %v2203
      %v2209 = vmul.f32 1.0, %v2208
      %v2210 = vrcp.pop %v1714
      %v2211 = vmul.f32 %v1714, %v2210
      %v2212 = vsub.f32 1.0, %v2211
      %v2213 = vmul.f32 %v2210, %v2212
      %v2214 = vadd.f32 %v2210, %v2213
      %vm2215 = vweird.f32 %v1714
      %vm2216 = vweird.f32 %v2210
      %vm2217 = vmor %vm2215, %vm2216
      %v2218 = vsel %vm2217, %v2210, %v2214
      %v2219 = vand.u32 2147483647, %v1714
      %vm2220 = vcmp.eq.f32.partialorder %v2219, 8.507059e+37
      %v2221 = vand.u32 %v1714, 2147483648
      %v2222 = vor.u32 1.1754944e-38, %v2221
      %v2223 = vsel %vm2220, %v2222, %v2218
      %v2224 = vmul.f32 1.0, %v2223
      %v2225 = vmul.f32 %v1545, %v1729
      %v2226 = vmul.f32 %v1546, %v1744
      %v2227 = vmul.f32 %v1547, %v1759
      %v2228 = vmul.f32 %v1548, %v1774
      %v2229 = vmul.f32 %v1549, %v1789
      %v2230 = vmul.f32 %v1550, %v1804
      %v2231 = vmul.f32 %v1551, %v1819
      %v2232 = vmul.f32 %v1552, %v1834
      %v2233 = vmul.f32 %v1553, %v1849
      %v2234 = vmul.f32 %v1554, %v1864
      %v2235 = vmul.f32 %v1555, %v1879
      %v2236 = vmul.f32 %v1556, %v1894
      %v2237 = vmul.f32 %v1557, %v1909
      %v2238 = vmul.f32 %v1558, %v1924
      %v2239 = vmul.f32 %v1559, %v1939
      %v2240 = vmul.f32 %v1560, %v1954
      %v2241 = vmul.f32 %v1561, %v1969
      %v2242 = vmul.f32 %v1562, %v1984
      %v2243 = vmul.f32 %v1563, %v1999
      %v2244 = vmul.f32 %v1564, %v2014
      %v2245 = vmul.f32 %v1565, %v2029
      %v2246 = vmul.f32 %v1566, %v2044
      %v2247 = vmul.f32 %v1567, %v2059
      %v2248 = vmul.f32 %v1568, %v2074
      %v2249 = vmul.f32 %v1569, %v2089
      %v2250 = vmul.f32 %v1570, %v2104
      %v2251 = vmul.f32 %v1571, %v2119
      %v2252 = vmul.f32 %v1572, %v2134
      %v2253 = vmul.f32 %v1573, %v2149
      %v2254 = vmul.f32 %v1574, %v2164
      %v2255 = vmul.f32 %v1575, %v2179
      %v2256 = vmul.f32 %v1576, %v2194
      %v2257 = vmul.f32 %v1577, %v2209
      %v2258 = vmul.f32 %v1578, %v2224
      %v2259 = vpack.c.bf16 %v2226, %v2225
      %v2260 = vpack.c.bf16 %v2228, %v2227
      %v2261 = vpack.c.bf16 %v2230, %v2229
      %v2262 = vpack.c.bf16 %v2232, %v2231
      %v2263 = vpack.c.bf16 %v2234, %v2233
      %v2264 = vpack.c.bf16 %v2236, %v2235
      %v2265 = vpack.c.bf16 %v2238, %v2237
      %v2266 = vpack.c.bf16 %v2240, %v2239
      %v2267 = vpack.c.bf16 %v2242, %v2241
      %v2268 = vpack.c.bf16 %v2244, %v2243
      %v2269 = vpack.c.bf16 %v2246, %v2245
      %v2270 = vpack.c.bf16 %v2248, %v2247
      %v2271 = vpack.c.bf16 %v2250, %v2249
      %v2272 = vpack.c.bf16 %v2252, %v2251
      %v2273 = vpack.c.bf16 %v2254, %v2253
      %v2274 = vpack.c.bf16 %v2256, %v2255
      %v2275 = vpack.c.bf16 %v2258, %v2257
      %v2276 = vld [vmem:[%s3] sm:$0xff]
      %v2277 = vld [vmem:[%s3 + $0x8] sm:$0xf]
      %v2278 = vld [vmem:[%s3 + $0xc] sm:$0xff]
      %v2279 = vld [vmem:[%s3 + $0x14] sm:$0xf]
      %v2280 = vld [vmem:[%s3 + $0x18] sm:$0xff]
      %v2281 = vld [vmem:[%s3 + $0x20] sm:$0xf]
      %v2282 = vld [vmem:[%s3 + $0x24] sm:$0xff]
      %v2283 = vld [vmem:[%s3 + $0x2c] sm:$0xf]
      %v2284 = vld [vmem:[%s3 + $0x30] sm:$0xff]
      %v2285 = vld [vmem:[%s3 + $0x38] sm:$0xf]
      %v2286 = vld [vmem:[%s3 + $0x3c] sm:$0xff]
      %v2287 = vld [vmem:[%s3 + $0x44] sm:$0xf]
      %v2288 = vld [vmem:[%s3 + $0x48] sm:$0xff]
      %v2289 = vld [vmem:[%s3 + $0x50] sm:$0xf]
      %v2290 = vld [vmem:[%s3 + $0x54] sm:$0xff]
      %v2291 = vld [vmem:[%s3 + $0x5c] sm:$0xf]
      %v2292 = vld [vmem:[%s3 + $0x60] sm:$0xff]
      %v2293 = vld [vmem:[%s3 + $0x68] sm:$0xf]
      %v2294 = vld [vmem:[%s3 + $0x6c] sm:$0xff]
      %v2295 = vld [vmem:[%s3 + $0x74] sm:$0xf]
      %v2296 = vld [vmem:[%s3 + $0x78] sm:$0xff]
      %v2297 = vld [vmem:[%s3 + $0x80] sm:$0xf]
      %v2320 = vunpack.c.l.b16 %v2276
      %v2321 = vunpack.c.h.b16 %v2276
      %v2322 = vunpack.c.l.b16 %v2277
      %v2323 = vunpack.c.l.b16 %v2278
      %v2324 = vunpack.c.h.b16 %v2278
      %v2325 = vunpack.c.l.b16 %v2279
      %v2326 = vunpack.c.l.b16 %v2280
      %v2327 = vunpack.c.h.b16 %v2280
      %v2328 = vunpack.c.l.b16 %v2281
      %v2329 = vunpack.c.l.b16 %v2282
      %v2330 = vunpack.c.h.b16 %v2282
      %v2331 = vunpack.c.l.b16 %v2283
      %v2332 = vunpack.c.l.b16 %v2284
      %v2333 = vunpack.c.h.b16 %v2284
      %v2334 = vunpack.c.l.b16 %v2285
      %v2335 = vunpack.c.l.b16 %v2286
      %v2336 = vunpack.c.h.b16 %v2286
      %v2337 = vunpack.c.l.b16 %v2287
      %v2338 = vunpack.c.l.b16 %v2288
      %v2339 = vunpack.c.h.b16 %v2288
      %v2340 = vunpack.c.l.b16 %v2289
      %v2341 = vunpack.c.l.b16 %v2290
      %v2342 = vunpack.c.h.b16 %v2290
      %v2343 = vunpack.c.l.b16 %v2291
      %v2344 = vunpack.c.l.b16 %v2292
      %v2345 = vunpack.c.h.b16 %v2292
      %v2346 = vunpack.c.l.b16 %v2293
      %v2347 = vunpack.c.l.b16 %v2294
      %v2348 = vunpack.c.h.b16 %v2294
      %v2349 = vunpack.c.l.b16 %v2295
      %v2350 = vunpack.c.l.b16 %v2296
      %v2351 = vunpack.c.h.b16 %v2296
      %v2352 = vunpack.c.l.b16 %v2297
      %v2353 = vpack.c.b16 %v2323, %v2320
      %v2354 = vpack.c.b16 %v2324, %v2321
      %v2355 = vpack.c.b16 %v2325, %v2322
      %v2356 = vpack.c.b16 %v2329, %v2326
      %v2357 = vpack.c.b16 %v2330, %v2327
      %v2358 = vpack.c.b16 %v2331, %v2328
      %v2359 = vpack.c.b16 %v2335, %v2332
      %v2360 = vpack.c.b16 %v2336, %v2333
      %v2361 = vpack.c.b16 %v2337, %v2334
      %v2362 = vpack.c.b16 %v2341, %v2338
      %v2363 = vpack.c.b16 %v2342, %v2339
      %v2364 = vpack.c.b16 %v2343, %v2340
      %v2365 = vpack.c.b16 %v2347, %v2344
      %v2366 = vpack.c.b16 %v2348, %v2345
      %v2367 = vpack.c.b16 %v2349, %v2346
      %v2368 = vpack.c.b16 %v2350, %v2350
      %v2369 = vpack.c.b16 %v2351, %v2351
      %v2370 = vpack.c.b16 %v2352, %v2352
      %vm2383 = vcmask 130048
      %v2385 = vsel %vm2383, %v2355, 0
      %v2388 = vsel %vm2383, %v2358, 0
      %v2391 = vsel %vm2383, %v2361, 0
      %v2394 = vsel %vm2383, %v2364, 0
      %v2397 = vsel %vm2383, %v2367, 0
      %v2400 = vsel %vm2383, %v2370, 0
      %2402 = vmatpush.bf16.msra.mxu0 %v2266
      %2403 = vmatpush.bf16.msra.mxu0 %v2265
      %2404 = vmatpush.bf16.msra.mxu0 %v2264
      %2405 = vmatpush.bf16.msra.mxu0 %v2263
      %2406 = vmatpush.bf16.msra.mxu0 %v2262
      %2407 = vmatpush.bf16.msra.mxu0 %v2261
      %2408 = vmatpush.bf16.msra.mxu0 %v2260
      %2409 = vmatpush.bf16.msra.mxu0 %v2259
      %2410 = vmatmul.bf16.gmra.mxu0 %v2353
      %v2411 = vpop.f32.mrf.mxu0
      %v2412 = vadd.f32 0.0, %v2411
      %v2413 = vpop.f32.mrf.mxu0
      %v2414 = vadd.f32 0.0, %v2413
      %2415 = vmatmul.bf16.gmra.mxu0 %v2356
      %v2416 = vpop.f32.mrf.mxu0
      %v2417 = vadd.f32 0.0, %v2416
      %v2418 = vpop.f32.mrf.mxu0
      %v2419 = vadd.f32 0.0, %v2418
      %2420 = vmatmul.bf16.gmra.mxu0 %v2359
      %v2421 = vpop.f32.mrf.mxu0
      %v2422 = vadd.f32 0.0, %v2421
      %v2423 = vpop.f32.mrf.mxu0
      %v2424 = vadd.f32 0.0, %v2423
      %2425 = vmatmul.bf16.gmra.mxu0 %v2362
      %v2426 = vpop.f32.mrf.mxu0
      %v2427 = vadd.f32 0.0, %v2426
      %v2428 = vpop.f32.mrf.mxu0
      %v2429 = vadd.f32 0.0, %v2428
      %2430 = vmatmul.bf16.gmra.mxu0 %v2365
      %v2431 = vpop.f32.mrf.mxu0
      %v2432 = vadd.f32 0.0, %v2431
      %v2433 = vpop.f32.mrf.mxu0
      %v2434 = vadd.f32 0.0, %v2433
      %2435 = vmatmul.bf16.gmra.mxu0 %v2368
      %v2436 = vpop.f32.mrf.mxu0
      %v2437 = vadd.f32 0.0, %v2436
      %v2438 = vpop.f32.mrf.mxu0
      %2439 = vdwg.mxu0
      %2440 = vmatpush.bf16.msra.mxu0 %v2274
      %2441 = vmatpush.bf16.msra.mxu0 %v2273
      %2442 = vmatpush.bf16.msra.mxu0 %v2272
      %2443 = vmatpush.bf16.msra.mxu0 %v2271
      %2444 = vmatpush.bf16.msra.mxu0 %v2270
      %2445 = vmatpush.bf16.msra.mxu0 %v2269
      %2446 = vmatpush.bf16.msra.mxu0 %v2268
      %2447 = vmatpush.bf16.msra.mxu0 %v2267
      %2448 = vmatmul.bf16.gmra.mxu0 %v2354
      %v2449 = vpop.f32.mrf.mxu0
      %v2450 = vadd.f32 %v2412, %v2449
      %v2451 = vpop.f32.mrf.mxu0
      %v2452 = vadd.f32 %v2414, %v2451
      %2453 = vmatmul.bf16.gmra.mxu0 %v2357
      %v2454 = vpop.f32.mrf.mxu0
      %v2455 = vadd.f32 %v2417, %v2454
      %v2456 = vpop.f32.mrf.mxu0
      %v2457 = vadd.f32 %v2419, %v2456
      %2458 = vmatmul.bf16.gmra.mxu0 %v2360
      %v2459 = vpop.f32.mrf.mxu0
      %v2460 = vadd.f32 %v2422, %v2459
      %v2461 = vpop.f32.mrf.mxu0
      %v2462 = vadd.f32 %v2424, %v2461
      %2463 = vmatmul.bf16.gmra.mxu0 %v2363
      %v2464 = vpop.f32.mrf.mxu0
      %v2465 = vadd.f32 %v2427, %v2464
      %v2466 = vpop.f32.mrf.mxu0
      %v2467 = vadd.f32 %v2429, %v2466
      %2468 = vmatmul.bf16.gmra.mxu0 %v2366
      %v2469 = vpop.f32.mrf.mxu0
      %v2470 = vadd.f32 %v2432, %v2469
      %v2471 = vpop.f32.mrf.mxu0
      %v2472 = vadd.f32 %v2434, %v2471
      %2473 = vmatmul.bf16.gmra.mxu0 %v2369
      %v2474 = vpop.f32.mrf.mxu0
      %v2475 = vadd.f32 %v2437, %v2474
      %v2476 = vpop.f32.mrf.mxu0
      %2477 = vdwg.mxu0
      %2478 = vmatpush.bf16.msra.mxu0 0
      %2479 = vmatpush.bf16.msra.mxu0 0
      %2480 = vmatpush.bf16.msra.mxu0 0
      %2481 = vmatpush.bf16.msra.mxu0 0
      %2482 = vmatpush.bf16.msra.mxu0 0
      %2483 = vmatpush.bf16.msra.mxu0 0
      %2484 = vmatpush.bf16.msra.mxu0 0
      %2485 = vmatpush.bf16.msra.mxu0 %v2275
      %2486 = vmatmul.bf16.gmra.mxu0 %v2385
      %v2487 = vpop.f32.mrf.mxu0
      %v2488 = vadd.f32 %v2450, %v2487
      %v2489 = vpop.f32.mrf.mxu0
      %v2490 = vadd.f32 %v2452, %v2489
      %2491 = vmatmul.bf16.gmra.mxu0 %v2388
      %v2492 = vpop.f32.mrf.mxu0
      %v2493 = vadd.f32 %v2455, %v2492
      %v2494 = vpop.f32.mrf.mxu0
      %v2495 = vadd.f32 %v2457, %v2494
      %2496 = vmatmul.bf16.gmra.mxu0 %v2391
      %v2497 = vpop.f32.mrf.mxu0
      %v2498 = vadd.f32 %v2460, %v2497
      %v2499 = vpop.f32.mrf.mxu0
      %v2500 = vadd.f32 %v2462, %v2499
      %2501 = vmatmul.bf16.gmra.mxu0 %v2394
      %v2502 = vpop.f32.mrf.mxu0
      %v2503 = vadd.f32 %v2465, %v2502
      %v2504 = vpop.f32.mrf.mxu0
      %v2505 = vadd.f32 %v2467, %v2504
      %2506 = vmatmul.bf16.gmra.mxu0 %v2397
      %v2507 = vpop.f32.mrf.mxu0
      %v2508 = vadd.f32 %v2470, %v2507
      %v2509 = vpop.f32.mrf.mxu0
      %v2510 = vadd.f32 %v2472, %v2509
      %2511 = vmatmul.bf16.gmra.mxu0 %v2400
      %v2512 = vpop.f32.mrf.mxu0
      %v2513 = vadd.f32 %v2475, %v2512
      %v2514 = vpop.f32.mrf.mxu0
      %2515 = vdwg.mxu0
      %s2516 = scalar_lea.vmem %s3, 132
      %v2517 = vld [vmem:[%s2516] sm:$0xff]
      %v2518 = vld [vmem:[%s2516 + $0x8] sm:$0xf]
      %v2519 = vld [vmem:[%s2516 + $0xc] sm:$0xff]
      %v2520 = vld [vmem:[%s2516 + $0x14] sm:$0xf]
      %v2521 = vld [vmem:[%s2516 + $0x18] sm:$0xff]
      %v2522 = vld [vmem:[%s2516 + $0x20] sm:$0xf]
      %v2523 = vld [vmem:[%s2516 + $0x24] sm:$0xff]
      %v2524 = vld [vmem:[%s2516 + $0x2c] sm:$0xf]
      %v2525 = vld [vmem:[%s2516 + $0x30] sm:$0xff]
      %v2526 = vld [vmem:[%s2516 + $0x38] sm:$0xf]
      %v2527 = vld [vmem:[%s2516 + $0x3c] sm:$0xff]
      %v2528 = vld [vmem:[%s2516 + $0x44] sm:$0xf]
      %v2529 = vld [vmem:[%s2516 + $0x48] sm:$0xff]
      %v2530 = vld [vmem:[%s2516 + $0x50] sm:$0xf]
      %v2531 = vld [vmem:[%s2516 + $0x54] sm:$0xff]
      %v2532 = vld [vmem:[%s2516 + $0x5c] sm:$0xf]
      %v2533 = vld [vmem:[%s2516 + $0x60] sm:$0xff]
      %v2534 = vld [vmem:[%s2516 + $0x68] sm:$0xf]
      %v2535 = vld [vmem:[%s2516 + $0x6c] sm:$0xff]
      %v2536 = vld [vmem:[%s2516 + $0x74] sm:$0xf]
      %v2537 = vld [vmem:[%s2516 + $0x78] sm:$0xff]
      %v2538 = vld [vmem:[%s2516 + $0x80] sm:$0xf]
      %v2561 = vunpack.c.l.b16 %v2517
      %v2562 = vunpack.c.h.b16 %v2517
      %v2563 = vunpack.c.l.b16 %v2518
      %v2564 = vunpack.c.l.b16 %v2519
      %v2565 = vunpack.c.h.b16 %v2519
      %v2566 = vunpack.c.l.b16 %v2520
      %v2567 = vunpack.c.l.b16 %v2521
      %v2568 = vunpack.c.h.b16 %v2521
      %v2569 = vunpack.c.l.b16 %v2522
      %v2570 = vunpack.c.l.b16 %v2523
      %v2571 = vunpack.c.h.b16 %v2523
      %v2572 = vunpack.c.l.b16 %v2524
      %v2573 = vunpack.c.l.b16 %v2525
      %v2574 = vunpack.c.h.b16 %v2525
      %v2575 = vunpack.c.l.b16 %v2526
      %v2576 = vunpack.c.l.b16 %v2527
      %v2577 = vunpack.c.h.b16 %v2527
      %v2578 = vunpack.c.l.b16 %v2528
      %v2579 = vunpack.c.l.b16 %v2529
      %v2580 = vunpack.c.h.b16 %v2529
      %v2581 = vunpack.c.l.b16 %v2530
      %v2582 = vunpack.c.l.b16 %v2531
      %v2583 = vunpack.c.h.b16 %v2531
      %v2584 = vunpack.c.l.b16 %v2532
      %v2585 = vunpack.c.l.b16 %v2533
      %v2586 = vunpack.c.h.b16 %v2533
      %v2587 = vunpack.c.l.b16 %v2534
      %v2588 = vunpack.c.l.b16 %v2535
      %v2589 = vunpack.c.h.b16 %v2535
      %v2590 = vunpack.c.l.b16 %v2536
      %v2591 = vunpack.c.l.b16 %v2537
      %v2592 = vunpack.c.h.b16 %v2537
      %v2593 = vunpack.c.l.b16 %v2538
      %v2594 = vpack.c.b16 %v2564, %v2561
      %v2595 = vpack.c.b16 %v2565, %v2562
      %v2596 = vpack.c.b16 %v2566, %v2563
      %v2597 = vpack.c.b16 %v2570, %v2567
      %v2598 = vpack.c.b16 %v2571, %v2568
      %v2599 = vpack.c.b16 %v2572, %v2569
      %v2600 = vpack.c.b16 %v2576, %v2573
      %v2601 = vpack.c.b16 %v2577, %v2574
      %v2602 = vpack.c.b16 %v2578, %v2575
      %v2603 = vpack.c.b16 %v2582, %v2579
      %v2604 = vpack.c.b16 %v2583, %v2580
      %v2605 = vpack.c.b16 %v2584, %v2581
      %v2606 = vpack.c.b16 %v2588, %v2585
      %v2607 = vpack.c.b16 %v2589, %v2586
      %v2608 = vpack.c.b16 %v2590, %v2587
      %v2609 = vpack.c.b16 %v2591, %v2591
      %v2610 = vpack.c.b16 %v2592, %v2592
      %v2611 = vpack.c.b16 %v2593, %v2593
      %v2625 = vsel %vm2383, %v2596, 0
      %v2628 = vsel %vm2383, %v2599, 0
      %v2631 = vsel %vm2383, %v2602, 0
      %v2634 = vsel %vm2383, %v2605, 0
      %v2637 = vsel %vm2383, %v2608, 0
      %v2640 = vsel %vm2383, %v2611, 0
      %2642 = vmatpush.bf16.msra.mxu0 %v2266
      %2643 = vmatpush.bf16.msra.mxu0 %v2265
      %2644 = vmatpush.bf16.msra.mxu0 %v2264
      %2645 = vmatpush.bf16.msra.mxu0 %v2263
      %2646 = vmatpush.bf16.msra.mxu0 %v2262
      %2647 = vmatpush.bf16.msra.mxu0 %v2261
      %2648 = vmatpush.bf16.msra.mxu0 %v2260
      %2649 = vmatpush.bf16.msra.mxu0 %v2259
      %2650 = vmatmul.bf16.gmra.mxu0 %v2594
      %v2651 = vpop.f32.mrf.mxu0
      %v2652 = vadd.f32 0.0, %v2651
      %v2653 = vpop.f32.mrf.mxu0
      %v2654 = vadd.f32 0.0, %v2653
      %2655 = vmatmul.bf16.gmra.mxu0 %v2597
      %v2656 = vpop.f32.mrf.mxu0
      %v2657 = vadd.f32 0.0, %v2656
      %v2658 = vpop.f32.mrf.mxu0
      %v2659 = vadd.f32 0.0, %v2658
      %2660 = vmatmul.bf16.gmra.mxu0 %v2600
      %v2661 = vpop.f32.mrf.mxu0
      %v2662 = vadd.f32 0.0, %v2661
      %v2663 = vpop.f32.mrf.mxu0
      %v2664 = vadd.f32 0.0, %v2663
      %2665 = vmatmul.bf16.gmra.mxu0 %v2603
      %v2666 = vpop.f32.mrf.mxu0
      %v2667 = vadd.f32 0.0, %v2666
      %v2668 = vpop.f32.mrf.mxu0
      %v2669 = vadd.f32 0.0, %v2668
      %2670 = vmatmul.bf16.gmra.mxu0 %v2606
      %v2671 = vpop.f32.mrf.mxu0
      %v2672 = vadd.f32 0.0, %v2671
      %v2673 = vpop.f32.mrf.mxu0
      %v2674 = vadd.f32 0.0, %v2673
      %2675 = vmatmul.bf16.gmra.mxu0 %v2609
      %v2676 = vpop.f32.mrf.mxu0
      %v2677 = vadd.f32 0.0, %v2676
      %v2678 = vpop.f32.mrf.mxu0
      %2679 = vdwg.mxu0
      %2680 = vmatpush.bf16.msra.mxu0 %v2274
      %2681 = vmatpush.bf16.msra.mxu0 %v2273
      %2682 = vmatpush.bf16.msra.mxu0 %v2272
      %2683 = vmatpush.bf16.msra.mxu0 %v2271
      %2684 = vmatpush.bf16.msra.mxu0 %v2270
      %2685 = vmatpush.bf16.msra.mxu0 %v2269
      %2686 = vmatpush.bf16.msra.mxu0 %v2268
      %2687 = vmatpush.bf16.msra.mxu0 %v2267
      %2688 = vmatmul.bf16.gmra.mxu0 %v2595
      %v2689 = vpop.f32.mrf.mxu0
      %v2690 = vadd.f32 %v2652, %v2689
      %v2691 = vpop.f32.mrf.mxu0
      %v2692 = vadd.f32 %v2654, %v2691
      %2693 = vmatmul.bf16.gmra.mxu0 %v2598
      %v2694 = vpop.f32.mrf.mxu0
      %v2695 = vadd.f32 %v2657, %v2694
      %v2696 = vpop.f32.mrf.mxu0
      %v2697 = vadd.f32 %v2659, %v2696
      %2698 = vmatmul.bf16.gmra.mxu0 %v2601
      %v2699 = vpop.f32.mrf.mxu0
      %v2700 = vadd.f32 %v2662, %v2699
      %v2701 = vpop.f32.mrf.mxu0
      %v2702 = vadd.f32 %v2664, %v2701
      %2703 = vmatmul.bf16.gmra.mxu0 %v2604
      %v2704 = vpop.f32.mrf.mxu0
      %v2705 = vadd.f32 %v2667, %v2704
      %v2706 = vpop.f32.mrf.mxu0
      %v2707 = vadd.f32 %v2669, %v2706
      %2708 = vmatmul.bf16.gmra.mxu0 %v2607
      %v2709 = vpop.f32.mrf.mxu0
      %v2710 = vadd.f32 %v2672, %v2709
      %v2711 = vpop.f32.mrf.mxu0
      %v2712 = vadd.f32 %v2674, %v2711
      %2713 = vmatmul.bf16.gmra.mxu0 %v2610
      %v2714 = vpop.f32.mrf.mxu0
      %v2715 = vadd.f32 %v2677, %v2714
      %v2716 = vpop.f32.mrf.mxu0
      %2717 = vdwg.mxu0
      %2718 = vmatpush.bf16.msra.mxu0 0
      %2719 = vmatpush.bf16.msra.mxu0 0
      %2720 = vmatpush.bf16.msra.mxu0 0
      %2721 = vmatpush.bf16.msra.mxu0 0
      %2722 = vmatpush.bf16.msra.mxu0 0
      %2723 = vmatpush.bf16.msra.mxu0 0
      %2724 = vmatpush.bf16.msra.mxu0 0
      %2725 = vmatpush.bf16.msra.mxu0 %v2275
      %2726 = vmatmul.bf16.gmra.mxu0 %v2625
      %v2727 = vpop.f32.mrf.mxu0
      %v2728 = vadd.f32 %v2690, %v2727
      %v2729 = vpop.f32.mrf.mxu0
      %v2730 = vadd.f32 %v2692, %v2729
      %2731 = vmatmul.bf16.gmra.mxu0 %v2628
      %v2732 = vpop.f32.mrf.mxu0
      %v2733 = vadd.f32 %v2695, %v2732
      %v2734 = vpop.f32.mrf.mxu0
      %v2735 = vadd.f32 %v2697, %v2734
      %2736 = vmatmul.bf16.gmra.mxu0 %v2631
      %v2737 = vpop.f32.mrf.mxu0
      %v2738 = vadd.f32 %v2700, %v2737
      %v2739 = vpop.f32.mrf.mxu0
      %v2740 = vadd.f32 %v2702, %v2739
      %2741 = vmatmul.bf16.gmra.mxu0 %v2634
      %v2742 = vpop.f32.mrf.mxu0
      %v2743 = vadd.f32 %v2705, %v2742
      %v2744 = vpop.f32.mrf.mxu0
      %v2745 = vadd.f32 %v2707, %v2744
      %2746 = vmatmul.bf16.gmra.mxu0 %v2637
      %v2747 = vpop.f32.mrf.mxu0
      %v2748 = vadd.f32 %v2710, %v2747
      %v2749 = vpop.f32.mrf.mxu0
      %v2750 = vadd.f32 %v2712, %v2749
      %2751 = vmatmul.bf16.gmra.mxu0 %v2640
      %v2752 = vpop.f32.mrf.mxu0
      %v2753 = vadd.f32 %v2715, %v2752
      %v2754 = vpop.f32.mrf.mxu0
      %2755 = vdwg.mxu0
      %s2756 = scalar_lea.vmem %s3, 264
      %v2757 = vld [vmem:[%s2756] sm:$0xff]
      %v2758 = vld [vmem:[%s2756 + $0x8] sm:$0xf]
      %v2759 = vld [vmem:[%s2756 + $0xc] sm:$0xff]
      %v2760 = vld [vmem:[%s2756 + $0x14] sm:$0xf]
      %v2761 = vld [vmem:[%s2756 + $0x18] sm:$0xff]
      %v2762 = vld [vmem:[%s2756 + $0x20] sm:$0xf]
      %v2763 = vld [vmem:[%s2756 + $0x24] sm:$0xff]
      %v2764 = vld [vmem:[%s2756 + $0x2c] sm:$0xf]
      %v2765 = vld [vmem:[%s2756 + $0x30] sm:$0xff]
      %v2766 = vld [vmem:[%s2756 + $0x38] sm:$0xf]
      %v2767 = vld [vmem:[%s2756 + $0x3c] sm:$0xff]
      %v2768 = vld [vmem:[%s2756 + $0x44] sm:$0xf]
      %v2769 = vld [vmem:[%s2756 + $0x48] sm:$0xff]
      %v2770 = vld [vmem:[%s2756 + $0x50] sm:$0xf]
      %v2771 = vld [vmem:[%s2756 + $0x54] sm:$0xff]
      %v2772 = vld [vmem:[%s2756 + $0x5c] sm:$0xf]
      %v2773 = vld [vmem:[%s2756 + $0x60] sm:$0xff]
      %v2774 = vld [vmem:[%s2756 + $0x68] sm:$0xf]
      %v2775 = vld [vmem:[%s2756 + $0x6c] sm:$0xff]
      %v2776 = vld [vmem:[%s2756 + $0x74] sm:$0xf]
      %v2777 = vld [vmem:[%s2756 + $0x78] sm:$0xff]
      %v2778 = vld [vmem:[%s2756 + $0x80] sm:$0xf]
      %v2801 = vunpack.c.l.b16 %v2757
      %v2802 = vunpack.c.h.b16 %v2757
      %v2803 = vunpack.c.l.b16 %v2758
      %v2804 = vunpack.c.l.b16 %v2759
      %v2805 = vunpack.c.h.b16 %v2759
      %v2806 = vunpack.c.l.b16 %v2760
      %v2807 = vunpack.c.l.b16 %v2761
      %v2808 = vunpack.c.h.b16 %v2761
      %v2809 = vunpack.c.l.b16 %v2762
      %v2810 = vunpack.c.l.b16 %v2763
      %v2811 = vunpack.c.h.b16 %v2763
      %v2812 = vunpack.c.l.b16 %v2764
      %v2813 = vunpack.c.l.b16 %v2765
      %v2814 = vunpack.c.h.b16 %v2765
      %v2815 = vunpack.c.l.b16 %v2766
      %v2816 = vunpack.c.l.b16 %v2767
      %v2817 = vunpack.c.h.b16 %v2767
      %v2818 = vunpack.c.l.b16 %v2768
      %v2819 = vunpack.c.l.b16 %v2769
      %v2820 = vunpack.c.h.b16 %v2769
      %v2821 = vunpack.c.l.b16 %v2770
      %v2822 = vunpack.c.l.b16 %v2771
      %v2823 = vunpack.c.h.b16 %v2771
      %v2824 = vunpack.c.l.b16 %v2772
      %v2825 = vunpack.c.l.b16 %v2773
      %v2826 = vunpack.c.h.b16 %v2773
      %v2827 = vunpack.c.l.b16 %v2774
      %v2828 = vunpack.c.l.b16 %v2775
      %v2829 = vunpack.c.h.b16 %v2775
      %v2830 = vunpack.c.l.b16 %v2776
      %v2831 = vunpack.c.l.b16 %v2777
      %v2832 = vunpack.c.h.b16 %v2777
      %v2833 = vunpack.c.l.b16 %v2778
      %v2834 = vpack.c.b16 %v2804, %v2801
      %v2835 = vpack.c.b16 %v2805, %v2802
      %v2836 = vpack.c.b16 %v2806, %v2803
      %v2837 = vpack.c.b16 %v2810, %v2807
      %v2838 = vpack.c.b16 %v2811, %v2808
      %v2839 = vpack.c.b16 %v2812, %v2809
      %v2840 = vpack.c.b16 %v2816, %v2813
      %v2841 = vpack.c.b16 %v2817, %v2814
      %v2842 = vpack.c.b16 %v2818, %v2815
      %v2843 = vpack.c.b16 %v2822, %v2819
      %v2844 = vpack.c.b16 %v2823, %v2820
      %v2845 = vpack.c.b16 %v2824, %v2821
      %v2846 = vpack.c.b16 %v2828, %v2825
      %v2847 = vpack.c.b16 %v2829, %v2826
      %v2848 = vpack.c.b16 %v2830, %v2827
      %v2849 = vpack.c.b16 %v2831, %v2831
      %v2850 = vpack.c.b16 %v2832, %v2832
      %v2851 = vpack.c.b16 %v2833, %v2833
      %v2865 = vsel %vm2383, %v2836, 0
      %v2868 = vsel %vm2383, %v2839, 0
      %v2871 = vsel %vm2383, %v2842, 0
      %v2874 = vsel %vm2383, %v2845, 0
      %v2877 = vsel %vm2383, %v2848, 0
      %v2880 = vsel %vm2383, %v2851, 0
      %2882 = vmatpush.bf16.msra.mxu0 %v2266
      %2883 = vmatpush.bf16.msra.mxu0 %v2265
      %2884 = vmatpush.bf16.msra.mxu0 %v2264
      %2885 = vmatpush.bf16.msra.mxu0 %v2263
      %2886 = vmatpush.bf16.msra.mxu0 %v2262
      %2887 = vmatpush.bf16.msra.mxu0 %v2261
      %2888 = vmatpush.bf16.msra.mxu0 %v2260
      %2889 = vmatpush.bf16.msra.mxu0 %v2259
      %2890 = vmatmul.bf16.gmra.mxu0 %v2834
      %v2891 = vpop.f32.mrf.mxu0
      %v2892 = vadd.f32 0.0, %v2891
      %v2893 = vpop.f32.mrf.mxu0
      %v2894 = vadd.f32 0.0, %v2893
      %2895 = vmatmul.bf16.gmra.mxu0 %v2837
      %v2896 = vpop.f32.mrf.mxu0
      %v2897 = vadd.f32 0.0, %v2896
      %v2898 = vpop.f32.mrf.mxu0
      %v2899 = vadd.f32 0.0, %v2898
      %2900 = vmatmul.bf16.gmra.mxu0 %v2840
      %v2901 = vpop.f32.mrf.mxu0
      %v2902 = vadd.f32 0.0, %v2901
      %v2903 = vpop.f32.mrf.mxu0
      %v2904 = vadd.f32 0.0, %v2903
      %2905 = vmatmul.bf16.gmra.mxu0 %v2843
      %v2906 = vpop.f32.mrf.mxu0
      %v2907 = vadd.f32 0.0, %v2906
      %v2908 = vpop.f32.mrf.mxu0
      %v2909 = vadd.f32 0.0, %v2908
      %2910 = vmatmul.bf16.gmra.mxu0 %v2846
      %v2911 = vpop.f32.mrf.mxu0
      %v2912 = vadd.f32 0.0, %v2911
      %v2913 = vpop.f32.mrf.mxu0
      %v2914 = vadd.f32 0.0, %v2913
      %2915 = vmatmul.bf16.gmra.mxu0 %v2849
      %v2916 = vpop.f32.mrf.mxu0
      %v2917 = vadd.f32 0.0, %v2916
      %v2918 = vpop.f32.mrf.mxu0
      %2919 = vdwg.mxu0
      %2920 = vmatpush.bf16.msra.mxu0 %v2274
      %2921 = vmatpush.bf16.msra.mxu0 %v2273
      %2922 = vmatpush.bf16.msra.mxu0 %v2272
      %2923 = vmatpush.bf16.msra.mxu0 %v2271
      %2924 = vmatpush.bf16.msra.mxu0 %v2270
      %2925 = vmatpush.bf16.msra.mxu0 %v2269
      %2926 = vmatpush.bf16.msra.mxu0 %v2268
      %2927 = vmatpush.bf16.msra.mxu0 %v2267
      %2928 = vmatmul.bf16.gmra.mxu0 %v2835
      %v2929 = vpop.f32.mrf.mxu0
      %v2930 = vadd.f32 %v2892, %v2929
      %v2931 = vpop.f32.mrf.mxu0
      %v2932 = vadd.f32 %v2894, %v2931
      %2933 = vmatmul.bf16.gmra.mxu0 %v2838
      %v2934 = vpop.f32.mrf.mxu0
      %v2935 = vadd.f32 %v2897, %v2934
      %v2936 = vpop.f32.mrf.mxu0
      %v2937 = vadd.f32 %v2899, %v2936
      %2938 = vmatmul.bf16.gmra.mxu0 %v2841
      %v2939 = vpop.f32.mrf.mxu0
      %v2940 = vadd.f32 %v2902, %v2939
      %v2941 = vpop.f32.mrf.mxu0
      %v2942 = vadd.f32 %v2904, %v2941
      %2943 = vmatmul.bf16.gmra.mxu0 %v2844
      %v2944 = vpop.f32.mrf.mxu0
      %v2945 = vadd.f32 %v2907, %v2944
      %v2946 = vpop.f32.mrf.mxu0
      %v2947 = vadd.f32 %v2909, %v2946
      %2948 = vmatmul.bf16.gmra.mxu0 %v2847
      %v2949 = vpop.f32.mrf.mxu0
      %v2950 = vadd.f32 %v2912, %v2949
      %v2951 = vpop.f32.mrf.mxu0
      %v2952 = vadd.f32 %v2914, %v2951
      %2953 = vmatmul.bf16.gmra.mxu0 %v2850
      %v2954 = vpop.f32.mrf.mxu0
      %v2955 = vadd.f32 %v2917, %v2954
      %v2956 = vpop.f32.mrf.mxu0
      %2957 = vdwg.mxu0
      %2958 = vmatpush.bf16.msra.mxu0 0
      %2959 = vmatpush.bf16.msra.mxu0 0
      %2960 = vmatpush.bf16.msra.mxu0 0
      %2961 = vmatpush.bf16.msra.mxu0 0
      %2962 = vmatpush.bf16.msra.mxu0 0
      %2963 = vmatpush.bf16.msra.mxu0 0
      %2964 = vmatpush.bf16.msra.mxu0 0
      %2965 = vmatpush.bf16.msra.mxu0 %v2275
      %2966 = vmatmul.bf16.gmra.mxu0 %v2865
      %v2967 = vpop.f32.mrf.mxu0
      %v2968 = vadd.f32 %v2930, %v2967
      %v2969 = vpop.f32.mrf.mxu0
      %v2970 = vadd.f32 %v2932, %v2969
      %2971 = vmatmul.bf16.gmra.mxu0 %v2868
      %v2972 = vpop.f32.mrf.mxu0
      %v2973 = vadd.f32 %v2935, %v2972
      %v2974 = vpop.f32.mrf.mxu0
      %v2975 = vadd.f32 %v2937, %v2974
      %2976 = vmatmul.bf16.gmra.mxu0 %v2871
      %v2977 = vpop.f32.mrf.mxu0
      %v2978 = vadd.f32 %v2940, %v2977
      %v2979 = vpop.f32.mrf.mxu0
      %v2980 = vadd.f32 %v2942, %v2979
      %2981 = vmatmul.bf16.gmra.mxu0 %v2874
      %v2982 = vpop.f32.mrf.mxu0
      %v2983 = vadd.f32 %v2945, %v2982
      %v2984 = vpop.f32.mrf.mxu0
      %v2985 = vadd.f32 %v2947, %v2984
      %2986 = vmatmul.bf16.gmra.mxu0 %v2877
      %v2987 = vpop.f32.mrf.mxu0
      %v2988 = vadd.f32 %v2950, %v2987
      %v2989 = vpop.f32.mrf.mxu0
      %v2990 = vadd.f32 %v2952, %v2989
      %2991 = vmatmul.bf16.gmra.mxu0 %v2880
      %v2992 = vpop.f32.mrf.mxu0
      %v2993 = vadd.f32 %v2955, %v2992
      %v2994 = vpop.f32.mrf.mxu0
      %2995 = vdwg.mxu0
      %s2996 = scalar_lea.vmem %s3, 396
      %v2997 = vld [vmem:[%s2996] sm:$0xff]
      %v2998 = vld [vmem:[%s2996 + $0x8] sm:$0xf]
      %v2999 = vld [vmem:[%s2996 + $0xc] sm:$0xff]
      %v3000 = vld [vmem:[%s2996 + $0x14] sm:$0xf]
      %v3001 = vld [vmem:[%s2996 + $0x18] sm:$0xff]
      %v3002 = vld [vmem:[%s2996 + $0x20] sm:$0xf]
      %v3003 = vld [vmem:[%s2996 + $0x24] sm:$0xff]
      %v3004 = vld [vmem:[%s2996 + $0x2c] sm:$0xf]
      %v3005 = vld [vmem:[%s2996 + $0x30] sm:$0xff]
      %v3006 = vld [vmem:[%s2996 + $0x38] sm:$0xf]
      %v3007 = vld [vmem:[%s2996 + $0x3c] sm:$0xff]
      %v3008 = vld [vmem:[%s2996 + $0x44] sm:$0xf]
      %v3009 = vld [vmem:[%s2996 + $0x48] sm:$0xff]
      %v3010 = vld [vmem:[%s2996 + $0x50] sm:$0xf]
      %v3011 = vld [vmem:[%s2996 + $0x54] sm:$0xff]
      %v3012 = vld [vmem:[%s2996 + $0x5c] sm:$0xf]
      %v3013 = vld [vmem:[%s2996 + $0x60] sm:$0xff]
      %v3014 = vld [vmem:[%s2996 + $0x68] sm:$0xf]
      %v3015 = vld [vmem:[%s2996 + $0x6c] sm:$0xff]
      %v3016 = vld [vmem:[%s2996 + $0x74] sm:$0xf]
      %v3017 = vld [vmem:[%s2996 + $0x78] sm:$0xff]
      %v3018 = vld [vmem:[%s2996 + $0x80] sm:$0xf]
      %v3041 = vunpack.c.l.b16 %v2997
      %v3042 = vunpack.c.h.b16 %v2997
      %v3043 = vunpack.c.l.b16 %v2998
      %v3044 = vunpack.c.l.b16 %v2999
      %v3045 = vunpack.c.h.b16 %v2999
      %v3046 = vunpack.c.l.b16 %v3000
      %v3047 = vunpack.c.l.b16 %v3001
      %v3048 = vunpack.c.h.b16 %v3001
      %v3049 = vunpack.c.l.b16 %v3002
      %v3050 = vunpack.c.l.b16 %v3003
      %v3051 = vunpack.c.h.b16 %v3003
      %v3052 = vunpack.c.l.b16 %v3004
      %v3053 = vunpack.c.l.b16 %v3005
      %v3054 = vunpack.c.h.b16 %v3005
      %v3055 = vunpack.c.l.b16 %v3006
      %v3056 = vunpack.c.l.b16 %v3007
      %v3057 = vunpack.c.h.b16 %v3007
      %v3058 = vunpack.c.l.b16 %v3008
      %v3059 = vunpack.c.l.b16 %v3009
      %v3060 = vunpack.c.h.b16 %v3009
      %v3061 = vunpack.c.l.b16 %v3010
      %v3062 = vunpack.c.l.b16 %v3011
      %v3063 = vunpack.c.h.b16 %v3011
      %v3064 = vunpack.c.l.b16 %v3012
      %v3065 = vunpack.c.l.b16 %v3013
      %v3066 = vunpack.c.h.b16 %v3013
      %v3067 = vunpack.c.l.b16 %v3014
      %v3068 = vunpack.c.l.b16 %v3015
      %v3069 = vunpack.c.h.b16 %v3015
      %v3070 = vunpack.c.l.b16 %v3016
      %v3071 = vunpack.c.l.b16 %v3017
      %v3072 = vunpack.c.h.b16 %v3017
      %v3073 = vunpack.c.l.b16 %v3018
      %v3074 = vpack.c.b16 %v3044, %v3041
      %v3075 = vpack.c.b16 %v3045, %v3042
      %v3076 = vpack.c.b16 %v3046, %v3043
      %v3077 = vpack.c.b16 %v3050, %v3047
      %v3078 = vpack.c.b16 %v3051, %v3048
      %v3079 = vpack.c.b16 %v3052, %v3049
      %v3080 = vpack.c.b16 %v3056, %v3053
      %v3081 = vpack.c.b16 %v3057, %v3054
      %v3082 = vpack.c.b16 %v3058, %v3055
      %v3083 = vpack.c.b16 %v3062, %v3059
      %v3084 = vpack.c.b16 %v3063, %v3060
      %v3085 = vpack.c.b16 %v3064, %v3061
      %v3086 = vpack.c.b16 %v3068, %v3065
      %v3087 = vpack.c.b16 %v3069, %v3066
      %v3088 = vpack.c.b16 %v3070, %v3067
      %v3089 = vpack.c.b16 %v3071, %v3071
      %v3090 = vpack.c.b16 %v3072, %v3072
      %v3091 = vpack.c.b16 %v3073, %v3073
      %v3105 = vsel %vm2383, %v3076, 0
      %v3108 = vsel %vm2383, %v3079, 0
      %v3111 = vsel %vm2383, %v3082, 0
      %v3114 = vsel %vm2383, %v3085, 0
      %v3117 = vsel %vm2383, %v3088, 0
      %v3120 = vsel %vm2383, %v3091, 0
      %3122 = vmatpush.bf16.msra.mxu0 %v2266
      %3123 = vmatpush.bf16.msra.mxu0 %v2265
      %3124 = vmatpush.bf16.msra.mxu0 %v2264
      %3125 = vmatpush.bf16.msra.mxu0 %v2263
      %3126 = vmatpush.bf16.msra.mxu0 %v2262
      %3127 = vmatpush.bf16.msra.mxu0 %v2261
      %3128 = vmatpush.bf16.msra.mxu0 %v2260
      %3129 = vmatpush.bf16.msra.mxu0 %v2259
      %3130 = vmatmul.bf16.gmra.mxu0 %v3074
      %v3131 = vpop.f32.mrf.mxu0
      %v3132 = vadd.f32 0.0, %v3131
      %v3133 = vpop.f32.mrf.mxu0
      %v3134 = vadd.f32 0.0, %v3133
      %3135 = vmatmul.bf16.gmra.mxu0 %v3077
      %v3136 = vpop.f32.mrf.mxu0
      %v3137 = vadd.f32 0.0, %v3136
      %v3138 = vpop.f32.mrf.mxu0
      %v3139 = vadd.f32 0.0, %v3138
      %3140 = vmatmul.bf16.gmra.mxu0 %v3080
      %v3141 = vpop.f32.mrf.mxu0
      %v3142 = vadd.f32 0.0, %v3141
      %v3143 = vpop.f32.mrf.mxu0
      %v3144 = vadd.f32 0.0, %v3143
      %3145 = vmatmul.bf16.gmra.mxu0 %v3083
      %v3146 = vpop.f32.mrf.mxu0
      %v3147 = vadd.f32 0.0, %v3146
      %v3148 = vpop.f32.mrf.mxu0
      %v3149 = vadd.f32 0.0, %v3148
      %3150 = vmatmul.bf16.gmra.mxu0 %v3086
      %v3151 = vpop.f32.mrf.mxu0
      %v3152 = vadd.f32 0.0, %v3151
      %v3153 = vpop.f32.mrf.mxu0
      %v3154 = vadd.f32 0.0, %v3153
      %3155 = vmatmul.bf16.gmra.mxu0 %v3089
      %v3156 = vpop.f32.mrf.mxu0
      %v3157 = vadd.f32 0.0, %v3156
      %v3158 = vpop.f32.mrf.mxu0
      %3159 = vdwg.mxu0
      %3160 = vmatpush.bf16.msra.mxu0 %v2274
      %3161 = vmatpush.bf16.msra.mxu0 %v2273
      %3162 = vmatpush.bf16.msra.mxu0 %v2272
      %3163 = vmatpush.bf16.msra.mxu0 %v2271
      %3164 = vmatpush.bf16.msra.mxu0 %v2270
      %3165 = vmatpush.bf16.msra.mxu0 %v2269
      %3166 = vmatpush.bf16.msra.mxu0 %v2268
      %3167 = vmatpush.bf16.msra.mxu0 %v2267
      %3168 = vmatmul.bf16.gmra.mxu0 %v3075
      %v3169 = vpop.f32.mrf.mxu0
      %v3170 = vadd.f32 %v3132, %v3169
      %v3171 = vpop.f32.mrf.mxu0
      %v3172 = vadd.f32 %v3134, %v3171
      %3173 = vmatmul.bf16.gmra.mxu0 %v3078
      %v3174 = vpop.f32.mrf.mxu0
      %v3175 = vadd.f32 %v3137, %v3174
      %v3176 = vpop.f32.mrf.mxu0
      %v3177 = vadd.f32 %v3139, %v3176
      %3178 = vmatmul.bf16.gmra.mxu0 %v3081
      %v3179 = vpop.f32.mrf.mxu0
      %v3180 = vadd.f32 %v3142, %v3179
      %v3181 = vpop.f32.mrf.mxu0
      %v3182 = vadd.f32 %v3144, %v3181
      %3183 = vmatmul.bf16.gmra.mxu0 %v3084
      %v3184 = vpop.f32.mrf.mxu0
      %v3185 = vadd.f32 %v3147, %v3184
      %v3186 = vpop.f32.mrf.mxu0
      %v3187 = vadd.f32 %v3149, %v3186
      %3188 = vmatmul.bf16.gmra.mxu0 %v3087
      %v3189 = vpop.f32.mrf.mxu0
      %v3190 = vadd.f32 %v3152, %v3189
      %v3191 = vpop.f32.mrf.mxu0
      %v3192 = vadd.f32 %v3154, %v3191
      %3193 = vmatmul.bf16.gmra.mxu0 %v3090
      %v3194 = vpop.f32.mrf.mxu0
      %v3195 = vadd.f32 %v3157, %v3194
      %v3196 = vpop.f32.mrf.mxu0
      %3197 = vdwg.mxu0
      %3198 = vmatpush.bf16.msra.mxu0 0
      %3199 = vmatpush.bf16.msra.mxu0 0
      %3200 = vmatpush.bf16.msra.mxu0 0
      %3201 = vmatpush.bf16.msra.mxu0 0
      %3202 = vmatpush.bf16.msra.mxu0 0
      %3203 = vmatpush.bf16.msra.mxu0 0
      %3204 = vmatpush.bf16.msra.mxu0 0
      %3205 = vmatpush.bf16.msra.mxu0 %v2275
      %3206 = vmatmul.bf16.gmra.mxu0 %v3105
      %v3207 = vpop.f32.mrf.mxu0
      %v3208 = vadd.f32 %v3170, %v3207
      %v3209 = vpop.f32.mrf.mxu0
      %v3210 = vadd.f32 %v3172, %v3209
      %3211 = vmatmul.bf16.gmra.mxu0 %v3108
      %v3212 = vpop.f32.mrf.mxu0
      %v3213 = vadd.f32 %v3175, %v3212
      %v3214 = vpop.f32.mrf.mxu0
      %v3215 = vadd.f32 %v3177, %v3214
      %3216 = vmatmul.bf16.gmra.mxu0 %v3111
      %v3217 = vpop.f32.mrf.mxu0
      %v3218 = vadd.f32 %v3180, %v3217
      %v3219 = vpop.f32.mrf.mxu0
      %v3220 = vadd.f32 %v3182, %v3219
      %3221 = vmatmul.bf16.gmra.mxu0 %v3114
      %v3222 = vpop.f32.mrf.mxu0
      %v3223 = vadd.f32 %v3185, %v3222
      %v3224 = vpop.f32.mrf.mxu0
      %v3225 = vadd.f32 %v3187, %v3224
      %3226 = vmatmul.bf16.gmra.mxu0 %v3117
      %v3227 = vpop.f32.mrf.mxu0
      %v3228 = vadd.f32 %v3190, %v3227
      %v3229 = vpop.f32.mrf.mxu0
      %v3230 = vadd.f32 %v3192, %v3229
      %3231 = vmatmul.bf16.gmra.mxu0 %v3120
      %v3232 = vpop.f32.mrf.mxu0
      %v3233 = vadd.f32 %v3195, %v3232
      %v3234 = vpop.f32.mrf.mxu0
      %3235 = vdwg.mxu0
      %3247 = vrot.lane.b32.xlu0 %v2728, 16
      %v3248 = vpop.permute.xlu0 %3247
      %3249 = vrot.lane.b32.xlu0 %v2730, 16
      %v3250 = vpop.permute.xlu0 %3249
      %3251 = vrot.lane.b32.xlu0 %v2733, 16
      %v3252 = vpop.permute.xlu0 %3251
      %3253 = vrot.lane.b32.xlu0 %v2735, 16
      %v3254 = vpop.permute.xlu0 %3253
      %3255 = vrot.lane.b32.xlu0 %v2738, 16
      %v3256 = vpop.permute.xlu0 %3255
      %3257 = vrot.lane.b32.xlu0 %v2740, 16
      %v3258 = vpop.permute.xlu0 %3257
      %3259 = vrot.lane.b32.xlu0 %v2743, 16
      %v3260 = vpop.permute.xlu0 %3259
      %3261 = vrot.lane.b32.xlu0 %v2745, 16
      %v3262 = vpop.permute.xlu0 %3261
      %3263 = vrot.lane.b32.xlu0 %v2748, 16
      %v3264 = vpop.permute.xlu0 %3263
      %3265 = vrot.lane.b32.xlu0 %v2750, 16
      %v3266 = vpop.permute.xlu0 %3265
      %3267 = vrot.lane.b32.xlu0 %v2753, 16
      %v3268 = vpop.permute.xlu0 %3267
      %3291 = vrot.lane.b32.xlu0 %v2968, 32
      %v3292 = vpop.permute.xlu0 %3291
      %3293 = vrot.lane.b32.xlu0 %v2970, 32
      %v3294 = vpop.permute.xlu0 %3293
      %3295 = vrot.lane.b32.xlu0 %v2973, 32
      %v3296 = vpop.permute.xlu0 %3295
      %3297 = vrot.lane.b32.xlu0 %v2975, 32
      %v3298 = vpop.permute.xlu0 %3297
      %3299 = vrot.lane.b32.xlu0 %v2978, 32
      %v3300 = vpop.permute.xlu0 %3299
      %3301 = vrot.lane.b32.xlu0 %v2980, 32
      %v3302 = vpop.permute.xlu0 %3301
      %3303 = vrot.lane.b32.xlu0 %v2983, 32
      %v3304 = vpop.permute.xlu0 %3303
      %3305 = vrot.lane.b32.xlu0 %v2985, 32
      %v3306 = vpop.permute.xlu0 %3305
      %3307 = vrot.lane.b32.xlu0 %v2988, 32
      %v3308 = vpop.permute.xlu0 %3307
      %3309 = vrot.lane.b32.xlu0 %v2990, 32
      %v3310 = vpop.permute.xlu0 %3309
      %3311 = vrot.lane.b32.xlu0 %v2993, 32
      %v3312 = vpop.permute.xlu0 %3311
      %3335 = vrot.lane.b32.xlu0 %v3208, 48
      %v3336 = vpop.permute.xlu0 %3335
      %3337 = vrot.lane.b32.xlu0 %v3210, 48
      %v3338 = vpop.permute.xlu0 %3337
      %3339 = vrot.lane.b32.xlu0 %v3213, 48
      %v3340 = vpop.permute.xlu0 %3339
      %3341 = vrot.lane.b32.xlu0 %v3215, 48
      %v3342 = vpop.permute.xlu0 %3341
      %3343 = vrot.lane.b32.xlu0 %v3218, 48
      %v3344 = vpop.permute.xlu0 %3343
      %3345 = vrot.lane.b32.xlu0 %v3220, 48
      %v3346 = vpop.permute.xlu0 %3345
      %3347 = vrot.lane.b32.xlu0 %v3223, 48
      %v3348 = vpop.permute.xlu0 %3347
      %3349 = vrot.lane.b32.xlu0 %v3225, 48
      %v3350 = vpop.permute.xlu0 %3349
      %3351 = vrot.lane.b32.xlu0 %v3228, 48
      %v3352 = vpop.permute.xlu0 %3351
      %3353 = vrot.lane.b32.xlu0 %v3230, 48
      %v3354 = vpop.permute.xlu0 %3353
      %3355 = vrot.lane.b32.xlu0 %v3233, 48
      %v3356 = vpop.permute.xlu0 %3355
      %v3368 = vsel %vm2383, %v2488, %v3248
      %v3369 = vsel %vm2383, %v2490, %v3250
      %v3370 = vsel %vm2383, %v2493, %v3252
      %v3371 = vsel %vm2383, %v2495, %v3254
      %v3372 = vsel %vm2383, %v2498, %v3256
      %v3373 = vsel %vm2383, %v2500, %v3258
      %v3374 = vsel %vm2383, %v2503, %v3260
      %v3375 = vsel %vm2383, %v2505, %v3262
      %v3376 = vsel %vm2383, %v2508, %v3264
      %v3377 = vsel %vm2383, %v2510, %v3266
      %v3378 = vsel %vm2383, %v2513, %v3268
      %vm3379 = vcmask 261120
      %v3380 = vsel %vm3379, %v3368, %v3292
      %v3381 = vsel %vm3379, %v3369, %v3294
      %v3382 = vsel %vm3379, %v3370, %v3296
      %v3383 = vsel %vm3379, %v3371, %v3298
      %v3384 = vsel %vm3379, %v3372, %v3300
      %v3385 = vsel %vm3379, %v3373, %v3302
      %v3386 = vsel %vm3379, %v3374, %v3304
      %v3387 = vsel %vm3379, %v3375, %v3306
      %v3388 = vsel %vm3379, %v3376, %v3308
      %v3389 = vsel %vm3379, %v3377, %v3310
      %v3390 = vsel %vm3379, %v3378, %v3312
      %vm3391 = vcmask 392192
      %v3392 = vsel %vm3391, %v3380, %v3336
      %v3393 = vsel %vm3391, %v3381, %v3338
      %v3394 = vsel %vm3391, %v3382, %v3340
      %v3395 = vsel %vm3391, %v3383, %v3342
      %v3396 = vsel %vm3391, %v3384, %v3344
      %v3397 = vsel %vm3391, %v3385, %v3346
      %v3398 = vsel %vm3391, %v3386, %v3348
      %v3399 = vsel %vm3391, %v3387, %v3350
      %v3400 = vsel %vm3391, %v3388, %v3352
      %v3401 = vsel %vm3391, %v3389, %v3354
      %v3402 = vsel %vm3391, %v3390, %v3356
      %vm3403 = vcmask 523264
      %3404 = vst.msk [vmem:[#allocation2] sm:$0xff] %vm3403, %v3392
      %3405 = vst.msk [vmem:[#allocation2 + $0x8] sm:$0xff] %vm3403, %v3393
      %3406 = vst.msk [vmem:[#allocation2 + $0x10] sm:$0xff] %vm3403, %v3394
      %3407 = vst.msk [vmem:[#allocation2 + $0x18] sm:$0xff] %vm3403, %v3395
      %3408 = vst.msk [vmem:[#allocation2 + $0x20] sm:$0xff] %vm3403, %v3396
      %3409 = vst.msk [vmem:[#allocation2 + $0x28] sm:$0xff] %vm3403, %v3397
      %3410 = vst.msk [vmem:[#allocation2 + $0x30] sm:$0xff] %vm3403, %v3398
      %3411 = vst.msk [vmem:[#allocation2 + $0x38] sm:$0xff] %vm3403, %v3399
      %3412 = vst.msk [vmem:[#allocation2 + $0x40] sm:$0xff] %vm3403, %v3400
      %3413 = vst.msk [vmem:[#allocation2 + $0x48] sm:$0xff] %vm3403, %v3401
      %3414 = vst.msk [vmem:[#allocation2 + $0x50] sm:$0xff] %vm3403, %v3402
      %v3415 = vld [vmem:[#allocation2] sm:$0xff]
      %v3416 = vld [vmem:[#allocation2 + $0x8] sm:$0xff]
      %v3417 = vld [vmem:[#allocation2 + $0x10] sm:$0xff]
      %v3418 = vld [vmem:[#allocation2 + $0x18] sm:$0xff]
      %v3419 = vld [vmem:[#allocation2 + $0x20] sm:$0xff]
      %v3420 = vld [vmem:[#allocation2 + $0x28] sm:$0xff]
      %v3421 = vld [vmem:[#allocation2 + $0x30] sm:$0xff]
      %v3422 = vld [vmem:[#allocation2 + $0x38] sm:$0xff]
      %v3423 = vld [vmem:[#allocation2 + $0x40] sm:$0xff]
      %v3424 = vpack.c.bf16 %v3416, %v3415
      %v3425 = vpack.c.bf16 %v3418, %v3417
      %v3426 = vpack.c.bf16 %v3420, %v3419
      %v3427 = vpack.c.bf16 %v3422, %v3421
      %v3428 = vpack.c.bf16 %v3423, %v3423
      %v3429 = vld [vmem:[%s4] sm:$0xf]
      %v3430 = vld [vmem:[%s4 + $0x4] sm:$0xf]
      %v3431 = vld [vmem:[%s4 + $0x8] sm:$0xf]
      %v3432 = vld [vmem:[%s4 + $0xc] sm:$0xf]
      %v3433 = vld [vmem:[%s4 + $0x10] sm:$0xf]
      %v3434 = vld [vmem:[%s4 + $0x14] sm:$0xf]
      %v3435 = vld [vmem:[%s4 + $0x18] sm:$0xf]
      %v3436 = vld [vmem:[%s4 + $0x1c] sm:$0xf]
      %v3437 = vld [vmem:[#allocation2 + $0x1] sm:$0xff]
      %v3438 = vld [vmem:[#allocation2 + $0x9] sm:$0xff]
      %v3439 = vld [vmem:[#allocation2 + $0x11] sm:$0xff]
      %v3440 = vld [vmem:[#allocation2 + $0x19] sm:$0xff]
      %v3441 = vld [vmem:[#allocation2 + $0x21] sm:$0xff]
      %v3442 = vld [vmem:[#allocation2 + $0x29] sm:$0xff]
      %v3443 = vld [vmem:[#allocation2 + $0x31] sm:$0xff]
      %v3444 = vld [vmem:[#allocation2 + $0x39] sm:$0xff]
      %v3445 = vld [vmem:[#allocation2 + $0x41] sm:$0xff]
      %v3446 = vpack.c.bf16 %v3438, %v3437
      %v3447 = vpack.c.bf16 %v3440, %v3439
      %v3448 = vpack.c.bf16 %v3442, %v3441
      %v3449 = vpack.c.bf16 %v3444, %v3443
      %v3450 = vpack.c.bf16 %v3445, %v3445
      %s3451 = scalar_lea.vmem %s4, 32
      %v3452 = vld [vmem:[%s3451] sm:$0xf]
      %v3453 = vld [vmem:[%s3451 + $0x4] sm:$0xf]
      %v3454 = vld [vmem:[%s3451 + $0x8] sm:$0xf]
      %v3455 = vld [vmem:[%s3451 + $0xc] sm:$0xf]
      %v3456 = vld [vmem:[%s3451 + $0x10] sm:$0xf]
      %v3457 = vld [vmem:[%s3451 + $0x14] sm:$0xf]
      %v3458 = vld [vmem:[%s3451 + $0x18] sm:$0xf]
      %v3459 = vld [vmem:[%s3451 + $0x1c] sm:$0xf]
      %v3468 = vunpack.c.l.b16 %v3452
      %v3469 = vunpack.c.l.b16 %v3453
      %v3470 = vunpack.c.l.b16 %v3454
      %v3471 = vunpack.c.l.b16 %v3455
      %v3472 = vunpack.c.l.b16 %v3456
      %v3473 = vunpack.c.l.b16 %v3457
      %v3474 = vunpack.c.l.b16 %v3458
      %v3475 = vunpack.c.l.b16 %v3459
      %v3476 = vpack.c.b16 %v3469, %v3468
      %v3477 = vpack.c.b16 %v3471, %v3470
      %v3478 = vpack.c.b16 %v3473, %v3472
      %v3479 = vpack.c.b16 %v3475, %v3474
      %v3485 = vsel %vm3403, %v3446, 0
      %v3488 = vsel %vm3403, %v3447, 0
      %v3491 = vsel %vm3403, %v3448, 0
      %v3494 = vsel %vm3403, %v3449, 0
      %v3497 = vsel %vm3403, %v3450, 0
      %3499 = vmatpush.bf16.msra.mxu0 0
      %3500 = vmatpush.bf16.msra.mxu0 0
      %3501 = vmatpush.bf16.msra.mxu0 0
      %3502 = vmatpush.bf16.msra.mxu0 0
      %3503 = vmatpush.bf16.msra.mxu0 %v3479
      %3504 = vmatpush.bf16.msra.mxu0 %v3478
      %3505 = vmatpush.bf16.msra.mxu0 %v3477
      %3506 = vmatpush.bf16.msra.mxu0 %v3476
      %3507 = vmatmul.bf16.gmra.mxu0 %v3485
      %v3508 = vpop.f32.mrf.mxu0
      %v3509 = vadd.f32 0.0, %v3508
      %v3510 = vpop.f32.mrf.mxu0
      %v3511 = vadd.f32 0.0, %v3510
      %3512 = vmatmul.bf16.gmra.mxu0 %v3488
      %v3513 = vpop.f32.mrf.mxu0
      %v3514 = vadd.f32 0.0, %v3513
      %v3515 = vpop.f32.mrf.mxu0
      %v3516 = vadd.f32 0.0, %v3515
      %3517 = vmatmul.bf16.gmra.mxu0 %v3491
      %v3518 = vpop.f32.mrf.mxu0
      %v3519 = vadd.f32 0.0, %v3518
      %v3520 = vpop.f32.mrf.mxu0
      %v3521 = vadd.f32 0.0, %v3520
      %3522 = vmatmul.bf16.gmra.mxu0 %v3494
      %v3523 = vpop.f32.mrf.mxu0
      %v3524 = vadd.f32 0.0, %v3523
      %v3525 = vpop.f32.mrf.mxu0
      %v3526 = vadd.f32 0.0, %v3525
      %3527 = vmatmul.bf16.gmra.mxu0 %v3497
      %v3528 = vpop.f32.mrf.mxu0
      %v3529 = vadd.f32 0.0, %v3528
      %v3530 = vpop.f32.mrf.mxu0
      %3531 = vdwg.mxu0
      %v3532 = vld [vmem:[#allocation2 + $0x9] sm:$0xff]
      %v3533 = vld [vmem:[#allocation2 + $0x11] sm:$0xff]
      %v3534 = vld [vmem:[#allocation2 + $0x19] sm:$0xff]
      %v3535 = vld [vmem:[#allocation2 + $0x21] sm:$0xff]
      %v3536 = vld [vmem:[#allocation2 + $0x29] sm:$0xff]
      %v3537 = vld [vmem:[#allocation2 + $0x31] sm:$0xff]
      %v3538 = vld [vmem:[#allocation2 + $0x39] sm:$0xff]
      %v3539 = vld [vmem:[#allocation2 + $0x41] sm:$0xff]
      %v3540 = vld [vmem:[#allocation2 + $0x49] sm:$0xff]
      %v3541 = vpack.c.bf16 %v3533, %v3532
      %v3542 = vpack.c.bf16 %v3535, %v3534
      %v3543 = vpack.c.bf16 %v3537, %v3536
      %v3544 = vpack.c.bf16 %v3539, %v3538
      %v3545 = vpack.c.bf16 %v3540, %v3540
      %s3546 = scalar_lea.vmem %s4, 64
      %v3547 = vld [vmem:[%s3546] sm:$0xf]
      %v3548 = vld [vmem:[%s3546 + $0x4] sm:$0xf]
      %v3549 = vld [vmem:[%s3546 + $0x8] sm:$0xf]
      %v3550 = vld [vmem:[%s3546 + $0xc] sm:$0xf]
      %v3551 = vld [vmem:[%s3546 + $0x10] sm:$0xf]
      %v3552 = vld [vmem:[%s3546 + $0x14] sm:$0xf]
      %v3553 = vld [vmem:[%s3546 + $0x18] sm:$0xf]
      %v3554 = vld [vmem:[%s3546 + $0x1c] sm:$0xf]
      %v3563 = vunpack.c.l.b16 %v3547
      %v3564 = vunpack.c.l.b16 %v3548
      %v3565 = vunpack.c.l.b16 %v3549
      %v3566 = vunpack.c.l.b16 %v3550
      %v3567 = vunpack.c.l.b16 %v3551
      %v3568 = vunpack.c.l.b16 %v3552
      %v3569 = vunpack.c.l.b16 %v3553
      %v3570 = vunpack.c.l.b16 %v3554
      %v3571 = vpack.c.b16 %v3564, %v3563
      %v3572 = vpack.c.b16 %v3566, %v3565
      %v3573 = vpack.c.b16 %v3568, %v3567
      %v3574 = vpack.c.b16 %v3570, %v3569
      %v3580 = vsel %vm3403, %v3541, 0
      %v3583 = vsel %vm3403, %v3542, 0
      %v3586 = vsel %vm3403, %v3543, 0
      %v3589 = vsel %vm3403, %v3544, 0
      %v3592 = vsel %vm3403, %v3545, 0
      %3594 = vmatpush.bf16.msra.mxu0 0
      %3595 = vmatpush.bf16.msra.mxu0 0
      %3596 = vmatpush.bf16.msra.mxu0 0
      %3597 = vmatpush.bf16.msra.mxu0 0
      %3598 = vmatpush.bf16.msra.mxu0 %v3574
      %3599 = vmatpush.bf16.msra.mxu0 %v3573
      %3600 = vmatpush.bf16.msra.mxu0 %v3572
      %3601 = vmatpush.bf16.msra.mxu0 %v3571
      %3602 = vmatmul.bf16.gmra.mxu0 %v3580
      %v3603 = vpop.f32.mrf.mxu0
      %v3604 = vadd.f32 0.0, %v3603
      %v3605 = vpop.f32.mrf.mxu0
      %v3606 = vadd.f32 0.0, %v3605
      %3607 = vmatmul.bf16.gmra.mxu0 %v3583
      %v3608 = vpop.f32.mrf.mxu0
      %v3609 = vadd.f32 0.0, %v3608
      %v3610 = vpop.f32.mrf.mxu0
      %v3611 = vadd.f32 0.0, %v3610
      %3612 = vmatmul.bf16.gmra.mxu0 %v3586
      %v3613 = vpop.f32.mrf.mxu0
      %v3614 = vadd.f32 0.0, %v3613
      %v3615 = vpop.f32.mrf.mxu0
      %v3616 = vadd.f32 0.0, %v3615
      %3617 = vmatmul.bf16.gmra.mxu0 %v3589
      %v3618 = vpop.f32.mrf.mxu0
      %v3619 = vadd.f32 0.0, %v3618
      %v3620 = vpop.f32.mrf.mxu0
      %v3621 = vadd.f32 0.0, %v3620
      %3622 = vmatmul.bf16.gmra.mxu0 %v3592
      %v3623 = vpop.f32.mrf.mxu0
      %v3624 = vadd.f32 0.0, %v3623
      %v3625 = vpop.f32.mrf.mxu0
      %3626 = vdwg.mxu0
      %v3627 = vld [vmem:[#allocation2 + $0xa] sm:$0xff]
      %v3628 = vld [vmem:[#allocation2 + $0x12] sm:$0xff]
      %v3629 = vld [vmem:[#allocation2 + $0x1a] sm:$0xff]
      %v3630 = vld [vmem:[#allocation2 + $0x22] sm:$0xff]
      %v3631 = vld [vmem:[#allocation2 + $0x2a] sm:$0xff]
      %v3632 = vld [vmem:[#allocation2 + $0x32] sm:$0xff]
      %v3633 = vld [vmem:[#allocation2 + $0x3a] sm:$0xff]
      %v3634 = vld [vmem:[#allocation2 + $0x42] sm:$0xff]
      %v3635 = vld [vmem:[#allocation2 + $0x4a] sm:$0xff]
      %v3636 = vpack.c.bf16 %v3628, %v3627
      %v3637 = vpack.c.bf16 %v3630, %v3629
      %v3638 = vpack.c.bf16 %v3632, %v3631
      %v3639 = vpack.c.bf16 %v3634, %v3633
      %v3640 = vpack.c.bf16 %v3635, %v3635
      %s3641 = scalar_lea.vmem %s4, 96
      %v3642 = vld [vmem:[%s3641] sm:$0xf]
      %v3643 = vld [vmem:[%s3641 + $0x4] sm:$0xf]
      %v3644 = vld [vmem:[%s3641 + $0x8] sm:$0xf]
      %v3645 = vld [vmem:[%s3641 + $0xc] sm:$0xf]
      %v3646 = vld [vmem:[%s3641 + $0x10] sm:$0xf]
      %v3647 = vld [vmem:[%s3641 + $0x14] sm:$0xf]
      %v3648 = vld [vmem:[%s3641 + $0x18] sm:$0xf]
      %v3649 = vld [vmem:[%s3641 + $0x1c] sm:$0xf]
      %v3658 = vunpack.c.l.b16 %v3642
      %v3659 = vunpack.c.l.b16 %v3643
      %v3660 = vunpack.c.l.b16 %v3644
      %v3661 = vunpack.c.l.b16 %v3645
      %v3662 = vunpack.c.l.b16 %v3646
      %v3663 = vunpack.c.l.b16 %v3647
      %v3664 = vunpack.c.l.b16 %v3648
      %v3665 = vunpack.c.l.b16 %v3649
      %v3666 = vpack.c.b16 %v3659, %v3658
      %v3667 = vpack.c.b16 %v3661, %v3660
      %v3668 = vpack.c.b16 %v3663, %v3662
      %v3669 = vpack.c.b16 %v3665, %v3664
      %v3675 = vsel %vm3403, %v3636, 0
      %v3678 = vsel %vm3403, %v3637, 0
      %v3681 = vsel %vm3403, %v3638, 0
      %v3684 = vsel %vm3403, %v3639, 0
      %v3687 = vsel %vm3403, %v3640, 0
      %3689 = vmatpush.bf16.msra.mxu0 0
      %3690 = vmatpush.bf16.msra.mxu0 0
      %3691 = vmatpush.bf16.msra.mxu0 0
      %3692 = vmatpush.bf16.msra.mxu0 0
      %3693 = vmatpush.bf16.msra.mxu0 %v3669
      %3694 = vmatpush.bf16.msra.mxu0 %v3668
      %3695 = vmatpush.bf16.msra.mxu0 %v3667
      %3696 = vmatpush.bf16.msra.mxu0 %v3666
      %3697 = vmatmul.bf16.gmra.mxu0 %v3675
      %v3698 = vpop.f32.mrf.mxu0
      %v3699 = vadd.f32 0.0, %v3698
      %v3700 = vpop.f32.mrf.mxu0
      %v3701 = vadd.f32 0.0, %v3700
      %3702 = vmatmul.bf16.gmra.mxu0 %v3678
      %v3703 = vpop.f32.mrf.mxu0
      %v3704 = vadd.f32 0.0, %v3703
      %v3705 = vpop.f32.mrf.mxu0
      %v3706 = vadd.f32 0.0, %v3705
      %3707 = vmatmul.bf16.gmra.mxu0 %v3681
      %v3708 = vpop.f32.mrf.mxu0
      %v3709 = vadd.f32 0.0, %v3708
      %v3710 = vpop.f32.mrf.mxu0
      %v3711 = vadd.f32 0.0, %v3710
      %3712 = vmatmul.bf16.gmra.mxu0 %v3684
      %v3713 = vpop.f32.mrf.mxu0
      %v3714 = vadd.f32 0.0, %v3713
      %v3715 = vpop.f32.mrf.mxu0
      %v3716 = vadd.f32 0.0, %v3715
      %3717 = vmatmul.bf16.gmra.mxu0 %v3687
      %v3718 = vpop.f32.mrf.mxu0
      %v3719 = vadd.f32 0.0, %v3718
      %v3720 = vpop.f32.mrf.mxu0
      %3721 = vdwg.mxu0
      %v3730 = vunpack.c.l.b16 %v3429
      %v3731 = vunpack.c.l.b16 %v3430
      %v3732 = vunpack.c.l.b16 %v3431
      %v3733 = vunpack.c.l.b16 %v3432
      %v3734 = vunpack.c.l.b16 %v3433
      %v3735 = vunpack.c.l.b16 %v3434
      %v3736 = vunpack.c.l.b16 %v3435
      %v3737 = vunpack.c.l.b16 %v3436
      %v3738 = vpack.c.b16 %v3731, %v3730
      %v3739 = vpack.c.b16 %v3733, %v3732
      %v3740 = vpack.c.b16 %v3735, %v3734
      %v3741 = vpack.c.b16 %v3737, %v3736
      %v3747 = vsel %vm3403, %v3424, 0
      %v3750 = vsel %vm3403, %v3425, 0
      %v3753 = vsel %vm3403, %v3426, 0
      %v3756 = vsel %vm3403, %v3427, 0
      %v3759 = vsel %vm3403, %v3428, 0
      %3761 = vmatpush.bf16.msra.mxu0 0
      %3762 = vmatpush.bf16.msra.mxu0 0
      %3763 = vmatpush.bf16.msra.mxu0 0
      %3764 = vmatpush.bf16.msra.mxu0 0
      %3765 = vmatpush.bf16.msra.mxu0 %v3741
      %3766 = vmatpush.bf16.msra.mxu0 %v3740
      %3767 = vmatpush.bf16.msra.mxu0 %v3739
      %3768 = vmatpush.bf16.msra.mxu0 %v3738
      %3769 = vmatmul.bf16.gmra.mxu0 %v3747
      %v3770 = vpop.f32.mrf.mxu0
      %v3771 = vadd.f32 %v3509, %v3770
      %v3772 = vpop.f32.mrf.mxu0
      %v3773 = vadd.f32 %v3511, %v3772
      %3774 = vmatmul.bf16.gmra.mxu0 %v3750
      %v3775 = vpop.f32.mrf.mxu0
      %v3776 = vadd.f32 %v3514, %v3775
      %v3777 = vpop.f32.mrf.mxu0
      %v3778 = vadd.f32 %v3516, %v3777
      %3779 = vmatmul.bf16.gmra.mxu0 %v3753
      %v3780 = vpop.f32.mrf.mxu0
      %v3781 = vadd.f32 %v3519, %v3780
      %v3782 = vpop.f32.mrf.mxu0
      %v3783 = vadd.f32 %v3521, %v3782
      %3784 = vmatmul.bf16.gmra.mxu0 %v3756
      %v3785 = vpop.f32.mrf.mxu0
      %v3786 = vadd.f32 %v3524, %v3785
      %v3787 = vpop.f32.mrf.mxu0
      %v3788 = vadd.f32 %v3526, %v3787
      %3789 = vmatmul.bf16.gmra.mxu0 %v3759
      %v3790 = vpop.f32.mrf.mxu0
      %v3791 = vadd.f32 %v3529, %v3790
      %v3792 = vpop.f32.mrf.mxu0
      %3793 = vdwg.mxu0
      %v3794 = vadd.f32 %v3771, %v3604
      %v3795 = vadd.f32 %v3773, %v3606
      %v3796 = vadd.f32 %v3776, %v3609
      %v3797 = vadd.f32 %v3778, %v3611
      %v3798 = vadd.f32 %v3781, %v3614
      %v3799 = vadd.f32 %v3783, %v3616
      %v3800 = vadd.f32 %v3786, %v3619
      %v3801 = vadd.f32 %v3788, %v3621
      %v3802 = vadd.f32 %v3791, %v3624
      %v3803 = vadd.f32 %v3794, %v3699
      %v3804 = vadd.f32 %v3795, %v3701
      %v3805 = vadd.f32 %v3796, %v3704
      %v3806 = vadd.f32 %v3797, %v3706
      %v3807 = vadd.f32 %v3798, %v3709
      %v3808 = vadd.f32 %v3799, %v3711
      %v3809 = vadd.f32 %v3800, %v3714
      %v3810 = vadd.f32 %v3801, %v3716
      %v3811 = vadd.f32 %v3802, %v3719
      %v3812 = vld [vmem:[%s5] sm:$0x1]
      %v3814 = vperm.slane %v3812, 0
      %v3816 = vadd.f32 %v3803, %v3814
      %v3817 = vadd.f32 %v3804, %v3814
      %v3818 = vadd.f32 %v3805, %v3814
      %v3819 = vadd.f32 %v3806, %v3814
      %v3820 = vadd.f32 %v3807, %v3814
      %v3821 = vadd.f32 %v3808, %v3814
      %v3822 = vadd.f32 %v3809, %v3814
      %v3823 = vadd.f32 %v3810, %v3814
      %v3824 = vadd.f32 %v3811, %v3814
      %v3825 = vxor.u32 %v3816, 2147483648
      %v3826 = vxor.u32 %v3817, 2147483648
      %v3827 = vxor.u32 %v3818, 2147483648
      %v3828 = vxor.u32 %v3819, 2147483648
      %v3829 = vxor.u32 %v3820, 2147483648
      %v3830 = vxor.u32 %v3821, 2147483648
      %v3831 = vxor.u32 %v3822, 2147483648
      %v3832 = vxor.u32 %v3823, 2147483648
      %v3833 = vxor.u32 %v3824, 2147483648
      %v3834 = vmul.f32 %v3825, 1.442695
      %v3835 = vpow.pop %v3834
      %v3836 = vmul.f32 %v3826, 1.442695
      %v3837 = vpow.pop %v3836
      %v3838 = vmul.f32 %v3827, 1.442695
      %v3839 = vpow.pop %v3838
      %v3840 = vmul.f32 %v3828, 1.442695
      %v3841 = vpow.pop %v3840
      %v3842 = vmul.f32 %v3829, 1.442695
      %v3843 = vpow.pop %v3842
      %v3844 = vmul.f32 %v3830, 1.442695
      %v3845 = vpow.pop %v3844
      %v3846 = vmul.f32 %v3831, 1.442695
      %v3847 = vpow.pop %v3846
      %v3848 = vmul.f32 %v3832, 1.442695
      %v3849 = vpow.pop %v3848
      %v3850 = vmul.f32 %v3833, 1.442695
      %v3851 = vpow.pop %v3850
      %v3852 = vadd.f32 %v3835, 1.0
      %v3853 = vadd.f32 %v3837, 1.0
      %v3854 = vadd.f32 %v3839, 1.0
      %v3855 = vadd.f32 %v3841, 1.0
      %v3856 = vadd.f32 %v3843, 1.0
      %v3857 = vadd.f32 %v3845, 1.0
      %v3858 = vadd.f32 %v3847, 1.0
      %v3859 = vadd.f32 %v3849, 1.0
      %v3860 = vadd.f32 %v3851, 1.0
      %v3861 = vrcp.pop %v3852
      %v3862 = vmul.f32 %v3852, %v3861
      %v3863 = vsub.f32 1.0, %v3862
      %v3864 = vmul.f32 %v3861, %v3863
      %v3865 = vadd.f32 %v3861, %v3864
      %vm3866 = vweird.f32 %v3852
      %vm3867 = vweird.f32 %v3861
      %vm3868 = vmor %vm3866, %vm3867
      %v3869 = vsel %vm3868, %v3861, %v3865
      %v3870 = vand.u32 2147483647, %v3852
      %vm3871 = vcmp.eq.f32.partialorder %v3870, 8.507059e+37
      %v3872 = vand.u32 %v3852, 2147483648
      %v3873 = vor.u32 1.1754944e-38, %v3872
      %v3874 = vsel %vm3871, %v3873, %v3869
      %v3875 = vmul.f32 1.0, %v3874
      %v3876 = vrcp.pop %v3853
      %v3877 = vmul.f32 %v3853, %v3876
      %v3878 = vsub.f32 1.0, %v3877
      %v3879 = vmul.f32 %v3876, %v3878
      %v3880 = vadd.f32 %v3876, %v3879
      %vm3881 = vweird.f32 %v3853
      %vm3882 = vweird.f32 %v3876
      %vm3883 = vmor %vm3881, %vm3882
      %v3884 = vsel %vm3883, %v3876, %v3880
      %v3885 = vand.u32 2147483647, %v3853
      %vm3886 = vcmp.eq.f32.partialorder %v3885, 8.507059e+37
      %v3887 = vand.u32 %v3853, 2147483648
      %v3888 = vor.u32 1.1754944e-38, %v3887
      %v3889 = vsel %vm3886, %v3888, %v3884
      %v3890 = vmul.f32 1.0, %v3889
      %v3891 = vrcp.pop %v3854
      %v3892 = vmul.f32 %v3854, %v3891
      %v3893 = vsub.f32 1.0, %v3892
      %v3894 = vmul.f32 %v3891, %v3893
      %v3895 = vadd.f32 %v3891, %v3894
      %vm3896 = vweird.f32 %v3854
      %vm3897 = vweird.f32 %v3891
      %vm3898 = vmor %vm3896, %vm3897
      %v3899 = vsel %vm3898, %v3891, %v3895
      %v3900 = vand.u32 2147483647, %v3854
      %vm3901 = vcmp.eq.f32.partialorder %v3900, 8.507059e+37
      %v3902 = vand.u32 %v3854, 2147483648
      %v3903 = vor.u32 1.1754944e-38, %v3902
      %v3904 = vsel %vm3901, %v3903, %v3899
      %v3905 = vmul.f32 1.0, %v3904
      %v3906 = vrcp.pop %v3855
      %v3907 = vmul.f32 %v3855, %v3906
      %v3908 = vsub.f32 1.0, %v3907
      %v3909 = vmul.f32 %v3906, %v3908
      %v3910 = vadd.f32 %v3906, %v3909
      %vm3911 = vweird.f32 %v3855
      %vm3912 = vweird.f32 %v3906
      %vm3913 = vmor %vm3911, %vm3912
      %v3914 = vsel %vm3913, %v3906, %v3910
      %v3915 = vand.u32 2147483647, %v3855
      %vm3916 = vcmp.eq.f32.partialorder %v3915, 8.507059e+37
      %v3917 = vand.u32 %v3855, 2147483648
      %v3918 = vor.u32 1.1754944e-38, %v3917
      %v3919 = vsel %vm3916, %v3918, %v3914
      %v3920 = vmul.f32 1.0, %v3919
      %v3921 = vrcp.pop %v3856
      %v3922 = vmul.f32 %v3856, %v3921
      %v3923 = vsub.f32 1.0, %v3922
      %v3924 = vmul.f32 %v3921, %v3923
      %v3925 = vadd.f32 %v3921, %v3924
      %vm3926 = vweird.f32 %v3856
      %vm3927 = vweird.f32 %v3921
      %vm3928 = vmor %vm3926, %vm3927
      %v3929 = vsel %vm3928, %v3921, %v3925
      %v3930 = vand.u32 2147483647, %v3856
      %vm3931 = vcmp.eq.f32.partialorder %v3930, 8.507059e+37
      %v3932 = vand.u32 %v3856, 2147483648
      %v3933 = vor.u32 1.1754944e-38, %v3932
      %v3934 = vsel %vm3931, %v3933, %v3929
      %v3935 = vmul.f32 1.0, %v3934
      %v3936 = vrcp.pop %v3857
      %v3937 = vmul.f32 %v3857, %v3936
      %v3938 = vsub.f32 1.0, %v3937
      %v3939 = vmul.f32 %v3936, %v3938
      %v3940 = vadd.f32 %v3936, %v3939
      %vm3941 = vweird.f32 %v3857
      %vm3942 = vweird.f32 %v3936
      %vm3943 = vmor %vm3941, %vm3942
      %v3944 = vsel %vm3943, %v3936, %v3940
      %v3945 = vand.u32 2147483647, %v3857
      %vm3946 = vcmp.eq.f32.partialorder %v3945, 8.507059e+37
      %v3947 = vand.u32 %v3857, 2147483648
      %v3948 = vor.u32 1.1754944e-38, %v3947
      %v3949 = vsel %vm3946, %v3948, %v3944
      %v3950 = vmul.f32 1.0, %v3949
      %v3951 = vrcp.pop %v3858
      %v3952 = vmul.f32 %v3858, %v3951
      %v3953 = vsub.f32 1.0, %v3952
      %v3954 = vmul.f32 %v3951, %v3953
      %v3955 = vadd.f32 %v3951, %v3954
      %vm3956 = vweird.f32 %v3858
      %vm3957 = vweird.f32 %v3951
      %vm3958 = vmor %vm3956, %vm3957
      %v3959 = vsel %vm3958, %v3951, %v3955
      %v3960 = vand.u32 2147483647, %v3858
      %vm3961 = vcmp.eq.f32.partialorder %v3960, 8.507059e+37
      %v3962 = vand.u32 %v3858, 2147483648
      %v3963 = vor.u32 1.1754944e-38, %v3962
      %v3964 = vsel %vm3961, %v3963, %v3959
      %v3965 = vmul.f32 1.0, %v3964
      %v3966 = vrcp.pop %v3859
      %v3967 = vmul.f32 %v3859, %v3966
      %v3968 = vsub.f32 1.0, %v3967
      %v3969 = vmul.f32 %v3966, %v3968
      %v3970 = vadd.f32 %v3966, %v3969
      %vm3971 = vweird.f32 %v3859
      %vm3972 = vweird.f32 %v3966
      %vm3973 = vmor %vm3971, %vm3972
      %v3974 = vsel %vm3973, %v3966, %v3970
      %v3975 = vand.u32 2147483647, %v3859
      %vm3976 = vcmp.eq.f32.partialorder %v3975, 8.507059e+37
      %v3977 = vand.u32 %v3859, 2147483648
      %v3978 = vor.u32 1.1754944e-38, %v3977
      %v3979 = vsel %vm3976, %v3978, %v3974
      %v3980 = vmul.f32 1.0, %v3979
      %v3981 = vrcp.pop %v3860
      %v3982 = vmul.f32 %v3860, %v3981
      %v3983 = vsub.f32 1.0, %v3982
      %v3984 = vmul.f32 %v3981, %v3983
      %v3985 = vadd.f32 %v3981, %v3984
      %vm3986 = vweird.f32 %v3860
      %vm3987 = vweird.f32 %v3981
      %vm3988 = vmor %vm3986, %vm3987
      %v3989 = vsel %vm3988, %v3981, %v3985
      %v3990 = vand.u32 2147483647, %v3860
      %vm3991 = vcmp.eq.f32.partialorder %v3990, 8.507059e+37
      %v3992 = vand.u32 %v3860, 2147483648
      %v3993 = vor.u32 1.1754944e-38, %v3992
      %v3994 = vsel %vm3991, %v3993, %v3989
      %v3995 = vmul.f32 1.0, %v3994
      %v3996 = vmul.f32 %v3816, %v3875
      %v3997 = vmul.f32 %v3817, %v3890
      %v3998 = vmul.f32 %v3818, %v3905
      %v3999 = vmul.f32 %v3819, %v3920
      %v4000 = vmul.f32 %v3820, %v3935
      %v4001 = vmul.f32 %v3821, %v3950
      %v4002 = vmul.f32 %v3822, %v3965
      %v4003 = vmul.f32 %v3823, %v3980
      %v4004 = vmul.f32 %v3824, %v3995
      %v4005 = vpack.c.bf16 %v3997, %v3996
      %v4006 = vpack.c.bf16 %v3999, %v3998
      %v4007 = vpack.c.bf16 %v4001, %v4000
      %v4008 = vpack.c.bf16 %v4003, %v4002
      %v4009 = vpack.c.bf16 %v4004, %v4004
      %v4010 = vld [vmem:[%s6] sm:$0xf]
      %v4011 = vld [vmem:[%s6 + $0x4] sm:$0xf]
      %v4012 = vld [vmem:[%s6 + $0x8] sm:$0xf]
      %v4013 = vld [vmem:[%s6 + $0xc] sm:$0xf]
      %v4018 = vunpack.c.l.b16 %v4010
      %v4019 = vunpack.c.l.b16 %v4011
      %v4020 = vunpack.c.l.b16 %v4012
      %v4021 = vunpack.c.l.b16 %v4013
      %v4022 = vpack.c.b16 %v4019, %v4018
      %v4023 = vpack.c.b16 %v4021, %v4020
      %vm4024 = vcmask 588800
      %v4026 = vsel %vm4024, %v4022, 0
      %v4029 = vsel %vm4024, %v4023, 0
      %vm4031 = vcmask 1043456
      %v4033 = vsel %vm4031, %v4009, 0
      %4035 = vmatpush.bf16.msra.mxu0 0
      %4036 = vmatpush.bf16.msra.mxu0 0
      %4037 = vmatpush.bf16.msra.mxu0 0
      %4038 = vmatpush.bf16.msra.mxu0 %v4033
      %4039 = vmatpush.bf16.msra.mxu0 %v4008
      %4040 = vmatpush.bf16.msra.mxu0 %v4007
      %4041 = vmatpush.bf16.msra.mxu0 %v4006
      %4042 = vmatpush.bf16.msra.mxu0 %v4005
      %4043 = vmatmul.bf16.gmra.mxu0 %v4026
      %v4044 = vpop.f32.mrf.mxu0
      %v4045 = vadd.f32 0.0, %v4044
      %v4046 = vpop.f32.mrf.mxu0
      %v4047 = vadd.f32 0.0, %v4046
      %4048 = vmatmul.bf16.gmra.mxu0 %v4029
      %v4049 = vpop.f32.mrf.mxu0
      %v4050 = vadd.f32 0.0, %v4049
      %v4051 = vpop.f32.mrf.mxu0
      %v4052 = vadd.f32 0.0, %v4051
      %4053 = vdwg.mxu0
      %s4054 = scalar_lea.vmem %s6, 16
      %v4055 = vld [vmem:[%s4054] sm:$0xf]
      %v4056 = vld [vmem:[%s4054 + $0x4] sm:$0xf]
      %v4057 = vld [vmem:[%s4054 + $0x8] sm:$0xf]
      %v4058 = vld [vmem:[%s4054 + $0xc] sm:$0xf]
      %v4063 = vunpack.c.l.b16 %v4055
      %v4064 = vunpack.c.l.b16 %v4056
      %v4065 = vunpack.c.l.b16 %v4057
      %v4066 = vunpack.c.l.b16 %v4058
      %v4067 = vpack.c.b16 %v4064, %v4063
      %v4068 = vpack.c.b16 %v4066, %v4065
      %v4070 = vsel %vm4024, %v4067, 0
      %v4073 = vsel %vm4024, %v4068, 0
      %4075 = vmatpush.bf16.msra.mxu0 0
      %4076 = vmatpush.bf16.msra.mxu0 0
      %4077 = vmatpush.bf16.msra.mxu0 0
      %4078 = vmatpush.bf16.msra.mxu0 %v4033
      %4079 = vmatpush.bf16.msra.mxu0 %v4008
      %4080 = vmatpush.bf16.msra.mxu0 %v4007
      %4081 = vmatpush.bf16.msra.mxu0 %v4006
      %4082 = vmatpush.bf16.msra.mxu0 %v4005
      %4083 = vmatmul.bf16.gmra.mxu0 %v4070
      %v4084 = vpop.f32.mrf.mxu0
      %v4085 = vadd.f32 0.0, %v4084
      %v4086 = vpop.f32.mrf.mxu0
      %v4087 = vadd.f32 0.0, %v4086
      %4088 = vmatmul.bf16.gmra.mxu0 %v4073
      %v4089 = vpop.f32.mrf.mxu0
      %v4090 = vadd.f32 0.0, %v4089
      %v4091 = vpop.f32.mrf.mxu0
      %v4092 = vadd.f32 0.0, %v4091
      %4093 = vdwg.mxu0
      %s4094 = scalar_lea.vmem %s6, 32
      %v4095 = vld [vmem:[%s4094] sm:$0xf]
      %v4096 = vld [vmem:[%s4094 + $0x4] sm:$0xf]
      %v4097 = vld [vmem:[%s4094 + $0x8] sm:$0xf]
      %v4098 = vld [vmem:[%s4094 + $0xc] sm:$0xf]
      %v4103 = vunpack.c.l.b16 %v4095
      %v4104 = vunpack.c.l.b16 %v4096
      %v4105 = vunpack.c.l.b16 %v4097
      %v4106 = vunpack.c.l.b16 %v4098
      %v4107 = vpack.c.b16 %v4104, %v4103
      %v4108 = vpack.c.b16 %v4106, %v4105
      %v4110 = vsel %vm4024, %v4107, 0
      %v4113 = vsel %vm4024, %v4108, 0
      %4115 = vmatpush.bf16.msra.mxu0 0
      %4116 = vmatpush.bf16.msra.mxu0 0
      %4117 = vmatpush.bf16.msra.mxu0 0
      %4118 = vmatpush.bf16.msra.mxu0 %v4033
      %4119 = vmatpush.bf16.msra.mxu0 %v4008
      %4120 = vmatpush.bf16.msra.mxu0 %v4007
      %4121 = vmatpush.bf16.msra.mxu0 %v4006
      %4122 = vmatpush.bf16.msra.mxu0 %v4005
      %4123 = vmatmul.bf16.gmra.mxu0 %v4110
      %v4124 = vpop.f32.mrf.mxu0
      %v4125 = vadd.f32 0.0, %v4124
      %v4126 = vpop.f32.mrf.mxu0
      %v4127 = vadd.f32 0.0, %v4126
      %4128 = vmatmul.bf16.gmra.mxu0 %v4113
      %v4129 = vpop.f32.mrf.mxu0
      %v4130 = vadd.f32 0.0, %v4129
      %v4131 = vpop.f32.mrf.mxu0
      %v4132 = vadd.f32 0.0, %v4131
      %4133 = vdwg.mxu0
      %s4134 = scalar_lea.vmem %s6, 48
      %v4135 = vld [vmem:[%s4134] sm:$0xf]
      %v4136 = vld [vmem:[%s4134 + $0x4] sm:$0xf]
      %v4137 = vld [vmem:[%s4134 + $0x8] sm:$0xf]
      %v4138 = vld [vmem:[%s4134 + $0xc] sm:$0xf]
      %v4143 = vunpack.c.l.b16 %v4135
      %v4144 = vunpack.c.l.b16 %v4136
      %v4145 = vunpack.c.l.b16 %v4137
      %v4146 = vunpack.c.l.b16 %v4138
      %v4147 = vpack.c.b16 %v4144, %v4143
      %v4148 = vpack.c.b16 %v4146, %v4145
      %v4150 = vsel %vm4024, %v4147, 0
      %v4153 = vsel %vm4024, %v4148, 0
      %4155 = vmatpush.bf16.msra.mxu0 0
      %4156 = vmatpush.bf16.msra.mxu0 0
      %4157 = vmatpush.bf16.msra.mxu0 0
      %4158 = vmatpush.bf16.msra.mxu0 %v4033
      %4159 = vmatpush.bf16.msra.mxu0 %v4008
      %4160 = vmatpush.bf16.msra.mxu0 %v4007
      %4161 = vmatpush.bf16.msra.mxu0 %v4006
      %4162 = vmatpush.bf16.msra.mxu0 %v4005
      %4163 = vmatmul.bf16.gmra.mxu0 %v4150
      %v4164 = vpop.f32.mrf.mxu0
      %v4165 = vadd.f32 0.0, %v4164
      %v4166 = vpop.f32.mrf.mxu0
      %v4167 = vadd.f32 0.0, %v4166
      %4168 = vmatmul.bf16.gmra.mxu0 %v4153
      %v4169 = vpop.f32.mrf.mxu0
      %v4170 = vadd.f32 0.0, %v4169
      %v4171 = vpop.f32.mrf.mxu0
      %v4172 = vadd.f32 0.0, %v4171
      %4173 = vdwg.mxu0
      %4178 = vrot.lane.b32.xlu0 %v4085, 32
      %v4179 = vpop.permute.xlu0 %4178
      %4180 = vrot.lane.b32.xlu0 %v4087, 32
      %v4181 = vpop.permute.xlu0 %4180
      %4182 = vrot.lane.b32.xlu0 %v4090, 32
      %v4183 = vpop.permute.xlu0 %4182
      %4184 = vrot.lane.b32.xlu0 %v4092, 32
      %v4185 = vpop.permute.xlu0 %4184
      %4194 = vrot.lane.b32.xlu0 %v4125, 64
      %v4195 = vpop.permute.xlu0 %4194
      %4196 = vrot.lane.b32.xlu0 %v4127, 64
      %v4197 = vpop.permute.xlu0 %4196
      %4198 = vrot.lane.b32.xlu0 %v4130, 64
      %v4199 = vpop.permute.xlu0 %4198
      %4200 = vrot.lane.b32.xlu0 %v4132, 64
      %v4201 = vpop.permute.xlu0 %4200
      %4210 = vrot.lane.b32.xlu0 %v4165, 96
      %v4211 = vpop.permute.xlu0 %4210
      %4212 = vrot.lane.b32.xlu0 %v4167, 96
      %v4213 = vpop.permute.xlu0 %4212
      %4214 = vrot.lane.b32.xlu0 %v4170, 96
      %v4215 = vpop.permute.xlu0 %4214
      %4216 = vrot.lane.b32.xlu0 %v4172, 96
      %v4217 = vpop.permute.xlu0 %4216
      %v4222 = vsel %vm3379, %v4045, %v4179
      %v4223 = vsel %vm3379, %v4047, %v4181
      %v4224 = vsel %vm3379, %v4050, %v4183
      %v4225 = vsel %vm3379, %v4052, %v4185
      %v4226 = vsel %vm3403, %v4222, %v4195
      %v4227 = vsel %vm3403, %v4223, %v4197
      %v4228 = vsel %vm3403, %v4224, %v4199
      %v4229 = vsel %vm3403, %v4225, %v4201
      %vm4230 = vcmask 785408
      %v4231 = vsel %vm4230, %v4226, %v4211
      %v4232 = vsel %vm4230, %v4227, %v4213
      %v4233 = vsel %vm4230, %v4228, %v4215
      %v4234 = vsel %vm4230, %v4229, %v4217
      %4235 = vst [vmem:[#allocation3] sm:$0xff] %v4231
      %4236 = vst [vmem:[#allocation3 + $0x8] sm:$0xff] %v4232
      %4237 = vst [vmem:[#allocation3 + $0x10] sm:$0xff] %v4233
      %4238 = vst [vmem:[#allocation3 + $0x18] sm:$0xff] %v4234
      %v4239 = vld [vmem:[#allocation3] sm:$0xff]
      %v4240 = vld [vmem:[#allocation3 + $0x8] sm:$0xff]
      %v4241 = vld [vmem:[#allocation3 + $0x10] sm:$0xf]
      %v4242 = vpack.c.bf16 %v4240, %v4239
      %v4243 = vpack.c.bf16 %v4241, %v4241
      %v4244 = vld [vmem:[%s7] sm:$0xf]
      %v4245 = vld [vmem:[%s7 + $0x4] sm:$0xf]
      %v4246 = vld [vmem:[%s7 + $0x8] sm:$0xf]
      %v4247 = vld [vmem:[%s7 + $0xc] sm:$0xf]
      %v4248 = vld [vmem:[%s7 + $0x10] sm:$0xf]
      %v4249 = vld [vmem:[%s7 + $0x14] sm:$0xf]
      %v4250 = vld [vmem:[%s7 + $0x18] sm:$0xf]
      %v4251 = vld [vmem:[%s7 + $0x1c] sm:$0xf]
      %v4252 = vld [vmem:[%s7 + $0x20] sm:$0xf]
      %v4253 = vld [vmem:[%s7 + $0x24] sm:$0xf]
      %v4254 = vld [vmem:[%s7 + $0x28] sm:$0xf]
      %v4255 = vld [vmem:[%s7 + $0x2c] sm:$0xf]
      %v4256 = vld [vmem:[%s7 + $0x30] sm:$0xf]
      %v4257 = vld [vmem:[%s7 + $0x34] sm:$0xf]
      %v4258 = vld [vmem:[%s7 + $0x38] sm:$0xf]
      %v4259 = vld [vmem:[%s7 + $0x3c] sm:$0xf]
      %v4260 = vld [vmem:[#allocation3 + $0x1] sm:$0xff]
      %v4261 = vld [vmem:[#allocation3 + $0x9] sm:$0xff]
      %v4262 = vld [vmem:[#allocation3 + $0x11] sm:$0xf]
      %v4263 = vpack.c.bf16 %v4261, %v4260
      %v4264 = vpack.c.bf16 %v4262, %v4262
      %s4265 = scalar_lea.vmem %s7, 64
      %v4266 = vld [vmem:[%s4265] sm:$0xf]
      %v4267 = vld [vmem:[%s4265 + $0x4] sm:$0xf]
      %v4268 = vld [vmem:[%s4265 + $0x8] sm:$0xf]
      %v4269 = vld [vmem:[%s4265 + $0xc] sm:$0xf]
      %v4270 = vld [vmem:[%s4265 + $0x10] sm:$0xf]
      %v4271 = vld [vmem:[%s4265 + $0x14] sm:$0xf]
      %v4272 = vld [vmem:[%s4265 + $0x18] sm:$0xf]
      %v4273 = vld [vmem:[%s4265 + $0x1c] sm:$0xf]
      %v4274 = vld [vmem:[%s4265 + $0x20] sm:$0xf]
      %v4275 = vld [vmem:[%s4265 + $0x24] sm:$0xf]
      %v4276 = vld [vmem:[%s4265 + $0x28] sm:$0xf]
      %v4277 = vld [vmem:[%s4265 + $0x2c] sm:$0xf]
      %v4278 = vld [vmem:[%s4265 + $0x30] sm:$0xf]
      %v4279 = vld [vmem:[%s4265 + $0x34] sm:$0xf]
      %v4280 = vld [vmem:[%s4265 + $0x38] sm:$0xf]
      %v4281 = vld [vmem:[%s4265 + $0x3c] sm:$0xf]
      %v4298 = vunpack.c.l.b16 %v4266
      %v4299 = vunpack.c.l.b16 %v4267
      %v4300 = vunpack.c.l.b16 %v4268
      %v4301 = vunpack.c.l.b16 %v4269
      %v4302 = vunpack.c.l.b16 %v4270
      %v4303 = vunpack.c.l.b16 %v4271
      %v4304 = vunpack.c.l.b16 %v4272
      %v4305 = vunpack.c.l.b16 %v4273
      %v4306 = vunpack.c.l.b16 %v4274
      %v4307 = vunpack.c.l.b16 %v4275
      %v4308 = vunpack.c.l.b16 %v4276
      %v4309 = vunpack.c.l.b16 %v4277
      %v4310 = vunpack.c.l.b16 %v4278
      %v4311 = vunpack.c.l.b16 %v4279
      %v4312 = vunpack.c.l.b16 %v4280
      %v4313 = vunpack.c.l.b16 %v4281
      %v4314 = vpack.c.b16 %v4299, %v4298
      %v4315 = vpack.c.b16 %v4301, %v4300
      %v4316 = vpack.c.b16 %v4303, %v4302
      %v4317 = vpack.c.b16 %v4305, %v4304
      %v4318 = vpack.c.b16 %v4307, %v4306
      %v4319 = vpack.c.b16 %v4309, %v4308
      %v4320 = vpack.c.b16 %v4311, %v4310
      %v4321 = vpack.c.b16 %v4313, %v4312
      %4330 = vmatpush.bf16.msra.mxu0 %v4321
      %4331 = vmatpush.bf16.msra.mxu0 %v4320
      %4332 = vmatpush.bf16.msra.mxu0 %v4319
      %4333 = vmatpush.bf16.msra.mxu0 %v4318
      %4334 = vmatpush.bf16.msra.mxu0 %v4317
      %4335 = vmatpush.bf16.msra.mxu0 %v4316
      %4336 = vmatpush.bf16.msra.mxu0 %v4315
      %4337 = vmatpush.bf16.msra.mxu0 %v4314
      %4338 = vmatmul.bf16.gmra.mxu0 %v4263
      %v4339 = vpop.f32.mrf.mxu0
      %v4340 = vadd.f32 0.0, %v4339
      %v4341 = vpop.f32.mrf.mxu0
      %v4342 = vadd.f32 0.0, %v4341
      %4343 = vmatmul.bf16.gmra.mxu0 %v4264
      %v4344 = vpop.f32.mrf.mxu0
      %v4345 = vadd.f32 0.0, %v4344
      %v4346 = vpop.f32.mrf.mxu0
      %4347 = vdwg.mxu0
      %v4348 = vld [vmem:[#allocation3 + $0x5] sm:$0xff]
      %v4349 = vld [vmem:[#allocation3 + $0xd] sm:$0xff]
      %v4350 = vld [vmem:[#allocation3 + $0x15] sm:$0xf]
      %v4351 = vpack.c.bf16 %v4349, %v4348
      %v4352 = vpack.c.bf16 %v4350, %v4350
      %s4353 = scalar_lea.vmem %s7, 128
      %v4354 = vld [vmem:[%s4353] sm:$0xf]
      %v4355 = vld [vmem:[%s4353 + $0x4] sm:$0xf]
      %v4356 = vld [vmem:[%s4353 + $0x8] sm:$0xf]
      %v4357 = vld [vmem:[%s4353 + $0xc] sm:$0xf]
      %v4358 = vld [vmem:[%s4353 + $0x10] sm:$0xf]
      %v4359 = vld [vmem:[%s4353 + $0x14] sm:$0xf]
      %v4360 = vld [vmem:[%s4353 + $0x18] sm:$0xf]
      %v4361 = vld [vmem:[%s4353 + $0x1c] sm:$0xf]
      %v4362 = vld [vmem:[%s4353 + $0x20] sm:$0xf]
      %v4363 = vld [vmem:[%s4353 + $0x24] sm:$0xf]
      %v4364 = vld [vmem:[%s4353 + $0x28] sm:$0xf]
      %v4365 = vld [vmem:[%s4353 + $0x2c] sm:$0xf]
      %v4366 = vld [vmem:[%s4353 + $0x30] sm:$0xf]
      %v4367 = vld [vmem:[%s4353 + $0x34] sm:$0xf]
      %v4368 = vld [vmem:[%s4353 + $0x38] sm:$0xf]
      %v4369 = vld [vmem:[%s4353 + $0x3c] sm:$0xf]
      %v4386 = vunpack.c.l.b16 %v4354
      %v4387 = vunpack.c.l.b16 %v4355
      %v4388 = vunpack.c.l.b16 %v4356
      %v4389 = vunpack.c.l.b16 %v4357
      %v4390 = vunpack.c.l.b16 %v4358
      %v4391 = vunpack.c.l.b16 %v4359
      %v4392 = vunpack.c.l.b16 %v4360
      %v4393 = vunpack.c.l.b16 %v4361
      %v4394 = vunpack.c.l.b16 %v4362
      %v4395 = vunpack.c.l.b16 %v4363
      %v4396 = vunpack.c.l.b16 %v4364
      %v4397 = vunpack.c.l.b16 %v4365
      %v4398 = vunpack.c.l.b16 %v4366
      %v4399 = vunpack.c.l.b16 %v4367
      %v4400 = vunpack.c.l.b16 %v4368
      %v4401 = vunpack.c.l.b16 %v4369
      %v4402 = vpack.c.b16 %v4387, %v4386
      %v4403 = vpack.c.b16 %v4389, %v4388
      %v4404 = vpack.c.b16 %v4391, %v4390
      %v4405 = vpack.c.b16 %v4393, %v4392
      %v4406 = vpack.c.b16 %v4395, %v4394
      %v4407 = vpack.c.b16 %v4397, %v4396
      %v4408 = vpack.c.b16 %v4399, %v4398
      %v4409 = vpack.c.b16 %v4401, %v4400
      %4418 = vmatpush.bf16.msra.mxu0 %v4409
      %4419 = vmatpush.bf16.msra.mxu0 %v4408
      %4420 = vmatpush.bf16.msra.mxu0 %v4407
      %4421 = vmatpush.bf16.msra.mxu0 %v4406
      %4422 = vmatpush.bf16.msra.mxu0 %v4405
      %4423 = vmatpush.bf16.msra.mxu0 %v4404
      %4424 = vmatpush.bf16.msra.mxu0 %v4403
      %4425 = vmatpush.bf16.msra.mxu0 %v4402
      %4426 = vmatmul.bf16.gmra.mxu0 %v4351
      %v4427 = vpop.f32.mrf.mxu0
      %v4428 = vadd.f32 0.0, %v4427
      %v4429 = vpop.f32.mrf.mxu0
      %v4430 = vadd.f32 0.0, %v4429
      %4431 = vmatmul.bf16.gmra.mxu0 %v4352
      %v4432 = vpop.f32.mrf.mxu0
      %v4433 = vadd.f32 0.0, %v4432
      %v4434 = vpop.f32.mrf.mxu0
      %4435 = vdwg.mxu0
      %v4436 = vld [vmem:[#allocation3 + $0x6] sm:$0xff]
      %v4437 = vld [vmem:[#allocation3 + $0xe] sm:$0xff]
      %v4438 = vld [vmem:[#allocation3 + $0x16] sm:$0xf]
      %v4439 = vpack.c.bf16 %v4437, %v4436
      %v4440 = vpack.c.bf16 %v4438, %v4438
      %s4441 = scalar_lea.vmem %s7, 192
      %v4442 = vld [vmem:[%s4441] sm:$0xf]
      %v4443 = vld [vmem:[%s4441 + $0x4] sm:$0xf]
      %v4444 = vld [vmem:[%s4441 + $0x8] sm:$0xf]
      %v4445 = vld [vmem:[%s4441 + $0xc] sm:$0xf]
      %v4446 = vld [vmem:[%s4441 + $0x10] sm:$0xf]
      %v4447 = vld [vmem:[%s4441 + $0x14] sm:$0xf]
      %v4448 = vld [vmem:[%s4441 + $0x18] sm:$0xf]
      %v4449 = vld [vmem:[%s4441 + $0x1c] sm:$0xf]
      %v4450 = vld [vmem:[%s4441 + $0x20] sm:$0xf]
      %v4451 = vld [vmem:[%s4441 + $0x24] sm:$0xf]
      %v4452 = vld [vmem:[%s4441 + $0x28] sm:$0xf]
      %v4453 = vld [vmem:[%s4441 + $0x2c] sm:$0xf]
      %v4454 = vld [vmem:[%s4441 + $0x30] sm:$0xf]
      %v4455 = vld [vmem:[%s4441 + $0x34] sm:$0xf]
      %v4456 = vld [vmem:[%s4441 + $0x38] sm:$0xf]
      %v4457 = vld [vmem:[%s4441 + $0x3c] sm:$0xf]
      %v4474 = vunpack.c.l.b16 %v4442
      %v4475 = vunpack.c.l.b16 %v4443
      %v4476 = vunpack.c.l.b16 %v4444
      %v4477 = vunpack.c.l.b16 %v4445
      %v4478 = vunpack.c.l.b16 %v4446
      %v4479 = vunpack.c.l.b16 %v4447
      %v4480 = vunpack.c.l.b16 %v4448
      %v4481 = vunpack.c.l.b16 %v4449
      %v4482 = vunpack.c.l.b16 %v4450
      %v4483 = vunpack.c.l.b16 %v4451
      %v4484 = vunpack.c.l.b16 %v4452
      %v4485 = vunpack.c.l.b16 %v4453
      %v4486 = vunpack.c.l.b16 %v4454
      %v4487 = vunpack.c.l.b16 %v4455
      %v4488 = vunpack.c.l.b16 %v4456
      %v4489 = vunpack.c.l.b16 %v4457
      %v4490 = vpack.c.b16 %v4475, %v4474
      %v4491 = vpack.c.b16 %v4477, %v4476
      %v4492 = vpack.c.b16 %v4479, %v4478
      %v4493 = vpack.c.b16 %v4481, %v4480
      %v4494 = vpack.c.b16 %v4483, %v4482
      %v4495 = vpack.c.b16 %v4485, %v4484
      %v4496 = vpack.c.b16 %v4487, %v4486
      %v4497 = vpack.c.b16 %v4489, %v4488
      %4506 = vmatpush.bf16.msra.mxu0 %v4497
      %4507 = vmatpush.bf16.msra.mxu0 %v4496
      %4508 = vmatpush.bf16.msra.mxu0 %v4495
      %4509 = vmatpush.bf16.msra.mxu0 %v4494
      %4510 = vmatpush.bf16.msra.mxu0 %v4493
      %4511 = vmatpush.bf16.msra.mxu0 %v4492
      %4512 = vmatpush.bf16.msra.mxu0 %v4491
      %4513 = vmatpush.bf16.msra.mxu0 %v4490
      %4514 = vmatmul.bf16.gmra.mxu0 %v4439
      %v4515 = vpop.f32.mrf.mxu0
      %v4516 = vadd.f32 0.0, %v4515
      %v4517 = vpop.f32.mrf.mxu0
      %v4518 = vadd.f32 0.0, %v4517
      %4519 = vmatmul.bf16.gmra.mxu0 %v4440
      %v4520 = vpop.f32.mrf.mxu0
      %v4521 = vadd.f32 0.0, %v4520
      %v4522 = vpop.f32.mrf.mxu0
      %4523 = vdwg.mxu0
      %v4540 = vunpack.c.l.b16 %v4244
      %v4541 = vunpack.c.l.b16 %v4245
      %v4542 = vunpack.c.l.b16 %v4246
      %v4543 = vunpack.c.l.b16 %v4247
      %v4544 = vunpack.c.l.b16 %v4248
      %v4545 = vunpack.c.l.b16 %v4249
      %v4546 = vunpack.c.l.b16 %v4250
      %v4547 = vunpack.c.l.b16 %v4251
      %v4548 = vunpack.c.l.b16 %v4252
      %v4549 = vunpack.c.l.b16 %v4253
      %v4550 = vunpack.c.l.b16 %v4254
      %v4551 = vunpack.c.l.b16 %v4255
      %v4552 = vunpack.c.l.b16 %v4256
      %v4553 = vunpack.c.l.b16 %v4257
      %v4554 = vunpack.c.l.b16 %v4258
      %v4555 = vunpack.c.l.b16 %v4259
      %v4556 = vpack.c.b16 %v4541, %v4540
      %v4557 = vpack.c.b16 %v4543, %v4542
      %v4558 = vpack.c.b16 %v4545, %v4544
      %v4559 = vpack.c.b16 %v4547, %v4546
      %v4560 = vpack.c.b16 %v4549, %v4548
      %v4561 = vpack.c.b16 %v4551, %v4550
      %v4562 = vpack.c.b16 %v4553, %v4552
      %v4563 = vpack.c.b16 %v4555, %v4554
      %4572 = vmatpush.bf16.msra.mxu0 %v4563
      %4573 = vmatpush.bf16.msra.mxu0 %v4562
      %4574 = vmatpush.bf16.msra.mxu0 %v4561
      %4575 = vmatpush.bf16.msra.mxu0 %v4560
      %4576 = vmatpush.bf16.msra.mxu0 %v4559
      %4577 = vmatpush.bf16.msra.mxu0 %v4558
      %4578 = vmatpush.bf16.msra.mxu0 %v4557
      %4579 = vmatpush.bf16.msra.mxu0 %v4556
      %4580 = vmatmul.bf16.gmra.mxu0 %v4242
      %v4581 = vpop.f32.mrf.mxu0
      %v4582 = vadd.f32 %v4340, %v4581
      %v4583 = vpop.f32.mrf.mxu0
      %v4584 = vadd.f32 %v4342, %v4583
      %4585 = vmatmul.bf16.gmra.mxu0 %v4243
      %v4586 = vpop.f32.mrf.mxu0
      %v4587 = vadd.f32 %v4345, %v4586
      %v4588 = vpop.f32.mrf.mxu0
      %4589 = vdwg.mxu0
      %v4590 = vadd.f32 %v4582, %v4428
      %v4591 = vadd.f32 %v4584, %v4430
      %v4592 = vadd.f32 %v4587, %v4433
      %v4593 = vadd.f32 %v4590, %v4516
      %v4594 = vadd.f32 %v4591, %v4518
      %v4595 = vadd.f32 %v4592, %v4521
      %v4596 = vld [vmem:[%s8] sm:$0x1]
      %v4598 = vperm.slane %v4596, 0
      %v4600 = vadd.f32 %v4593, %v4598
      %v4601 = vadd.f32 %v4594, %v4598
      %v4602 = vadd.f32 %v4595, %v4598
      %v4603 = vxor.u32 %v4600, 2147483648
      %v4604 = vxor.u32 %v4601, 2147483648
      %v4605 = vxor.u32 %v4602, 2147483648
      %v4606 = vmul.f32 %v4603, 1.442695
      %v4607 = vpow.pop %v4606
      %v4608 = vmul.f32 %v4604, 1.442695
      %v4609 = vpow.pop %v4608
      %v4610 = vmul.f32 %v4605, 1.442695
      %v4611 = vpow.pop %v4610
      %v4612 = vadd.f32 %v4607, 1.0
      %v4613 = vadd.f32 %v4609, 1.0
      %v4614 = vadd.f32 %v4611, 1.0
      %v4615 = vrcp.pop %v4612
      %v4616 = vmul.f32 %v4612, %v4615
      %v4617 = vsub.f32 1.0, %v4616
      %v4618 = vmul.f32 %v4615, %v4617
      %v4619 = vadd.f32 %v4615, %v4618
      %vm4620 = vweird.f32 %v4612
      %vm4621 = vweird.f32 %v4615
      %vm4622 = vmor %vm4620, %vm4621
      %v4623 = vsel %vm4622, %v4615, %v4619
      %v4624 = vand.u32 2147483647, %v4612
      %vm4625 = vcmp.eq.f32.partialorder %v4624, 8.507059e+37
      %v4626 = vand.u32 %v4612, 2147483648
      %v4627 = vor.u32 1.1754944e-38, %v4626
      %v4628 = vsel %vm4625, %v4627, %v4623
      %v4629 = vmul.f32 1.0, %v4628
      %v4630 = vrcp.pop %v4613
      %v4631 = vmul.f32 %v4613, %v4630
      %v4632 = vsub.f32 1.0, %v4631
      %v4633 = vmul.f32 %v4630, %v4632
      %v4634 = vadd.f32 %v4630, %v4633
      %vm4635 = vweird.f32 %v4613
      %vm4636 = vweird.f32 %v4630
      %vm4637 = vmor %vm4635, %vm4636
      %v4638 = vsel %vm4637, %v4630, %v4634
      %v4639 = vand.u32 2147483647, %v4613
      %vm4640 = vcmp.eq.f32.partialorder %v4639, 8.507059e+37
      %v4641 = vand.u32 %v4613, 2147483648
      %v4642 = vor.u32 1.1754944e-38, %v4641
      %v4643 = vsel %vm4640, %v4642, %v4638
      %v4644 = vmul.f32 1.0, %v4643
      %v4645 = vrcp.pop %v4614
      %v4646 = vmul.f32 %v4614, %v4645
      %v4647 = vsub.f32 1.0, %v4646
      %v4648 = vmul.f32 %v4645, %v4647
      %v4649 = vadd.f32 %v4645, %v4648
      %vm4650 = vweird.f32 %v4614
      %vm4651 = vweird.f32 %v4645
      %vm4652 = vmor %vm4650, %vm4651
      %v4653 = vsel %vm4652, %v4645, %v4649
      %v4654 = vand.u32 2147483647, %v4614
      %vm4655 = vcmp.eq.f32.partialorder %v4654, 8.507059e+37
      %v4656 = vand.u32 %v4614, 2147483648
      %v4657 = vor.u32 1.1754944e-38, %v4656
      %v4658 = vsel %vm4655, %v4657, %v4653
      %v4659 = vmul.f32 1.0, %v4658
      %v4660 = vmul.f32 %v4600, %v4629
      %v4661 = vmul.f32 %v4601, %v4644
      %v4662 = vmul.f32 %v4602, %v4659
      %v4663 = vld [vmem:[%s9] sm:$0xf]
      %v4664 = vld [vmem:[%s9 + $0x4] sm:$0xf]
      %v4665 = vld [vmem:[%s9 + $0x8] sm:$0xf]
      %v4666 = vld [vmem:[%s9 + $0xc] sm:$0xf]
      %v4667 = vld [vmem:[%s10] sm:$0x1]
      %v4669 = vperm.slane %v4667, 0
      %v4675 = vunpack.c.l.b16 %v4663
      %v4676 = vunpack.c.l.b16 %v4664
      %v4677 = vunpack.c.l.b16 %v4665
      %v4678 = vunpack.c.l.b16 %v4666
      %v4679 = vpack.c.b16 %v4676, %v4675
      %v4680 = vpack.c.b16 %v4678, %v4677
      %v4684 = vsel %vm3379, %v4005, 0
      %v4687 = vsel %vm3379, %v4006, 0
      %v4690 = vsel %vm3379, %v4007, 0
      %v4693 = vsel %vm3379, %v4008, 0
      %v4695 = vsel %vm3379, %v4009, 0
      %4697 = vmatpush.bf16.msra.mxu0 0
      %4698 = vmatpush.bf16.msra.mxu0 0
      %4699 = vmatpush.bf16.msra.mxu0 0
      %4700 = vmatpush.bf16.msra.mxu0 0
      %4701 = vmatpush.bf16.msra.mxu0 0
      %4702 = vmatpush.bf16.msra.mxu0 0
      %4703 = vmatpush.bf16.msra.mxu0 %v4680
      %4704 = vmatpush.bf16.msra.mxu0 %v4679
      %4705 = vmatmul.bf16.gmra.mxu0 %v4684
      %v4706 = vpop.f32.mrf.mxu0
      %v4707 = vadd.f32 %v4669, %v4706
      %v4708 = vpop.f32.mrf.mxu0
      %v4709 = vadd.f32 %v4669, %v4708
      %4710 = vmatmul.bf16.gmra.mxu0 %v4687
      %v4711 = vpop.f32.mrf.mxu0
      %v4712 = vadd.f32 %v4669, %v4711
      %v4713 = vpop.f32.mrf.mxu0
      %v4714 = vadd.f32 %v4669, %v4713
      %4715 = vmatmul.bf16.gmra.mxu0 %v4690
      %v4716 = vpop.f32.mrf.mxu0
      %v4717 = vadd.f32 %v4669, %v4716
      %v4718 = vpop.f32.mrf.mxu0
      %v4719 = vadd.f32 %v4669, %v4718
      %4720 = vmatmul.bf16.gmra.mxu0 %v4693
      %v4721 = vpop.f32.mrf.mxu0
      %v4722 = vadd.f32 %v4669, %v4721
      %v4723 = vpop.f32.mrf.mxu0
      %v4724 = vadd.f32 %v4669, %v4723
      %4725 = vmatmul.bf16.gmra.mxu0 %v4695
      %v4726 = vpop.f32.mrf.mxu0
      %v4727 = vadd.f32 %v4669, %v4726
      %v4728 = vpop.f32.mrf.mxu0
      %4729 = vdwg.mxu0
      %v4730 = vxor.u32 %v4707, 2147483648
      %v4731 = vxor.u32 %v4709, 2147483648
      %v4732 = vxor.u32 %v4712, 2147483648
      %v4733 = vxor.u32 %v4714, 2147483648
      %v4734 = vxor.u32 %v4717, 2147483648
      %v4735 = vxor.u32 %v4719, 2147483648
      %v4736 = vxor.u32 %v4722, 2147483648
      %v4737 = vxor.u32 %v4724, 2147483648
      %v4738 = vxor.u32 %v4727, 2147483648
      %v4739 = vmul.f32 %v4730, 1.442695
      %v4740 = vpow.pop %v4739
      %v4741 = vmul.f32 %v4731, 1.442695
      %v4742 = vpow.pop %v4741
      %v4743 = vmul.f32 %v4732, 1.442695
      %v4744 = vpow.pop %v4743
      %v4745 = vmul.f32 %v4733, 1.442695
      %v4746 = vpow.pop %v4745
      %v4747 = vmul.f32 %v4734, 1.442695
      %v4748 = vpow.pop %v4747
      %v4749 = vmul.f32 %v4735, 1.442695
      %v4750 = vpow.pop %v4749
      %v4751 = vmul.f32 %v4736, 1.442695
      %v4752 = vpow.pop %v4751
      %v4753 = vmul.f32 %v4737, 1.442695
      %v4754 = vpow.pop %v4753
      %v4755 = vmul.f32 %v4738, 1.442695
      %v4756 = vpow.pop %v4755
      %v4757 = vadd.f32 %v4740, 1.0
      %v4758 = vadd.f32 %v4742, 1.0
      %v4759 = vadd.f32 %v4744, 1.0
      %v4760 = vadd.f32 %v4746, 1.0
      %v4761 = vadd.f32 %v4748, 1.0
      %v4762 = vadd.f32 %v4750, 1.0
      %v4763 = vadd.f32 %v4752, 1.0
      %v4764 = vadd.f32 %v4754, 1.0
      %v4765 = vadd.f32 %v4756, 1.0
      %v4766 = vrcp.pop %v4757
      %v4767 = vmul.f32 %v4757, %v4766
      %v4768 = vsub.f32 1.0, %v4767
      %v4769 = vmul.f32 %v4766, %v4768
      %v4770 = vadd.f32 %v4766, %v4769
      %vm4771 = vweird.f32 %v4757
      %vm4772 = vweird.f32 %v4766
      %vm4773 = vmor %vm4771, %vm4772
      %v4774 = vsel %vm4773, %v4766, %v4770
      %v4775 = vand.u32 2147483647, %v4757
      %vm4776 = vcmp.eq.f32.partialorder %v4775, 8.507059e+37
      %v4777 = vand.u32 %v4757, 2147483648
      %v4778 = vor.u32 1.1754944e-38, %v4777
      %v4779 = vsel %vm4776, %v4778, %v4774
      %v4780 = vmul.f32 1.0, %v4779
      %v4781 = vrcp.pop %v4758
      %v4782 = vmul.f32 %v4758, %v4781
      %v4783 = vsub.f32 1.0, %v4782
      %v4784 = vmul.f32 %v4781, %v4783
      %v4785 = vadd.f32 %v4781, %v4784
      %vm4786 = vweird.f32 %v4758
      %vm4787 = vweird.f32 %v4781
      %vm4788 = vmor %vm4786, %vm4787
      %v4789 = vsel %vm4788, %v4781, %v4785
      %v4790 = vand.u32 2147483647, %v4758
      %vm4791 = vcmp.eq.f32.partialorder %v4790, 8.507059e+37
      %v4792 = vand.u32 %v4758, 2147483648
      %v4793 = vor.u32 1.1754944e-38, %v4792
      %v4794 = vsel %vm4791, %v4793, %v4789
      %v4795 = vmul.f32 1.0, %v4794
      %v4796 = vrcp.pop %v4759
      %v4797 = vmul.f32 %v4759, %v4796
      %v4798 = vsub.f32 1.0, %v4797
      %v4799 = vmul.f32 %v4796, %v4798
      %v4800 = vadd.f32 %v4796, %v4799
      %vm4801 = vweird.f32 %v4759
      %vm4802 = vweird.f32 %v4796
      %vm4803 = vmor %vm4801, %vm4802
      %v4804 = vsel %vm4803, %v4796, %v4800
      %v4805 = vand.u32 2147483647, %v4759
      %vm4806 = vcmp.eq.f32.partialorder %v4805, 8.507059e+37
      %v4807 = vand.u32 %v4759, 2147483648
      %v4808 = vor.u32 1.1754944e-38, %v4807
      %v4809 = vsel %vm4806, %v4808, %v4804
      %v4810 = vmul.f32 1.0, %v4809
      %v4811 = vrcp.pop %v4760
      %v4812 = vmul.f32 %v4760, %v4811
      %v4813 = vsub.f32 1.0, %v4812
      %v4814 = vmul.f32 %v4811, %v4813
      %v4815 = vadd.f32 %v4811, %v4814
      %vm4816 = vweird.f32 %v4760
      %vm4817 = vweird.f32 %v4811
      %vm4818 = vmor %vm4816, %vm4817
      %v4819 = vsel %vm4818, %v4811, %v4815
      %v4820 = vand.u32 2147483647, %v4760
      %vm4821 = vcmp.eq.f32.partialorder %v4820, 8.507059e+37
      %v4822 = vand.u32 %v4760, 2147483648
      %v4823 = vor.u32 1.1754944e-38, %v4822
      %v4824 = vsel %vm4821, %v4823, %v4819
      %v4825 = vmul.f32 1.0, %v4824
      %v4826 = vrcp.pop %v4761
      %v4827 = vmul.f32 %v4761, %v4826
      %v4828 = vsub.f32 1.0, %v4827
      %v4829 = vmul.f32 %v4826, %v4828
      %v4830 = vadd.f32 %v4826, %v4829
      %vm4831 = vweird.f32 %v4761
      %vm4832 = vweird.f32 %v4826
      %vm4833 = vmor %vm4831, %vm4832
      %v4834 = vsel %vm4833, %v4826, %v4830
      %v4835 = vand.u32 2147483647, %v4761
      %vm4836 = vcmp.eq.f32.partialorder %v4835, 8.507059e+37
      %v4837 = vand.u32 %v4761, 2147483648
      %v4838 = vor.u32 1.1754944e-38, %v4837
      %v4839 = vsel %vm4836, %v4838, %v4834
      %v4840 = vmul.f32 1.0, %v4839
      %v4841 = vrcp.pop %v4762
      %v4842 = vmul.f32 %v4762, %v4841
      %v4843 = vsub.f32 1.0, %v4842
      %v4844 = vmul.f32 %v4841, %v4843
      %v4845 = vadd.f32 %v4841, %v4844
      %vm4846 = vweird.f32 %v4762
      %vm4847 = vweird.f32 %v4841
      %vm4848 = vmor %vm4846, %vm4847
      %v4849 = vsel %vm4848, %v4841, %v4845
      %v4850 = vand.u32 2147483647, %v4762
      %vm4851 = vcmp.eq.f32.partialorder %v4850, 8.507059e+37
      %v4852 = vand.u32 %v4762, 2147483648
      %v4853 = vor.u32 1.1754944e-38, %v4852
      %v4854 = vsel %vm4851, %v4853, %v4849
      %v4855 = vmul.f32 1.0, %v4854
      %v4856 = vrcp.pop %v4763
      %v4857 = vmul.f32 %v4763, %v4856
      %v4858 = vsub.f32 1.0, %v4857
      %v4859 = vmul.f32 %v4856, %v4858
      %v4860 = vadd.f32 %v4856, %v4859
      %vm4861 = vweird.f32 %v4763
      %vm4862 = vweird.f32 %v4856
      %vm4863 = vmor %vm4861, %vm4862
      %v4864 = vsel %vm4863, %v4856, %v4860
      %v4865 = vand.u32 2147483647, %v4763
      %vm4866 = vcmp.eq.f32.partialorder %v4865, 8.507059e+37
      %v4867 = vand.u32 %v4763, 2147483648
      %v4868 = vor.u32 1.1754944e-38, %v4867
      %v4869 = vsel %vm4866, %v4868, %v4864
      %v4870 = vmul.f32 1.0, %v4869
      %v4871 = vrcp.pop %v4764
      %v4872 = vmul.f32 %v4764, %v4871
      %v4873 = vsub.f32 1.0, %v4872
      %v4874 = vmul.f32 %v4871, %v4873
      %v4875 = vadd.f32 %v4871, %v4874
      %vm4876 = vweird.f32 %v4764
      %vm4877 = vweird.f32 %v4871
      %vm4878 = vmor %vm4876, %vm4877
      %v4879 = vsel %vm4878, %v4871, %v4875
      %v4880 = vand.u32 2147483647, %v4764
      %vm4881 = vcmp.eq.f32.partialorder %v4880, 8.507059e+37
      %v4882 = vand.u32 %v4764, 2147483648
      %v4883 = vor.u32 1.1754944e-38, %v4882
      %v4884 = vsel %vm4881, %v4883, %v4879
      %v4885 = vmul.f32 1.0, %v4884
      %v4886 = vrcp.pop %v4765
      %v4887 = vmul.f32 %v4765, %v4886
      %v4888 = vsub.f32 1.0, %v4887
      %v4889 = vmul.f32 %v4886, %v4888
      %v4890 = vadd.f32 %v4886, %v4889
      %vm4891 = vweird.f32 %v4765
      %vm4892 = vweird.f32 %v4886
      %vm4893 = vmor %vm4891, %vm4892
      %v4894 = vsel %vm4893, %v4886, %v4890
      %v4895 = vand.u32 2147483647, %v4765
      %vm4896 = vcmp.eq.f32.partialorder %v4895, 8.507059e+37
      %v4897 = vand.u32 %v4765, 2147483648
      %v4898 = vor.u32 1.1754944e-38, %v4897
      %v4899 = vsel %vm4896, %v4898, %v4894
      %v4900 = vmul.f32 1.0, %v4899
      %v4901 = vld [vmem:[%s13] sm:$0x1]
      %v4902 = vmul.f32 %v4780, 8.0
      %v4903 = vmul.f32 %v4795, 8.0
      %v4904 = vmul.f32 %v4810, 8.0
      %v4905 = vmul.f32 %v4825, 8.0
      %v4906 = vmul.f32 %v4840, 8.0
      %v4907 = vmul.f32 %v4855, 8.0
      %v4908 = vmul.f32 %v4870, 8.0
      %v4909 = vmul.f32 %v4885, 8.0
      %v4910 = vmul.f32 %v4900, 8.0
      %v4911 = vld [vmem:[%s11] sm:$0xff]
      %v4912 = vld [vmem:[%s11 + $0x8] sm:$0xff]
      %v4913 = vld [vmem:[%s11 + $0x10] sm:$0xff]
      %v4914 = vld [vmem:[%s11 + $0x18] sm:$0xff]
      %v4915 = vld [vmem:[%s11 + $0x20] sm:$0xff]
      %v4916 = vld [vmem:[%s11 + $0x28] sm:$0xff]
      %v4917 = vld [vmem:[%s11 + $0x30] sm:$0xff]
      %v4918 = vld [vmem:[%s11 + $0x38] sm:$0xff]
      %v4919 = vld [vmem:[%s11 + $0x40] sm:$0xff]
      %v4920 = vadd.f32 %v4902, %v4911
      %v4921 = vadd.f32 %v4903, %v4912
      %v4922 = vadd.f32 %v4904, %v4913
      %v4923 = vadd.f32 %v4905, %v4914
      %v4924 = vadd.f32 %v4906, %v4915
      %v4925 = vadd.f32 %v4907, %v4916
      %v4926 = vadd.f32 %v4908, %v4917
      %v4927 = vadd.f32 %v4909, %v4918
      %v4928 = vadd.f32 %v4910, %v4919
      %v4929 = vmul.f32 %v4780, %v4780
      %v4930 = vmul.f32 %v4795, %v4795
      %v4931 = vmul.f32 %v4810, %v4810
      %v4932 = vmul.f32 %v4825, %v4825
      %v4933 = vmul.f32 %v4840, %v4840
      %v4934 = vmul.f32 %v4855, %v4855
      %v4935 = vmul.f32 %v4870, %v4870
      %v4936 = vmul.f32 %v4885, %v4885
      %v4937 = vmul.f32 %v4900, %v4900
      %v4938 = vld [vmem:[%s12] sm:$0x1]
      %v4940 = vperm.slane %v4938, 0
      %v4942 = vmul.f32 %v4929, %v4940
      %v4943 = vmul.f32 %v4930, %v4940
      %v4944 = vmul.f32 %v4931, %v4940
      %v4945 = vmul.f32 %v4932, %v4940
      %v4946 = vmul.f32 %v4933, %v4940
      %v4947 = vmul.f32 %v4934, %v4940
      %v4948 = vmul.f32 %v4935, %v4940
      %v4949 = vmul.f32 %v4936, %v4940
      %v4950 = vmul.f32 %v4937, %v4940
      %vm4951 = vcmp.eq.s32.totalorder %v4901, 0
      %vm4952 = vcmp.eq.s32.totalorder %v4901, 1
      %v4953 = vsel %vm4952, 1, 0
      %v4954 = vperm.slane %v4953, 0
      %vm4955 = vcmp.eq.s32.totalorder %v4954, 1
      %v4956 = vsel %vm4955, %v4942, %v4780
      %v4957 = vsel %vm4955, %v4943, %v4795
      %v4958 = vsel %vm4955, %v4944, %v4810
      %v4959 = vsel %vm4955, %v4945, %v4825
      %v4960 = vsel %vm4955, %v4946, %v4840
      %v4961 = vsel %vm4955, %v4947, %v4855
      %v4962 = vsel %vm4955, %v4948, %v4870
      %v4963 = vsel %vm4955, %v4949, %v4885
      %v4964 = vsel %vm4955, %v4950, %v4900
      %v4965 = vsel %vm4951, 1, 0
      %v4966 = vperm.slane %v4965, 0
      %vm4967 = vcmp.eq.s32.totalorder %v4966, 1
      %v4968 = vsel %vm4967, %v4920, %v4956
      %v4969 = vsel %vm4967, %v4921, %v4957
      %v4970 = vsel %vm4967, %v4922, %v4958
      %v4971 = vsel %vm4967, %v4923, %v4959
      %v4972 = vsel %vm4967, %v4924, %v4960
      %v4973 = vsel %vm4967, %v4925, %v4961
      %v4974 = vsel %vm4967, %v4926, %v4962
      %v4975 = vsel %vm4967, %v4927, %v4963
      %v4976 = vsel %vm4967, %v4928, %v4964
      %4977 = vst [vmem:[%s637] sm:$0xff] %v4968
      %4978 = vst [vmem:[%s637 + $0x8] sm:$0xff] %v4969
      %4979 = vst [vmem:[%s637 + $0x10] sm:$0xff] %v4970
      %4980 = vst [vmem:[%s637 + $0x18] sm:$0xff] %v4971
      %4981 = vst [vmem:[%s637 + $0x20] sm:$0xff] %v4972
      %4982 = vst [vmem:[%s637 + $0x28] sm:$0xff] %v4973
      %4983 = vst [vmem:[%s637 + $0x30] sm:$0xff] %v4974
      %4984 = vst [vmem:[%s637 + $0x38] sm:$0xff] %v4975
      %4985 = vst [vmem:[%s637 + $0x40] sm:$0xff] %v4976
      %v4986 = vpack.c.bf16 %v4661, %v4660
      %v4987 = vpack.c.bf16 %v4662, %v4662
      %v4988 = vld [vmem:[%s14] sm:$0xf]
      %v4989 = vld [vmem:[%s14 + $0x4] sm:$0xf]
      %v4990 = vld [vmem:[%s14 + $0x8] sm:$0xf]
      %v4991 = vld [vmem:[%s14 + $0xc] sm:$0xf]
      %v4992 = vld [vmem:[%s14 + $0x10] sm:$0xf]
      %v4993 = vld [vmem:[%s14 + $0x14] sm:$0xf]
      %v4994 = vld [vmem:[%s14 + $0x18] sm:$0xf]
      %v4995 = vld [vmem:[%s14 + $0x1c] sm:$0xf]
      %v4996 = vld [vmem:[%s15] sm:$0x1]
      %v4998 = vperm.slane %v4996, 0
      %v5008 = vunpack.c.l.b16 %v4988
      %v5009 = vunpack.c.l.b16 %v4989
      %v5010 = vunpack.c.l.b16 %v4990
      %v5011 = vunpack.c.l.b16 %v4991
      %v5012 = vunpack.c.l.b16 %v4992
      %v5013 = vunpack.c.l.b16 %v4993
      %v5014 = vunpack.c.l.b16 %v4994
      %v5015 = vunpack.c.l.b16 %v4995
      %v5016 = vpack.c.b16 %v5009, %v5008
      %v5017 = vpack.c.b16 %v5011, %v5010
      %v5018 = vpack.c.b16 %v5013, %v5012
      %v5019 = vpack.c.b16 %v5015, %v5014
      %v5025 = vsel %vm3403, %v4986, 0
      %v5028 = vsel %vm3403, %v4987, 0
      %5030 = vmatpush.bf16.msra.mxu0 0
      %5031 = vmatpush.bf16.msra.mxu0 0
      %5032 = vmatpush.bf16.msra.mxu0 0
      %5033 = vmatpush.bf16.msra.mxu0 0
      %5034 = vmatpush.bf16.msra.mxu0 %v5019
      %5035 = vmatpush.bf16.msra.mxu0 %v5018
      %5036 = vmatpush.bf16.msra.mxu0 %v5017
      %5037 = vmatpush.bf16.msra.mxu0 %v5016
      %5038 = vmatmul.bf16.gmra.mxu0 %v5025
      %v5039 = vpop.f32.mrf.mxu0
      %v5040 = vadd.f32 %v4998, %v5039
      %v5041 = vpop.f32.mrf.mxu0
      %v5042 = vadd.f32 %v4998, %v5041
      %5043 = vmatmul.bf16.gmra.mxu0 %v5028
      %v5044 = vpop.f32.mrf.mxu0
      %v5045 = vadd.f32 %v4998, %v5044
      %v5046 = vpop.f32.mrf.mxu0
      %5047 = vdwg.mxu0
      %v5048 = vxor.u32 %v5040, 2147483648
      %v5049 = vxor.u32 %v5042, 2147483648
      %v5050 = vxor.u32 %v5045, 2147483648
      %v5051 = vmul.f32 %v5048, 1.442695
      %v5052 = vpow.pop %v5051
      %v5053 = vmul.f32 %v5049, 1.442695
      %v5054 = vpow.pop %v5053
      %v5055 = vmul.f32 %v5050, 1.442695
      %v5056 = vpow.pop %v5055
      %v5057 = vadd.f32 %v5052, 1.0
      %v5058 = vadd.f32 %v5054, 1.0
      %v5059 = vadd.f32 %v5056, 1.0
      %v5060 = vrcp.pop %v5057
      %v5061 = vmul.f32 %v5057, %v5060
      %v5062 = vsub.f32 1.0, %v5061
      %v5063 = vmul.f32 %v5060, %v5062
      %v5064 = vadd.f32 %v5060, %v5063
      %vm5065 = vweird.f32 %v5057
      %vm5066 = vweird.f32 %v5060
      %vm5067 = vmor %vm5065, %vm5066
      %v5068 = vsel %vm5067, %v5060, %v5064
      %v5069 = vand.u32 2147483647, %v5057
      %vm5070 = vcmp.eq.f32.partialorder %v5069, 8.507059e+37
      %v5071 = vand.u32 %v5057, 2147483648
      %v5072 = vor.u32 1.1754944e-38, %v5071
      %v5073 = vsel %vm5070, %v5072, %v5068
      %v5074 = vmul.f32 1.0, %v5073
      %v5075 = vrcp.pop %v5058
      %v5076 = vmul.f32 %v5058, %v5075
      %v5077 = vsub.f32 1.0, %v5076
      %v5078 = vmul.f32 %v5075, %v5077
      %v5079 = vadd.f32 %v5075, %v5078
      %vm5080 = vweird.f32 %v5058
      %vm5081 = vweird.f32 %v5075
      %vm5082 = vmor %vm5080, %vm5081
      %v5083 = vsel %vm5082, %v5075, %v5079
      %v5084 = vand.u32 2147483647, %v5058
      %vm5085 = vcmp.eq.f32.partialorder %v5084, 8.507059e+37
      %v5086 = vand.u32 %v5058, 2147483648
      %v5087 = vor.u32 1.1754944e-38, %v5086
      %v5088 = vsel %vm5085, %v5087, %v5083
      %v5089 = vmul.f32 1.0, %v5088
      %v5090 = vrcp.pop %v5059
      %v5091 = vmul.f32 %v5059, %v5090
      %v5092 = vsub.f32 1.0, %v5091
      %v5093 = vmul.f32 %v5090, %v5092
      %v5094 = vadd.f32 %v5090, %v5093
      %vm5095 = vweird.f32 %v5059
      %vm5096 = vweird.f32 %v5090
      %vm5097 = vmor %vm5095, %vm5096
      %v5098 = vsel %vm5097, %v5090, %v5094
      %v5099 = vand.u32 2147483647, %v5059
      %vm5100 = vcmp.eq.f32.partialorder %v5099, 8.507059e+37
      %v5101 = vand.u32 %v5059, 2147483648
      %v5102 = vor.u32 1.1754944e-38, %v5101
      %v5103 = vsel %vm5100, %v5102, %v5098
      %v5104 = vmul.f32 1.0, %v5103
      %v5105 = vld [vmem:[%s18] sm:$0x1]
      %v5106 = vmul.f32 %v5074, 16.0
      %v5107 = vmul.f32 %v5089, 16.0
      %v5108 = vmul.f32 %v5104, 16.0
      %v5109 = vld [vmem:[%s16] sm:$0xff]
      %v5110 = vld [vmem:[%s16 + $0x8] sm:$0xff]
      %v5111 = vld [vmem:[%s16 + $0x10] sm:$0xf]
      %v5112 = vadd.f32 %v5106, %v5109
      %v5113 = vadd.f32 %v5107, %v5110
      %v5114 = vadd.f32 %v5108, %v5111
      %v5115 = vmul.f32 %v5074, %v5074
      %v5116 = vmul.f32 %v5089, %v5089
      %v5117 = vmul.f32 %v5104, %v5104
      %v5118 = vld [vmem:[%s17] sm:$0x1]
      %v5120 = vperm.slane %v5118, 0
      %v5122 = vmul.f32 %v5115, %v5120
      %v5123 = vmul.f32 %v5116, %v5120
      %v5124 = vmul.f32 %v5117, %v5120
      %vm5125 = vcmp.eq.s32.totalorder %v5105, 0
      %vm5126 = vcmp.eq.s32.totalorder %v5105, 1
      %v5127 = vsel %vm5126, 1, 0
      %v5128 = vperm.slane %v5127, 0
      %vm5129 = vcmp.eq.s32.totalorder %v5128, 1
      %v5130 = vsel %vm5129, %v5122, %v5074
      %v5131 = vsel %vm5129, %v5123, %v5089
      %v5132 = vsel %vm5129, %v5124, %v5104
      %v5133 = vsel %vm5125, 1, 0
      %v5134 = vperm.slane %v5133, 0
      %vm5135 = vcmp.eq.s32.totalorder %v5134, 1
      %v5136 = vsel %vm5135, %v5112, %v5130
      %v5137 = vsel %vm5135, %v5113, %v5131
      %v5138 = vsel %vm5135, %v5114, %v5132
      %5139 = vst [vmem:[%s642] sm:$0xff] %v5136
      %5140 = vst [vmem:[%s642 + $0x8] sm:$0xff] %v5137
      %5141 = vst [vmem:[%s642 + $0x10] sm:$0xf] %v5138
      %p5142 = scmp.lt.s32.totalorder %s32, 1
      %s5143 = scalar_select %p5142, %s32, 1
      %s5144 = smul.addr %s5143, 9
      %s5145 = smul.addr %s5144, 8
      %s5146 = scalar_lea.vmem %s19, %s5145
      %p5147 = scmp.lt.s32.totalorder %s32, 1
      %s5148 = scalar_select %p5147, %s32, 1
      %s5149 = smul.addr %s5148, 3
      %s5150 = smul.addr %s5149, 8
      %s5151 = scalar_lea.vmem %s20, %s5150
      // Predicated region
      $region97: #{tracing_wrapper_forward.1} parent=95 // pred_check
        %p5152 = pneg %p454
      $region98: #{tracing_wrapper_forward.1} parent=95 // pred_check_branch
        %5154 = sbr.rel (%p5152) target = $region100
      $region99: #{tracing_wrapper_forward.1} parent=95 // pred_region
        _
      $region100: #{tracing_wrapper_forward.1} parent=95 // pred_fallthru
        _
      // Predicated region
      $region101: #{tracing_wrapper_forward.1} parent=95 // pred_check
        %p5155 = pneg %p480
      $region102: #{tracing_wrapper_forward.1} parent=95 // pred_check_branch
        %5157 = sbr.rel (%p5155) target = $region104
      $region103: #{tracing_wrapper_forward.1} parent=95 // pred_region
        _
      $region104: #{tracing_wrapper_forward.1} parent=95 // pred_fallthru
        _
    $region96: #{tracing_wrapper_forward.1} parent=5 // pred_fallthru
      _
    %p5158 = scmp.le.s32.totalorder 2, %s27
    // Predicated region
    $region105: #{tracing_wrapper_forward.1} parent=5 // pred_check
      %p5159 = pneg %p5158
    $region106: #{tracing_wrapper_forward.1} parent=5 // pred_check_branch
      %5161 = sbr.rel (%p5159) target = $region108
    $region107: #{tracing_wrapper_forward.1} parent=5 // pred_region
      %s5162 = ssub.s32 %s27, 2
      // Predicated region
      $region109: #{tracing_wrapper_forward.1} parent=107 // pred_check
        %p5163 = pneg %p460
      $region110: #{tracing_wrapper_forward.1} parent=107 // pred_check_branch
        %5165 = sbr.rel (%p5163) target = $region112
      $region111: #{tracing_wrapper_forward.1} parent=107 // pred_region
        %p5166 = scmp.lt.s32.totalorder %s33, 1
        %s5167 = scalar_select %p5166, %s33, 1
        %s5168 = smul.addr %s5167, 9
        %s5169 = smul.addr %s5168, 8
        %s5170 = scalar_lea.vmem %s19, %s5169
      $region112: #{tracing_wrapper_forward.1} parent=107 // pred_fallthru
        _
      // Predicated region
      $region113: #{tracing_wrapper_forward.1} parent=107 // pred_check
        %p5171 = pneg %p486
      $region114: #{tracing_wrapper_forward.1} parent=107 // pred_check_branch
        %5173 = sbr.rel (%p5171) target = $region116
      $region115: #{tracing_wrapper_forward.1} parent=107 // pred_region
        %p5174 = scmp.lt.s32.totalorder %s33, 1
        %s5175 = scalar_select %p5174, %s33, 1
        %s5176 = smul.addr %s5175, 3
        %s5177 = smul.addr %s5176, 8
        %s5178 = scalar_lea.vmem %s20, %s5177
      $region116: #{tracing_wrapper_forward.1} parent=107 // pred_fallthru
        _
    $region108: #{tracing_wrapper_forward.1} parent=5 // pred_fallthru
      _
  $region6: #{tracing_wrapper_forward.1} parent=0 // loop_footer
    %s31 = sadd.s32 1, %s27
  $region7: #{tracing_wrapper_forward.1} parent=0 // loop_footer_branch
    %26 = sbr.rel target = $region3
  $region8: #{tracing_wrapper_forward.1} parent=0 // loop_exit
    _

</llo_original>
